<compile_context>
chip_gen: v7x
topology: tpu7x:2x2x1
jax: 0.10.0
libtpu: 0.0.40
codegen_flags: <defaults>
</compile_context>

<pallas_src>
import functools

import jax
import jax.numpy as jnp
import numpy as np
from jax.experimental import pallas as pl
from jax.experimental.pallas import tpu as pltpu


# All 9 taps of the 3x3 kernel in raster (ky, kx) order; tap 4 is the center.
_TAPS = tuple((ky, kx) for ky in range(3) for kx in range(3))


def _round_up(a, b):
    return -(-a // b) * b


def _fire_kernel(x_ref, ws_ref, bs_ref, wex_ref, ball_ref, nl_ref, nr_ref,
                 o_ref, spad_ref, im_ref, *, H, W, top, bot):
    HW = H * W
    Cs = ws_ref.shape[1]

    # --- squeeze: 1x1 conv == channel matmul (bf16 x bf16 -> f32) + bias + ReLU
    s = jnp.dot(x_ref[0], ws_ref[...], preferred_element_type=jnp.float32)
    s_bf = jnp.maximum(s + bs_ref[...], 0.0).astype(jnp.bfloat16)      # (HW, Cs)

    # --- stage squeeze activations in a flat, H-padded scratch ----------------
    # rows: [0, top) zero halo | [top, top+HW) image | [top+HW, +bot) zero halo
    # Halo rows are tiny; re-zero every grid step (safe under "parallel").
    spad_ref[pl.ds(0, top), :] = jnp.zeros((top, Cs), jnp.bfloat16)
    spad_ref[pl.ds(top + HW, bot), :] = jnp.zeros((bot, Cs), jnp.bfloat16)
    spad_ref[pl.ds(top, HW), :] = s_bf                  # sublane-aligned store

    # Hoisted lane-broadcasts of the precomputed edge masks (bf16 0/1).
    nl = jnp.broadcast_to(nl_ref[...], (HW, Cs))        # x-1 neighbour exists
    nr = jnp.broadcast_to(nr_ref[...], (HW, Cs))        # x+1 neighbour exists

    # --- im2col: tap t occupies lanes [t*Cs, (t+1)*Cs) -------------------------
    # Each tap is a contiguous row-offset slice of the padded scratch; only the
    # horizontally shifted taps need the column mask (vertical edges are covered
    # by the zero halo rows).  Lane-offset masked stores ride in vst/XLU slots
    # that are idle while the MXU works.
    for t, (ky, kx) in enumerate(_TAPS):
        off = top + (ky - 1) * W + (kx - 1)             # static row offset
        tap = spad_ref[pl.ds(off, HW), :]               # (HW, Cs)
        if kx == 0:
            tap = tap * nl
        elif kx == 2:
            tap = tap * nr
        im_ref[:, t * Cs:(t + 1) * Cs] = tap

    # --- single fused expand matmul: K = 9*Cs, N = Ce1 + Ce3 -------------------
    # wex columns are [expand1x1 | expand3x3]; expand1x1 weights live in the
    # center-tap K rows, so both branches come out of one MXU pass.
    acc = ball_ref[...] + jnp.dot(im_ref[...], wex_ref[...],
                                  preferred_element_type=jnp.float32)
    o_ref[0] = jnp.maximum(acc, 0.0).astype(o_ref.dtype)


def fire_forward_nhwc(x_nhwc, params, out_dtype=None):
    """x_nhwc: (N, H, W, Cin) float. Returns (N, H, W, Ce1+Ce3) in out_dtype."""
    ws, bs, we1, be1, w3, be3 = params
    N, H, W, Cin = x_nhwc.shape
    Cs, Ce1, Ce3 = ws.shape[1], we1.shape[1], w3.shape[3]
    Ctot = Ce1 + Ce3
    HW = H * W
    out_dtype = x_nhwc.dtype if out_dtype is None else out_dtype

    top = _round_up(2 * W, 8)     # >= W+1 zero rows above the image, 8-aligned
    bot = _round_up(2 * W, 8)     # >= W+1 zero rows below the image

    x_flat = x_nhwc.reshape(N, HW, Cin).astype(jnp.bfloat16)

    # --- weight prep (tiny, one-time under jit) --------------------------------
    ws_bf = ws.astype(jnp.bfloat16)
    bs_f = bs.astype(jnp.float32).reshape(1, Cs)
    # Stacked expand weight: K rows grouped by tap, columns [e1 | e3].
    w_e3 = w3.reshape(9 * Cs, Ce3)                                   # tap-major
    w_e1 = jnp.zeros((9 * Cs, Ce1), w3.dtype).at[4 * Cs:5 * Cs, :].set(we1)
    wex = jnp.concatenate([w_e1, w_e3], axis=1).astype(jnp.bfloat16)  # (9Cs,Ctot)
    b_all = jnp.concatenate([be1.reshape(1, Ce1), be3.reshape(1, Ce3)],
                            axis=1).astype(jnp.float32)               # (1, Ctot)

    # --- precomputed column edge masks, (HW, 1) bf16 compile-time constants ----
    col = (np.arange(HW, dtype=np.int32) % W)[:, None]
    nl = jnp.asarray(col != 0, jnp.bfloat16)
    nr = jnp.asarray(col != (W - 1), jnp.bfloat16)

    kernel = functools.partial(_fire_kernel, H=H, W=W, top=top, bot=bot)

    # Explicit VMEM budget: double-buffered blocks + resident params + scratch.
    def vbytes(r, c, itemsize, bufs=1):
        return bufs * _round_up(r, 16) * _round_up(c, 128) * itemsize

    out_isz = jnp.dtype(out_dtype).itemsize
    vmem_need = (
        vbytes(HW, Cin, 2, bufs=2)            # x block
        + vbytes(HW, Ctot, out_isz, bufs=2)   # output block
        + vbytes(Cin, Cs, 2, bufs=2)          # squeeze weight
        + vbytes(1, Cs, 4, bufs=2)            # squeeze bias
        + vbytes(9 * Cs, Ctot, 2, bufs=2)     # fused expand weight
        + vbytes(1, Ctot, 4, bufs=2)          # fused bias
        + 2 * vbytes(HW, 1, 2, bufs=2)        # edge masks
        + vbytes(top + HW + bot, Cs, 2)       # padded squeeze scratch
        + vbytes(HW, 9 * Cs, 2)               # im2col scratch
    )
    vmem_limit = int(min(100 * 2**20, max(32 * 2**20, 2 * vmem_need)))

    out_flat = pl.pallas_call(
        kernel,
        out_shape=jax.ShapeDtypeStruct((N, HW, Ctot), out_dtype),
        grid_spec=pltpu.PrefetchScalarGridSpec(
            num_scalar_prefetch=0,
            grid=(N,),
            in_specs=[
                pl.BlockSpec((1, HW, Cin), lambda n: (n, 0, 0)),   # x
                pl.BlockSpec((Cin, Cs), lambda n: (0, 0)),         # ws
                pl.BlockSpec((1, Cs), lambda n: (0, 0)),           # bs
                pl.BlockSpec((9 * Cs, Ctot), lambda n: (0, 0)),    # wex
                pl.BlockSpec((1, Ctot), lambda n: (0, 0)),         # b_all
                pl.BlockSpec((HW, 1), lambda n: (0, 0)),           # not_left
                pl.BlockSpec((HW, 1), lambda n: (0, 0)),           # not_right
            ],
            out_specs=pl.BlockSpec((1, HW, Ctot), lambda n: (n, 0, 0)),
            scratch_shapes=[
                pltpu.VMEM((top + HW + bot, Cs), jnp.bfloat16),    # padded squeeze
                pltpu.VMEM((HW, 9 * Cs), jnp.bfloat16),            # im2col
            ],
        ),
        compiler_params=pltpu.CompilerParams(
            dimension_semantics=("parallel",),
            vmem_limit_bytes=vmem_limit,
        ),
    )(x_flat, ws_bf, bs_f, wex, b_all, nl, nr)

    return out_flat.reshape(N, H, W, Ctot)


def fire_forward(x_nchw, params, out_dtype=None):
    """NCHW wrapper mirroring the PyTorch module. When stacking Fire modules,
    prefer fire_forward_nhwc (NHWC/bf16 end-to-end) to drop these transposes."""
    out_nhwc = fire_forward_nhwc(jnp.transpose(x_nchw, (0, 2, 3, 1)), params,
                                 out_dtype=out_dtype)
    return jnp.transpose(out_nhwc, (0, 3, 1, 2))


def ref_fire(x, params):
    """Pure-JAX f32 NCHW reference (mirrors the PyTorch forward)."""
    ws, bs, we1, be1, w3, be3 = params
    w_sq = jnp.transpose(ws)[:, :, None, None]        # (Cs, Cin, 1, 1)  OIHW
    w_e1 = jnp.transpose(we1)[:, :, None, None]       # (Ce1, Cs, 1, 1)
    w_e3 = jnp.transpose(w3, (3, 2, 0, 1))            # (Ce3, Cs, 3, 3)
    dn = ('NCHW', 'OIHW', 'NCHW')
    s = jax.lax.conv_general_dilated(x, w_sq, (1, 1), 'VALID', dimension_numbers=dn)
    s = jax.nn.relu(s + bs.reshape(1, -1, 1, 1))
    e1 = jax.lax.conv_general_dilated(s, w_e1, (1, 1), 'VALID', dimension_numbers=dn)
    e1 = jax.nn.relu(e1 + be1.reshape(1, -1, 1, 1))
    e3 = jax.lax.conv_general_dilated(s, w_e3, (1, 1), ((1, 1), (1, 1)),
                                      dimension_numbers=dn)
    e3 = jax.nn.relu(e3 + be3.reshape(1, -1, 1, 1))
    return jnp.concatenate([e1, e3], axis=1)


def init_params(key, in_channels, squeeze_channels, expand1x1_channels, expand3x3_channels):
    ks = jax.random.split(key, 6)
    ws = 0.2 * jax.random.normal(ks[0], (in_channels, squeeze_channels), jnp.float32)
    bs = 0.1 * jax.random.normal(ks[1], (1, squeeze_channels), jnp.float32)
    we1 = 0.2 * jax.random.normal(ks[2], (squeeze_channels, expand1x1_channels), jnp.float32)
    be1 = 0.1 * jax.random.normal(ks[3], (1, expand1x1_channels), jnp.float32)
    w3 = 0.2 * jax.random.normal(ks[4], (3, 3, squeeze_channels, expand3x3_channels), jnp.float32)
    be3 = 0.1 * jax.random.normal(ks[5], (1, expand3x3_channels), jnp.float32)
    return ws, bs, we1, be1, w3, be3


if __name__ == "__main__":
    # Small smoke-test shapes (benchmark separately at realistic Fire widths,
    # e.g. Cs=16, Ce1=Ce3=64, H=W=55, where the output is lane-dense).
    N, Cin, H, W = 2, 4, 16, 16
    Cs, Ce1, Ce3 = 8, 16, 16

    key = jax.random.PRNGKey(0)
    kx, kp = jax.random.split(key)
    x = jax.random.normal(kx, (N, Cin, H, W), jnp.float32)
    params = init_params(kp, Cin, Cs, Ce1, Ce3)

    out = jax.block_until_ready(jax.jit(fire_forward)(x, params))
    ref = jax.block_until_ready(ref_fire(x, params))

    assert out.shape == (N, Ce1 + Ce3, H, W), out.shape
    # bf16 MXU operands (incl. bf16-rounded squeeze activations) with f32
    # accumulation -> loosened tolerance vs the f32 reference.
    np.testing.assert_allclose(np.asarray(out), np.asarray(ref), rtol=5e-2, atol=5e-2)
    print("KERNEL_OK")
</pallas_src>

<mosaic_0001>
module attributes {stable_mosaic.version = 11 : i64} {
  func.func @_fire_kernel(%arg0: i32, %arg1: memref<1x256x4xbf16, #tpu.memory_space<vmem>>, %arg2: memref<4x8xbf16, #tpu.memory_space<vmem>>, %arg3: memref<1x8xf32, #tpu.memory_space<vmem>>, %arg4: memref<72x32xbf16, #tpu.memory_space<vmem>>, %arg5: memref<1x32xf32, #tpu.memory_space<vmem>>, %arg6: memref<256x1xbf16, #tpu.memory_space<vmem>>, %arg7: memref<256x1xbf16, #tpu.memory_space<vmem>>, %arg8: memref<1x256x32xf32, #tpu.memory_space<vmem>>, %arg9: memref<320x8xbf16, #tpu.memory_space<vmem>>, %arg10: memref<256x72xbf16, #tpu.memory_space<vmem>>) attributes {dimension_semantics = [#tpu.dimension_semantics<parallel>], iteration_bounds = array<i64: 2>, scalar_prefetch = 0 : i64, scratch_operands = 2 : i64, tpu.core_type = #tpu.core_type<tc>, window_params = [{transform_indices = @transform_0, window_bounds = array<i64: 1, 256, 4>}, {pipeline_mode = #tpu.pipeline_mode<synchronous>, transform_indices = @transform_1, window_bounds = array<i64: 4, 8>}, {pipeline_mode = #tpu.pipeline_mode<synchronous>, transform_indices = @transform_2, window_bounds = array<i64: 1, 8>}, {pipeline_mode = #tpu.pipeline_mode<synchronous>, transform_indices = @transform_3, window_bounds = array<i64: 72, 32>}, {pipeline_mode = #tpu.pipeline_mode<synchronous>, transform_indices = @transform_4, window_bounds = array<i64: 1, 32>}, {pipeline_mode = #tpu.pipeline_mode<synchronous>, transform_indices = @transform_5, window_bounds = array<i64: 256, 1>}, {pipeline_mode = #tpu.pipeline_mode<synchronous>, transform_indices = @transform_6, window_bounds = array<i64: 256, 1>}, {transform_indices = @transform_7, window_bounds = array<i64: 1, 256, 32>}]} {
    %c0 = arith.constant 0 : index
    %c0_0 = arith.constant 0 : index
    %c0_1 = arith.constant 0 : index
    %0 = vector.load %arg1[%c0, %c0_0, %c0_1] : memref<1x256x4xbf16, #tpu.memory_space<vmem>>, vector<1x256x4xbf16>
    %1 = vector.shape_cast %0 : vector<1x256x4xbf16> to vector<256x4xbf16>
    %c0_2 = arith.constant 0 : index
    %c0_3 = arith.constant 0 : index
    %2 = vector.load %arg2[%c0_2, %c0_3] : memref<4x8xbf16, #tpu.memory_space<vmem>>, vector<4x8xbf16>
    %cst = arith.constant dense<0.000000e+00> : vector<256x8xf32>
    %3 = tpu.matmul %1, %2, %cst {dimension_numbers = #tpu.dot_dimension_numbers<[1], [0], [0], [1], [0, 0, 1, 1], [], []>} : vector<256x4xbf16>, vector<4x8xbf16>, vector<256x8xf32> -> vector<256x8xf32>
    %c0_4 = arith.constant 0 : index
    %c0_5 = arith.constant 0 : index
    %4 = vector.load %arg3[%c0_4, %c0_5] : memref<1x8xf32, #tpu.memory_space<vmem>>, vector<1x8xf32>
    %5 = vector.broadcast %4 : vector<1x8xf32> to vector<256x8xf32>
    %6 = arith.addf %3, %5 : vector<256x8xf32>
    %cst_6 = arith.constant 0.000000e+00 : f32
    %7 = vector.broadcast %cst_6 : f32 to vector<256x8xf32>
    %8 = arith.maximumf %6, %7 : vector<256x8xf32>
    %9 = arith.truncf %8 : vector<256x8xf32> to vector<256x8xbf16>
    %cst_7 = arith.constant 0.000000e+00 : bf16
    %10 = vector.broadcast %cst_7 : bf16 to vector<32x8xbf16>
    %c0_8 = arith.constant 0 : index
    %c0_9 = arith.constant 0 : index
    %11 = vector.load %arg9[%c0_8, %c0_9] : memref<320x8xbf16, #tpu.memory_space<vmem>>, vector<32x8xbf16>
    tpu.vector_store %arg9[%c0_8, %c0_9], %10 {strides = array<i32>} : memref<320x8xbf16, #tpu.memory_space<vmem>>, vector<32x8xbf16>,
    %cst_10 = arith.constant 0.000000e+00 : bf16
    %12 = vector.broadcast %cst_10 : bf16 to vector<32x8xbf16>
    %c288 = arith.constant 288 : index
    %c0_11 = arith.constant 0 : index
    %13 = vector.load %arg9[%c288, %c0_11] : memref<320x8xbf16, #tpu.memory_space<vmem>>, vector<32x8xbf16>
    tpu.vector_store %arg9[%c288, %c0_11], %12 {strides = array<i32>} : memref<320x8xbf16, #tpu.memory_space<vmem>>, vector<32x8xbf16>,
    %c32 = arith.constant 32 : index
    %c0_12 = arith.constant 0 : index
    %14 = vector.load %arg9[%c32, %c0_12] : memref<320x8xbf16, #tpu.memory_space<vmem>>, vector<256x8xbf16>
    tpu.vector_store %arg9[%c32, %c0_12], %9 {strides = array<i32>} : memref<320x8xbf16, #tpu.memory_space<vmem>>, vector<256x8xbf16>,
    %c0_13 = arith.constant 0 : index
    %c0_14 = arith.constant 0 : index
    %15 = vector.load %arg6[%c0_13, %c0_14] : memref<256x1xbf16, #tpu.memory_space<vmem>>, vector<256x1xbf16>
    %16 = vector.shape_cast %15 : vector<256x1xbf16> to vector<256x1xbf16>
    %17 = vector.broadcast %16 : vector<256x1xbf16> to vector<256x8xbf16>
    %c0_15 = arith.constant 0 : index
    %c0_16 = arith.constant 0 : index
    %18 = vector.load %arg7[%c0_15, %c0_16] : memref<256x1xbf16, #tpu.memory_space<vmem>>, vector<256x1xbf16>
    %19 = vector.shape_cast %18 : vector<256x1xbf16> to vector<256x1xbf16>
    %20 = vector.broadcast %19 : vector<256x1xbf16> to vector<256x8xbf16>
    %c15 = arith.constant 15 : index
    %c0_17 = arith.constant 0 : index
    %21 = vector.load %arg9[%c15, %c0_17] : memref<320x8xbf16, #tpu.memory_space<vmem>>, vector<256x8xbf16>
    %22 = arith.mulf %21, %17 : vector<256x8xbf16>
    %c0_18 = arith.constant 0 : index
    %c0_19 = arith.constant 0 : index
    %23 = vector.load %arg10[%c0_18, %c0_19] : memref<256x72xbf16, #tpu.memory_space<vmem>>, vector<256x8xbf16>
    tpu.vector_store %arg10[%c0_18, %c0_19], %22 {strides = array<i32>} : memref<256x72xbf16, #tpu.memory_space<vmem>>, vector<256x8xbf16>,
    %c16 = arith.constant 16 : index
    %c0_20 = arith.constant 0 : index
    %24 = vector.load %arg9[%c16, %c0_20] : memref<320x8xbf16, #tpu.memory_space<vmem>>, vector<256x8xbf16>
    %c0_21 = arith.constant 0 : index
    %c8 = arith.constant 8 : index
    %25 = vector.load %arg10[%c0_21, %c8] : memref<256x72xbf16, #tpu.memory_space<vmem>>, vector<256x8xbf16>
    tpu.vector_store %arg10[%c0_21, %c8], %24 {strides = array<i32>} : memref<256x72xbf16, #tpu.memory_space<vmem>>, vector<256x8xbf16>,
    %c17 = arith.constant 17 : index
    %c0_22 = arith.constant 0 : index
    %26 = vector.load %arg9[%c17, %c0_22] : memref<320x8xbf16, #tpu.memory_space<vmem>>, vector<256x8xbf16>
    %27 = arith.mulf %26, %20 : vector<256x8xbf16>
    %c0_23 = arith.constant 0 : index
    %c16_24 = arith.constant 16 : index
    %28 = vector.load %arg10[%c0_23, %c16_24] : memref<256x72xbf16, #tpu.memory_space<vmem>>, vector<256x8xbf16>
    tpu.vector_store %arg10[%c0_23, %c16_24], %27 {strides = array<i32>} : memref<256x72xbf16, #tpu.memory_space<vmem>>, vector<256x8xbf16>,
    %c31 = arith.constant 31 : index
    %c0_25 = arith.constant 0 : index
    %29 = vector.load %arg9[%c31, %c0_25] : memref<320x8xbf16, #tpu.memory_space<vmem>>, vector<256x8xbf16>
    %30 = arith.mulf %29, %17 : vector<256x8xbf16>
    %c0_26 = arith.constant 0 : index
    %c24 = arith.constant 24 : index
    %31 = vector.load %arg10[%c0_26, %c24] : memref<256x72xbf16, #tpu.memory_space<vmem>>, vector<256x8xbf16>
    tpu.vector_store %arg10[%c0_26, %c24], %30 {strides = array<i32>} : memref<256x72xbf16, #tpu.memory_space<vmem>>, vector<256x8xbf16>,
    %c32_27 = arith.constant 32 : index
    %c0_28 = arith.constant 0 : index
    %32 = vector.load %arg9[%c32_27, %c0_28] : memref<320x8xbf16, #tpu.memory_space<vmem>>, vector<256x8xbf16>
    %c0_29 = arith.constant 0 : index
    %c32_30 = arith.constant 32 : index
    %33 = vector.load %arg10[%c0_29, %c32_30] : memref<256x72xbf16, #tpu.memory_space<vmem>>, vector<256x8xbf16>
    tpu.vector_store %arg10[%c0_29, %c32_30], %32 {strides = array<i32>} : memref<256x72xbf16, #tpu.memory_space<vmem>>, vector<256x8xbf16>,
    %c33 = arith.constant 33 : index
    %c0_31 = arith.constant 0 : index
    %34 = vector.load %arg9[%c33, %c0_31] : memref<320x8xbf16, #tpu.memory_space<vmem>>, vector<256x8xbf16>
    %35 = arith.mulf %34, %20 : vector<256x8xbf16>
    %c0_32 = arith.constant 0 : index
    %c40 = arith.constant 40 : index
    %36 = vector.load %arg10[%c0_32, %c40] : memref<256x72xbf16, #tpu.memory_space<vmem>>, vector<256x8xbf16>
    tpu.vector_store %arg10[%c0_32, %c40], %35 {strides = array<i32>} : memref<256x72xbf16, #tpu.memory_space<vmem>>, vector<256x8xbf16>,
    %c47 = arith.constant 47 : index
    %c0_33 = arith.constant 0 : index
    %37 = vector.load %arg9[%c47, %c0_33] : memref<320x8xbf16, #tpu.memory_space<vmem>>, vector<256x8xbf16>
    %38 = arith.mulf %37, %17 : vector<256x8xbf16>
    %c0_34 = arith.constant 0 : index
    %c48 = arith.constant 48 : index
    %39 = vector.load %arg10[%c0_34, %c48] : memref<256x72xbf16, #tpu.memory_space<vmem>>, vector<256x8xbf16>
    tpu.vector_store %arg10[%c0_34, %c48], %38 {strides = array<i32>} : memref<256x72xbf16, #tpu.memory_space<vmem>>, vector<256x8xbf16>,
    %c48_35 = arith.constant 48 : index
    %c0_36 = arith.constant 0 : index
    %40 = vector.load %arg9[%c48_35, %c0_36] : memref<320x8xbf16, #tpu.memory_space<vmem>>, vector<256x8xbf16>
    %c0_37 = arith.constant 0 : index
    %c56 = arith.constant 56 : index
    %41 = vector.load %arg10[%c0_37, %c56] : memref<256x72xbf16, #tpu.memory_space<vmem>>, vector<256x8xbf16>
    tpu.vector_store %arg10[%c0_37, %c56], %40 {strides = array<i32>} : memref<256x72xbf16, #tpu.memory_space<vmem>>, vector<256x8xbf16>,
    %c49 = arith.constant 49 : index
    %c0_38 = arith.constant 0 : index
    %42 = vector.load %arg9[%c49, %c0_38] : memref<320x8xbf16, #tpu.memory_space<vmem>>, vector<256x8xbf16>
    %43 = arith.mulf %42, %20 : vector<256x8xbf16>
    %c0_39 = arith.constant 0 : index
    %c64 = arith.constant 64 : index
    %44 = vector.load %arg10[%c0_39, %c64] : memref<256x72xbf16, #tpu.memory_space<vmem>>, vector<256x8xbf16>
    tpu.vector_store %arg10[%c0_39, %c64], %43 {strides = array<i32>} : memref<256x72xbf16, #tpu.memory_space<vmem>>, vector<256x8xbf16>,
    %c0_40 = arith.constant 0 : index
    %c0_41 = arith.constant 0 : index
    %45 = vector.load %arg5[%c0_40, %c0_41] : memref<1x32xf32, #tpu.memory_space<vmem>>, vector<1x32xf32>
    %c0_42 = arith.constant 0 : index
    %c0_43 = arith.constant 0 : index
    %46 = vector.load %arg10[%c0_42, %c0_43] : memref<256x72xbf16, #tpu.memory_space<vmem>>, vector<256x72xbf16>
    %c0_44 = arith.constant 0 : index
    %c0_45 = arith.constant 0 : index
    %47 = vector.load %arg4[%c0_44, %c0_45] : memref<72x32xbf16, #tpu.memory_space<vmem>>, vector<72x32xbf16>
    %cst_46 = arith.constant dense<0.000000e+00> : vector<256x32xf32>
    %48 = tpu.matmul %46, %47, %cst_46 {dimension_numbers = #tpu.dot_dimension_numbers<[1], [0], [0], [1], [0, 0, 1, 1], [], []>} : vector<256x72xbf16>, vector<72x32xbf16>, vector<256x32xf32> -> vector<256x32xf32>
    %49 = vector.broadcast %45 : vector<1x32xf32> to vector<256x32xf32>
    %50 = arith.addf %49, %48 : vector<256x32xf32>
    %cst_47 = arith.constant 0.000000e+00 : f32
    %51 = vector.broadcast %cst_47 : f32 to vector<256x32xf32>
    %52 = arith.maximumf %50, %51 : vector<256x32xf32>
    %c0_48 = arith.constant 0 : index
    %c0_49 = arith.constant 0 : index
    %c0_50 = arith.constant 0 : index
    %53 = vector.load %arg8[%c0_48, %c0_49, %c0_50] : memref<1x256x32xf32, #tpu.memory_space<vmem>>, vector<1x256x32xf32>
    %54 = vector.shape_cast %53 : vector<1x256x32xf32> to vector<256x32xf32>
    %55 = vector.shape_cast %52 : vector<256x32xf32> to vector<1x256x32xf32>
    tpu.vector_store %arg8[%c0_48, %c0_49, %c0_50], %55 {strides = array<i32>} : memref<1x256x32xf32, #tpu.memory_space<vmem>>, vector<1x256x32xf32>,
    return
  }
  func.func @transform_0(%arg0: i32) -> (i32, i32, i32) {
    %c0_i32 = arith.constant 0 : i32
    %c0_i32_0 = arith.constant 0 : i32
    %c0_i32_1 = arith.constant 0 : i32
    return %arg0, %c0_i32, %c0_i32_0 : i32, i32, i32
  }
  func.func @transform_1(%arg0: i32) -> (i32, i32) {
    %c0_i32 = arith.constant 0 : i32
    %c0_i32_0 = arith.constant 0 : i32
    %c0_i32_1 = arith.constant 0 : i32
    return %c0_i32, %c0_i32_0 : i32, i32
  }
  func.func @transform_2(%arg0: i32) -> (i32, i32) {
    %c0_i32 = arith.constant 0 : i32
    %c0_i32_0 = arith.constant 0 : i32
    %c0_i32_1 = arith.constant 0 : i32
    return %c0_i32, %c0_i32_0 : i32, i32
  }
  func.func @transform_3(%arg0: i32) -> (i32, i32) {
    %c0_i32 = arith.constant 0 : i32
    %c0_i32_0 = arith.constant 0 : i32
    %c0_i32_1 = arith.constant 0 : i32
    return %c0_i32, %c0_i32_0 : i32, i32
  }
  func.func @transform_4(%arg0: i32) -> (i32, i32) {
    %c0_i32 = arith.constant 0 : i32
    %c0_i32_0 = arith.constant 0 : i32
    %c0_i32_1 = arith.constant 0 : i32
    return %c0_i32, %c0_i32_0 : i32, i32
  }
  func.func @transform_5(%arg0: i32) -> (i32, i32) {
    %c0_i32 = arith.constant 0 : i32
    %c0_i32_0 = arith.constant 0 : i32
    %c0_i32_1 = arith.constant 0 : i32
    return %c0_i32, %c0_i32_0 : i32, i32
  }
  func.func @transform_6(%arg0: i32) -> (i32, i32) {
    %c0_i32 = arith.constant 0 : i32
    %c0_i32_0 = arith.constant 0 : i32
    %c0_i32_1 = arith.constant 0 : i32
    return %c0_i32, %c0_i32_0 : i32, i32
  }
  func.func @transform_7(%arg0: i32) -> (i32, i32, i32) {
    %c0_i32 = arith.constant 0 : i32
    %c0_i32_0 = arith.constant 0 : i32
    %c0_i32_1 = arith.constant 0 : i32
    return %arg0, %c0_i32, %c0_i32_0 : i32, i32, i32
  }
}

</mosaic_0001>

<llo_original>
// kernel: fire_forward.1
$region0: #{fire_forward.1}
  #allocation0 [shape = 'u32[]', space=smem, size = 0x4, offset = 0x4, fixed_abs, tag = 'smem constant byte address 0x4 - core index']
  #allocation1 [shape = 'u32[144,128]{1,0:T(1,128)}', space=vmem, size = 0x12000, scoped, tag = 'internal scratch']
  #allocation2 [shape = 'bf16[320,8]{1,0:T(16,128)(2,1)}', space=vmem, size = 0x14000, scoped, tag = 'scratch operand']
  #allocation3 [shape = 'bf16[256,72]{1,0:T(16,128)(2,1)}', space=vmem, size = 0x10000, scoped, tag = 'scratch operand']
  %s0 = inlined_call_operand.vmem [shape: bf16[2,256,4], index: 0, kind: input, shape index: {}]
  %s1 = inlined_call_operand.vmem [shape: bf16[4,8], index: 1, kind: input, shape index: {}]
  %s2 = inlined_call_operand.vmem [shape: f32[1,8], index: 2, kind: input, shape index: {}]
  %s3 = inlined_call_operand.vmem [shape: bf16[72,32], index: 3, kind: input, shape index: {}]
  %s4 = inlined_call_operand.vmem [shape: f32[1,32], index: 4, kind: input, shape index: {}]
  %s5 = inlined_call_operand.vmem [shape: bf16[256,1], index: 5, kind: input, shape index: {}]
  %s6 = inlined_call_operand.vmem [shape: bf16[256,1], index: 6, kind: input, shape index: {}]
  %s7 = inlined_call_operand.hbm [shape: f32[2,256,32], index: 7, kind: output, shape index: {}]
  %s8 = sld [smem:[#allocation0]]
  $region61: #{fire_forward.1} parent=0
    _
  %s10 = ssub.s32 1, %s8
  %s11 = scalar_select 0, %s10, %s8
  $region1: #{fire_forward.1} parent=0
    #allocation4 [shape = 'u8[262144]{0}', space=vmem, size = 0x40000, scoped, tag = 'output window, operand 0']
    #allocation5 [shape = 's32[2]{0}', space=sflag, size = 0x8, scoped, tag = 'scoped memory for fire_forward.1']
    %12 = vsyncpa [#allocation5], 0
    %s13 = scalar_lea.sflag [#allocation5], 1
    %14 = vsyncpa %s13, 0
    loop: start=0, step=1, limit=4
    $region2: #{fire_forward.1} parent=1 // loop_pre_header
      _
    $region3: #{fire_forward.1} parent=1 // loop_header
      %s16 = sphi 0, %s20
      %p17 = scmp.ge.s32.totalorder %s16, 4
      %s26 = sphi 0, %s28
      %s29 = sphi 0, %s26
      %s30 = sphi 0, %s29
      %s46 = sphi 0, %s30
      %s50 = sphi 0, %s50
      %s52 = sphi 0, %s50
      %s53 = sphi 0, %s52
      %s67 = sphi 0, %s53
      %s71 = sphi 0, %s71
      %s73 = sphi 0, %s71
      %s74 = sphi 0, %s73
      %s88 = sphi 0, %s74
      %s92 = sphi 0, %s92
      %s94 = sphi 0, %s92
      %s95 = sphi 0, %s94
      %s109 = sphi 0, %s95
      %s113 = sphi 0, %s113
      %s115 = sphi 0, %s113
      %s116 = sphi 0, %s115
      %s130 = sphi 0, %s116
      %s134 = sphi 0, %s134
      %s136 = sphi 0, %s134
      %s137 = sphi 0, %s136
      %s151 = sphi 0, %s137
      %s155 = sphi 0, %s155
      %s157 = sphi 0, %s155
      %s158 = sphi 0, %s157
      %s172 = sphi 0, %s158
      %s178 = sphi 0, %s180
      %s181 = sphi 0, %s178
      %s182 = sphi 0, %s181
      %s198 = sphi 0, %s182
    $region4: #{fire_forward.1} parent=1 // loop_header_branch
      %19 = sbr.rel (%p17) target = $region8
    $region5: #{fire_forward.1} parent=1 // loop_body
      %s21 = ssub.s32 %s16, 1
      %s22 = ssub.s32 %s16, 2
      %s23 = sadd.s32 %s16, 1
      %s24 = ssub.s32 %s16, %s23
      %p25 = scmp.eq.s32.totalorder %s24, 0
      %s27 = sadd.s32 %s26, 1
      %s28 = scalar_select %p25, %s26, %s27
      %p31 = pneg %p25
      %p32 = scmp.eq.s32.totalorder %s16, 1
      %p33 = por %p31, %p32
      %p34 = scmp.ne.s32.totalorder %s26, %s29
      %p35 = scmp.eq.s32.totalorder %s16, 0
      %p36 = por %p34, %p35
      %p37 = scmp.ne.s32.totalorder %s26, %s29
      %p38 = scmp.eq.s32.totalorder %s21, 1
      %p39 = por %p37, %p38
      %p40 = scmp.ne.s32.totalorder %s29, %s30
      %p41 = scmp.eq.s32.totalorder %s21, 0
      %p42 = por %p40, %p41
      %p43 = scmp.ne.s32.totalorder %s29, %s30
      %p44 = scmp.eq.s32.totalorder %s22, 1
      %p45 = por %p43, %p44
      %p47 = scmp.ne.s32.totalorder %s30, %s46
      %p48 = scmp.eq.s32.totalorder %s22, 0
      %p49 = por %p47, %p48
      %s51 = sadd.s32 %s50, 1
      %p54 = scmp.eq.s32.totalorder %s16, 1
      %p55 = scmp.ne.s32.totalorder %s50, %s52
      %p56 = scmp.eq.s32.totalorder %s16, 0
      %p57 = por %p55, %p56
      %p58 = scmp.ne.s32.totalorder %s50, %s52
      %p59 = scmp.eq.s32.totalorder %s21, 1
      %p60 = por %p58, %p59
      %p61 = scmp.ne.s32.totalorder %s52, %s53
      %p62 = scmp.eq.s32.totalorder %s21, 0
      %p63 = por %p61, %p62
      %p64 = scmp.ne.s32.totalorder %s52, %s53
      %p65 = scmp.eq.s32.totalorder %s22, 1
      %p66 = por %p64, %p65
      %p68 = scmp.ne.s32.totalorder %s53, %s67
      %p69 = scmp.eq.s32.totalorder %s22, 0
      %p70 = por %p68, %p69
      %s72 = sadd.s32 %s71, 1
      %p75 = scmp.eq.s32.totalorder %s16, 1
      %p76 = scmp.ne.s32.totalorder %s71, %s73
      %p77 = scmp.eq.s32.totalorder %s16, 0
      %p78 = por %p76, %p77
      %p79 = scmp.ne.s32.totalorder %s71, %s73
      %p80 = scmp.eq.s32.totalorder %s21, 1
      %p81 = por %p79, %p80
      %p82 = scmp.ne.s32.totalorder %s73, %s74
      %p83 = scmp.eq.s32.totalorder %s21, 0
      %p84 = por %p82, %p83
      %p85 = scmp.ne.s32.totalorder %s73, %s74
      %p86 = scmp.eq.s32.totalorder %s22, 1
      %p87 = por %p85, %p86
      %p89 = scmp.ne.s32.totalorder %s74, %s88
      %p90 = scmp.eq.s32.totalorder %s22, 0
      %p91 = por %p89, %p90
      %s93 = sadd.s32 %s92, 1
      %p96 = scmp.eq.s32.totalorder %s16, 1
      %p97 = scmp.ne.s32.totalorder %s92, %s94
      %p98 = scmp.eq.s32.totalorder %s16, 0
      %p99 = por %p97, %p98
      %p100 = scmp.ne.s32.totalorder %s92, %s94
      %p101 = scmp.eq.s32.totalorder %s21, 1
      %p102 = por %p100, %p101
      %p103 = scmp.ne.s32.totalorder %s94, %s95
      %p104 = scmp.eq.s32.totalorder %s21, 0
      %p105 = por %p103, %p104
      %p106 = scmp.ne.s32.totalorder %s94, %s95
      %p107 = scmp.eq.s32.totalorder %s22, 1
      %p108 = por %p106, %p107
      %p110 = scmp.ne.s32.totalorder %s95, %s109
      %p111 = scmp.eq.s32.totalorder %s22, 0
      %p112 = por %p110, %p111
      %s114 = sadd.s32 %s113, 1
      %p117 = scmp.eq.s32.totalorder %s16, 1
      %p118 = scmp.ne.s32.totalorder %s113, %s115
      %p119 = scmp.eq.s32.totalorder %s16, 0
      %p120 = por %p118, %p119
      %p121 = scmp.ne.s32.totalorder %s113, %s115
      %p122 = scmp.eq.s32.totalorder %s21, 1
      %p123 = por %p121, %p122
      %p124 = scmp.ne.s32.totalorder %s115, %s116
      %p125 = scmp.eq.s32.totalorder %s21, 0
      %p126 = por %p124, %p125
      %p127 = scmp.ne.s32.totalorder %s115, %s116
      %p128 = scmp.eq.s32.totalorder %s22, 1
      %p129 = por %p127, %p128
      %p131 = scmp.ne.s32.totalorder %s116, %s130
      %p132 = scmp.eq.s32.totalorder %s22, 0
      %p133 = por %p131, %p132
      %s135 = sadd.s32 %s134, 1
      %p138 = scmp.eq.s32.totalorder %s16, 1
      %p139 = scmp.ne.s32.totalorder %s134, %s136
      %p140 = scmp.eq.s32.totalorder %s16, 0
      %p141 = por %p139, %p140
      %p142 = scmp.ne.s32.totalorder %s134, %s136
      %p143 = scmp.eq.s32.totalorder %s21, 1
      %p144 = por %p142, %p143
      %p145 = scmp.ne.s32.totalorder %s136, %s137
      %p146 = scmp.eq.s32.totalorder %s21, 0
      %p147 = por %p145, %p146
      %p148 = scmp.ne.s32.totalorder %s136, %s137
      %p149 = scmp.eq.s32.totalorder %s22, 1
      %p150 = por %p148, %p149
      %p152 = scmp.ne.s32.totalorder %s137, %s151
      %p153 = scmp.eq.s32.totalorder %s22, 0
      %p154 = por %p152, %p153
      %s156 = sadd.s32 %s155, 1
      %p159 = scmp.eq.s32.totalorder %s16, 1
      %p160 = scmp.ne.s32.totalorder %s155, %s157
      %p161 = scmp.eq.s32.totalorder %s16, 0
      %p162 = por %p160, %p161
      %p163 = scmp.ne.s32.totalorder %s155, %s157
      %p164 = scmp.eq.s32.totalorder %s21, 1
      %p165 = por %p163, %p164
      %p166 = scmp.ne.s32.totalorder %s157, %s158
      %p167 = scmp.eq.s32.totalorder %s21, 0
      %p168 = por %p166, %p167
      %p169 = scmp.ne.s32.totalorder %s157, %s158
      %p170 = scmp.eq.s32.totalorder %s22, 1
      %p171 = por %p169, %p170
      %p173 = scmp.ne.s32.totalorder %s158, %s172
      %p174 = scmp.eq.s32.totalorder %s22, 0
      %p175 = por %p173, %p174
      %s176 = ssub.s32 %s16, %s23
      %p177 = scmp.eq.s32.totalorder %s176, 0
      %s179 = sadd.s32 %s178, 1
      %s180 = scalar_select %p177, %s178, %s179
      %p183 = pneg %p177
      %p184 = scmp.eq.s32.totalorder %s16, 1
      %p185 = por %p183, %p184
      %p186 = scmp.ne.s32.totalorder %s178, %s181
      %p187 = scmp.eq.s32.totalorder %s16, 0
      %p188 = por %p186, %p187
      %p189 = scmp.ne.s32.totalorder %s178, %s181
      %p190 = scmp.eq.s32.totalorder %s21, 1
      %p191 = por %p189, %p190
      %p192 = scmp.ne.s32.totalorder %s181, %s182
      %p193 = scmp.eq.s32.totalorder %s21, 0
      %p194 = por %p192, %p193
      %p195 = scmp.ne.s32.totalorder %s181, %s182
      %p196 = scmp.eq.s32.totalorder %s22, 1
      %p197 = por %p195, %p196
      %p199 = scmp.ne.s32.totalorder %s182, %s198
      %p200 = scmp.eq.s32.totalorder %s22, 0
      %p201 = por %p199, %p200
      %p202 = scmp.le.s32.totalorder 1, %s16
      %p203 = scmp.lt.s32.totalorder %s16, 3
      %p204 = pnand %p202, %p203
      %p205 = pneg %p204
      // Predicated region
      $region9: #{fire_forward.1} parent=5 // pred_check
        _
      $region10: #{fire_forward.1} parent=5 // pred_check_branch
        %207 = sbr.rel (%p204) target = $region12
      $region11: #{fire_forward.1} parent=5 // pred_region
        %s208 = ssub.s32 %s16, 1
        // Predicated region
        $region13: #{fire_forward.1} parent=11 // pred_check
          %p209 = pneg %p63
        $region14: #{fire_forward.1} parent=11 // pred_check_branch
          %211 = sbr.rel (%p209) target = $region16
        $region15: #{fire_forward.1} parent=11 // pred_region
          _
        $region16: #{fire_forward.1} parent=11 // pred_fallthru
          _
        // Predicated region
        $region17: #{fire_forward.1} parent=11 // pred_check
          %p212 = pneg %p84
        $region18: #{fire_forward.1} parent=11 // pred_check_branch
          %214 = sbr.rel (%p212) target = $region20
        $region19: #{fire_forward.1} parent=11 // pred_region
          _
        $region20: #{fire_forward.1} parent=11 // pred_fallthru
          _
        // Predicated region
        $region21: #{fire_forward.1} parent=11 // pred_check
          %p215 = pneg %p105
        $region22: #{fire_forward.1} parent=11 // pred_check_branch
          %217 = sbr.rel (%p215) target = $region24
        $region23: #{fire_forward.1} parent=11 // pred_region
          _
        $region24: #{fire_forward.1} parent=11 // pred_fallthru
          _
        // Predicated region
        $region25: #{fire_forward.1} parent=11 // pred_check
          %p218 = pneg %p126
        $region26: #{fire_forward.1} parent=11 // pred_check_branch
          %220 = sbr.rel (%p218) target = $region28
        $region27: #{fire_forward.1} parent=11 // pred_region
          _
        $region28: #{fire_forward.1} parent=11 // pred_fallthru
          _
        // Predicated region
        $region29: #{fire_forward.1} parent=11 // pred_check
          %p221 = pneg %p147
        $region30: #{fire_forward.1} parent=11 // pred_check_branch
          %223 = sbr.rel (%p221) target = $region32
        $region31: #{fire_forward.1} parent=11 // pred_region
          _
        $region32: #{fire_forward.1} parent=11 // pred_fallthru
          _
        // Predicated region
        $region33: #{fire_forward.1} parent=11 // pred_check
          %p224 = pneg %p168
        $region34: #{fire_forward.1} parent=11 // pred_check_branch
          %226 = sbr.rel (%p224) target = $region36
        $region35: #{fire_forward.1} parent=11 // pred_region
          _
        $region36: #{fire_forward.1} parent=11 // pred_fallthru
          _
      $region12: #{fire_forward.1} parent=5 // pred_fallthru
        _
      %p227 = scmp.lt.s32.totalorder %s16, 2
      // Predicated region
      $region37: #{fire_forward.1} parent=5 // pred_check
        %p228 = pneg %p227
      $region38: #{fire_forward.1} parent=5 // pred_check_branch
        %230 = sbr.rel (%p228) target = $region40
      $region39: #{fire_forward.1} parent=5 // pred_region
        // Predicated region
        $region41: #{fire_forward.1} parent=39 // pred_check
          %p231 = pneg %p36
        $region42: #{fire_forward.1} parent=39 // pred_check_branch
          %233 = sbr.rel (%p231) target = $region44
        $region43: #{fire_forward.1} parent=39 // pred_region
          %p234 = scmp.lt.s32.totalorder %s16, 1
          %s235 = scalar_select %p234, %s16, 1
          %s236 = smul.addr %s235, 32
          %s237 = smul.addr %s236, 4
          %s238 = scalar_lea.vmem %s0, %s237
        $region44: #{fire_forward.1} parent=39 // pred_fallthru
          _
      $region40: #{fire_forward.1} parent=5 // pred_fallthru
        _
      %p239 = scmp.le.s32.totalorder 1, %s16
      %p240 = scmp.lt.s32.totalorder %s16, 3
      %p241 = pnand %p239, %p240
      %p242 = pneg %p241
      // Predicated region
      $region45: #{fire_forward.1} parent=5 // pred_check
        _
      $region46: #{fire_forward.1} parent=5 // pred_check_branch
        %244 = sbr.rel (%p241) target = $region48
      $region47: #{fire_forward.1} parent=5 // pred_region
        %s245 = ssub.s32 %s16, 1
        %p246 = scmp.lt.s32.totalorder %s21, 1
        %s247 = scalar_select %p246, %s21, 1
        %s248 = smul.addr %s247, 32
        %s249 = smul.addr %s248, 4
        %s250 = scalar_lea.vmem %s0, %s249
        %p251 = pneg %p42
        %p252 = pneg %p39
        %p253 = pneg %p63
        %p254 = pneg %p60
        %p255 = pneg %p84
        %p256 = pneg %p81
        %p257 = pneg %p105
        %p258 = pneg %p102
        %p259 = pneg %p126
        %p260 = pneg %p123
        %p261 = pneg %p147
        %p262 = pneg %p144
        %p263 = pneg %p168
        %p264 = pneg %p165
        %p265 = pneg %p194
        %p266 = pneg %p191
        %s267 = sand.u32 %s181, 1
        %s268 = scalar_lea.sflag [#allocation5], %s267
        %s269 = sand.u32 %s181, 1
        %s270 = smul.addr %s269, 256
        %s271 = scalar_lea.vmem [#allocation4], %s270
        %p272 = scmp.lt.s32.totalorder %s21, 1
        %s273 = scalar_select %p272, %s21, 1
        %s274 = smul.addr %s273, 32
        %s275 = smul.addr %s274, 4
        %s276 = scalar_lea.vmem %s0, %s275
        %v278 = vld [vmem:[%s276] sm:$0xf]
        %v279 = vld [vmem:[%s276 + $0x4] sm:$0xf]
        %v280 = vld [vmem:[%s276 + $0x8] sm:$0xf]
        %v281 = vld [vmem:[%s276 + $0xc] sm:$0xf]
        %v282 = vld [vmem:[%s276 + $0x10] sm:$0xf]
        %v283 = vld [vmem:[%s276 + $0x14] sm:$0xf]
        %v284 = vld [vmem:[%s276 + $0x18] sm:$0xf]
        %v285 = vld [vmem:[%s276 + $0x1c] sm:$0xf]
        %v286 = vld [vmem:[%s276 + $0x20] sm:$0xf]
        %v287 = vld [vmem:[%s276 + $0x24] sm:$0xf]
        %v288 = vld [vmem:[%s276 + $0x28] sm:$0xf]
        %v289 = vld [vmem:[%s276 + $0x2c] sm:$0xf]
        %v290 = vld [vmem:[%s276 + $0x30] sm:$0xf]
        %v291 = vld [vmem:[%s276 + $0x34] sm:$0xf]
        %v292 = vld [vmem:[%s276 + $0x38] sm:$0xf]
        %v293 = vld [vmem:[%s276 + $0x3c] sm:$0xf]
        %v294 = vld [vmem:[%s276 + $0x40] sm:$0xf]
        %v295 = vld [vmem:[%s276 + $0x44] sm:$0xf]
        %v296 = vld [vmem:[%s276 + $0x48] sm:$0xf]
        %v297 = vld [vmem:[%s276 + $0x4c] sm:$0xf]
        %v298 = vld [vmem:[%s276 + $0x50] sm:$0xf]
        %v299 = vld [vmem:[%s276 + $0x54] sm:$0xf]
        %v300 = vld [vmem:[%s276 + $0x58] sm:$0xf]
        %v301 = vld [vmem:[%s276 + $0x5c] sm:$0xf]
        %v302 = vld [vmem:[%s276 + $0x60] sm:$0xf]
        %v303 = vld [vmem:[%s276 + $0x64] sm:$0xf]
        %v304 = vld [vmem:[%s276 + $0x68] sm:$0xf]
        %v305 = vld [vmem:[%s276 + $0x6c] sm:$0xf]
        %v306 = vld [vmem:[%s276 + $0x70] sm:$0xf]
        %v307 = vld [vmem:[%s276 + $0x74] sm:$0xf]
        %v308 = vld [vmem:[%s276 + $0x78] sm:$0xf]
        %v309 = vld [vmem:[%s276 + $0x7c] sm:$0xf]
        %v310 = vld [vmem:[%s1] sm:$0x3]
        %v311 = vld [vmem:[%s2] sm:$0x1]
        %v313 = vlaneseq
        %v314 = vshrl.u32 %v313, 7
        %v315 = vsub.s32 0, %v314
        %v316 = vrot.slane %v311, %v315
        %v350 = vunpack.c.l.b16 %v278
        %v351 = vunpack.c.l.b16 %v279
        %v352 = vunpack.c.l.b16 %v280
        %v353 = vunpack.c.l.b16 %v281
        %v354 = vunpack.c.l.b16 %v282
        %v355 = vunpack.c.l.b16 %v283
        %v356 = vunpack.c.l.b16 %v284
        %v357 = vunpack.c.l.b16 %v285
        %v358 = vunpack.c.l.b16 %v286
        %v359 = vunpack.c.l.b16 %v287
        %v360 = vunpack.c.l.b16 %v288
        %v361 = vunpack.c.l.b16 %v289
        %v362 = vunpack.c.l.b16 %v290
        %v363 = vunpack.c.l.b16 %v291
        %v364 = vunpack.c.l.b16 %v292
        %v365 = vunpack.c.l.b16 %v293
        %v366 = vunpack.c.l.b16 %v294
        %v367 = vunpack.c.l.b16 %v295
        %v368 = vunpack.c.l.b16 %v296
        %v369 = vunpack.c.l.b16 %v297
        %v370 = vunpack.c.l.b16 %v298
        %v371 = vunpack.c.l.b16 %v299
        %v372 = vunpack.c.l.b16 %v300
        %v373 = vunpack.c.l.b16 %v301
        %v374 = vunpack.c.l.b16 %v302
        %v375 = vunpack.c.l.b16 %v303
        %v376 = vunpack.c.l.b16 %v304
        %v377 = vunpack.c.l.b16 %v305
        %v378 = vunpack.c.l.b16 %v306
        %v379 = vunpack.c.l.b16 %v307
        %v380 = vunpack.c.l.b16 %v308
        %v381 = vunpack.c.l.b16 %v309
        %v382 = vpack.c.b16 %v351, %v350
        %v383 = vpack.c.b16 %v353, %v352
        %v384 = vpack.c.b16 %v355, %v354
        %v385 = vpack.c.b16 %v357, %v356
        %v386 = vpack.c.b16 %v359, %v358
        %v387 = vpack.c.b16 %v361, %v360
        %v388 = vpack.c.b16 %v363, %v362
        %v389 = vpack.c.b16 %v365, %v364
        %v390 = vpack.c.b16 %v367, %v366
        %v391 = vpack.c.b16 %v369, %v368
        %v392 = vpack.c.b16 %v371, %v370
        %v393 = vpack.c.b16 %v373, %v372
        %v394 = vpack.c.b16 %v375, %v374
        %v395 = vpack.c.b16 %v377, %v376
        %v396 = vpack.c.b16 %v379, %v378
        %v397 = vpack.c.b16 %v381, %v380
        %vm398 = vcmask 31744
        %v400 = vsel %vm398, %v382, 0
        %v403 = vsel %vm398, %v383, 0
        %v406 = vsel %vm398, %v384, 0
        %v409 = vsel %vm398, %v385, 0
        %v412 = vsel %vm398, %v386, 0
        %v415 = vsel %vm398, %v387, 0
        %v418 = vsel %vm398, %v388, 0
        %v421 = vsel %vm398, %v389, 0
        %v424 = vsel %vm398, %v390, 0
        %v427 = vsel %vm398, %v391, 0
        %v430 = vsel %vm398, %v392, 0
        %v433 = vsel %vm398, %v393, 0
        %v436 = vsel %vm398, %v394, 0
        %v439 = vsel %vm398, %v395, 0
        %v442 = vsel %vm398, %v396, 0
        %v445 = vsel %vm398, %v397, 0
        %vm447 = vcmask 1041408
        %v449 = vsel %vm447, %v310, 0
        %451 = vmatprep.subr.bf16.mxu0 0
        %452 = vmatpush1.bf16.msra.mxu0 %v449
        %453 = vmatprep.subr.bf16.mxu0 0
        %454 = vmatpush1.bf16.msra.mxu0 0
        %455 = vmatprep.subr.bf16.mxu0 0
        %456 = vmatpush1.bf16.msra.mxu0 0
        %457 = vmatprep.subr.bf16.mxu0 0
        %458 = vmatpush1.bf16.msra.mxu0 0
        %459 = vmatprep.subr.bf16.mxu0 0
        %460 = vmatpush1.bf16.msra.mxu0 0
        %461 = vmatprep.subr.bf16.mxu0 0
        %462 = vmatpush1.bf16.msra.mxu0 0
        %463 = vmatprep.subr.bf16.mxu0 0
        %464 = vmatpush1.bf16.msra.mxu0 0
        %465 = vmatprep.subr.bf16.mxu0 0
        %466 = vmatpush1.bf16.msra.mxu0 0
        %467 = vmatprep.subr.bf16.mxu0 0
        %468 = vmatpush1.bf16.msra.mxu0 0
        %469 = vmatprep.subr.bf16.mxu0 0
        %470 = vmatpush1.bf16.msra.mxu0 0
        %471 = vmatprep.subr.bf16.mxu0 0
        %472 = vmatpush1.bf16.msra.mxu0 0
        %473 = vmatprep.subr.bf16.mxu0 0
        %474 = vmatpush1.bf16.msra.mxu0 0
        %475 = vmatprep.subr.bf16.mxu0 0
        %476 = vmatpush1.bf16.msra.mxu0 0
        %477 = vmatprep.subr.bf16.mxu0 0
        %478 = vmatpush1.bf16.msra.mxu0 0
        %479 = vmatprep.subr.bf16.mxu0 0
        %480 = vmatpush1.bf16.msra.mxu0 0
        %481 = vmatprep.subr.bf16.mxu0 0
        %482 = vmatpush1.bf16.msra.mxu0 0
        %483 = vmatprep.mubr.bf16.mxu0 0
        %484 = vmatmul.mubr.bf16.gmra.mrb[0].mxu0 %v400
        %v485 = vpop.f32.mrb[0].mxu0
        %v486 = vadd.f32 %v316, %v485
        %v487 = vpop.f32.mrb[0].mxu0
        %v488 = vpop.f32.mrb[0].mxu0
        %v489 = vadd.f32 %v316, %v488
        %v490 = vpop.f32.mrb[0].mxu0
        %491 = vmatprep.mubr.bf16.mxu0 0
        %492 = vmatmul.mubr.bf16.gmra.mrb[0].mxu0 %v403
        %v493 = vpop.f32.mrb[0].mxu0
        %v494 = vadd.f32 %v316, %v493
        %v495 = vpop.f32.mrb[0].mxu0
        %v496 = vpop.f32.mrb[0].mxu0
        %v497 = vadd.f32 %v316, %v496
        %v498 = vpop.f32.mrb[0].mxu0
        %499 = vmatprep.mubr.bf16.mxu0 0
        %500 = vmatmul.mubr.bf16.gmra.mrb[0].mxu0 %v406
        %v501 = vpop.f32.mrb[0].mxu0
        %v502 = vadd.f32 %v316, %v501
        %v503 = vpop.f32.mrb[0].mxu0
        %v504 = vpop.f32.mrb[0].mxu0
        %v505 = vadd.f32 %v316, %v504
        %v506 = vpop.f32.mrb[0].mxu0
        %507 = vmatprep.mubr.bf16.mxu0 0
        %508 = vmatmul.mubr.bf16.gmra.mrb[0].mxu0 %v409
        %v509 = vpop.f32.mrb[0].mxu0
        %v510 = vadd.f32 %v316, %v509
        %v511 = vpop.f32.mrb[0].mxu0
        %v512 = vpop.f32.mrb[0].mxu0
        %v513 = vadd.f32 %v316, %v512
        %v514 = vpop.f32.mrb[0].mxu0
        %515 = vmatprep.mubr.bf16.mxu0 0
        %516 = vmatmul.mubr.bf16.gmra.mrb[0].mxu0 %v412
        %v517 = vpop.f32.mrb[0].mxu0
        %v518 = vadd.f32 %v316, %v517
        %v519 = vpop.f32.mrb[0].mxu0
        %v520 = vpop.f32.mrb[0].mxu0
        %v521 = vadd.f32 %v316, %v520
        %v522 = vpop.f32.mrb[0].mxu0
        %523 = vmatprep.mubr.bf16.mxu0 0
        %524 = vmatmul.mubr.bf16.gmra.mrb[0].mxu0 %v415
        %v525 = vpop.f32.mrb[0].mxu0
        %v526 = vadd.f32 %v316, %v525
        %v527 = vpop.f32.mrb[0].mxu0
        %v528 = vpop.f32.mrb[0].mxu0
        %v529 = vadd.f32 %v316, %v528
        %v530 = vpop.f32.mrb[0].mxu0
        %531 = vmatprep.mubr.bf16.mxu0 0
        %532 = vmatmul.mubr.bf16.gmra.mrb[0].mxu0 %v418
        %v533 = vpop.f32.mrb[0].mxu0
        %v534 = vadd.f32 %v316, %v533
        %v535 = vpop.f32.mrb[0].mxu0
        %v536 = vpop.f32.mrb[0].mxu0
        %v537 = vadd.f32 %v316, %v536
        %v538 = vpop.f32.mrb[0].mxu0
        %539 = vmatprep.mubr.bf16.mxu0 0
        %540 = vmatmul.mubr.bf16.gmra.mrb[0].mxu0 %v421
        %v541 = vpop.f32.mrb[0].mxu0
        %v542 = vadd.f32 %v316, %v541
        %v543 = vpop.f32.mrb[0].mxu0
        %v544 = vpop.f32.mrb[0].mxu0
        %v545 = vadd.f32 %v316, %v544
        %v546 = vpop.f32.mrb[0].mxu0
        %547 = vmatprep.mubr.bf16.mxu0 0
        %548 = vmatmul.mubr.bf16.gmra.mrb[0].mxu0 %v424
        %v549 = vpop.f32.mrb[0].mxu0
        %v550 = vadd.f32 %v316, %v549
        %v551 = vpop.f32.mrb[0].mxu0
        %v552 = vpop.f32.mrb[0].mxu0
        %v553 = vadd.f32 %v316, %v552
        %v554 = vpop.f32.mrb[0].mxu0
        %555 = vmatprep.mubr.bf16.mxu0 0
        %556 = vmatmul.mubr.bf16.gmra.mrb[0].mxu0 %v427
        %v557 = vpop.f32.mrb[0].mxu0
        %v558 = vadd.f32 %v316, %v557
        %v559 = vpop.f32.mrb[0].mxu0
        %v560 = vpop.f32.mrb[0].mxu0
        %v561 = vadd.f32 %v316, %v560
        %v562 = vpop.f32.mrb[0].mxu0
        %563 = vmatprep.mubr.bf16.mxu0 0
        %564 = vmatmul.mubr.bf16.gmra.mrb[0].mxu0 %v430
        %v565 = vpop.f32.mrb[0].mxu0
        %v566 = vadd.f32 %v316, %v565
        %v567 = vpop.f32.mrb[0].mxu0
        %v568 = vpop.f32.mrb[0].mxu0
        %v569 = vadd.f32 %v316, %v568
        %v570 = vpop.f32.mrb[0].mxu0
        %571 = vmatprep.mubr.bf16.mxu0 0
        %572 = vmatmul.mubr.bf16.gmra.mrb[0].mxu0 %v433
        %v573 = vpop.f32.mrb[0].mxu0
        %v574 = vadd.f32 %v316, %v573
        %v575 = vpop.f32.mrb[0].mxu0
        %v576 = vpop.f32.mrb[0].mxu0
        %v577 = vadd.f32 %v316, %v576
        %v578 = vpop.f32.mrb[0].mxu0
        %579 = vmatprep.mubr.bf16.mxu0 0
        %580 = vmatmul.mubr.bf16.gmra.mrb[0].mxu0 %v436
        %v581 = vpop.f32.mrb[0].mxu0
        %v582 = vadd.f32 %v316, %v581
        %v583 = vpop.f32.mrb[0].mxu0
        %v584 = vpop.f32.mrb[0].mxu0
        %v585 = vadd.f32 %v316, %v584
        %v586 = vpop.f32.mrb[0].mxu0
        %587 = vmatprep.mubr.bf16.mxu0 0
        %588 = vmatmul.mubr.bf16.gmra.mrb[0].mxu0 %v439
        %v589 = vpop.f32.mrb[0].mxu0
        %v590 = vadd.f32 %v316, %v589
        %v591 = vpop.f32.mrb[0].mxu0
        %v592 = vpop.f32.mrb[0].mxu0
        %v593 = vadd.f32 %v316, %v592
        %v594 = vpop.f32.mrb[0].mxu0
        %595 = vmatprep.mubr.bf16.mxu0 0
        %596 = vmatmul.mubr.bf16.gmra.mrb[0].mxu0 %v442
        %v597 = vpop.f32.mrb[0].mxu0
        %v598 = vadd.f32 %v316, %v597
        %v599 = vpop.f32.mrb[0].mxu0
        %v600 = vpop.f32.mrb[0].mxu0
        %v601 = vadd.f32 %v316, %v600
        %v602 = vpop.f32.mrb[0].mxu0
        %603 = vmatprep.mubr.bf16.mxu0 0
        %604 = vmatmul.mubr.bf16.gmra.mrb[0].mxu0 %v445
        %v605 = vpop.f32.mrb[0].mxu0
        %v606 = vadd.f32 %v316, %v605
        %v607 = vpop.f32.mrb[0].mxu0
        %v608 = vpop.f32.mrb[0].mxu0
        %v609 = vadd.f32 %v316, %v608
        %v610 = vpop.f32.mrb[0].mxu0
        %611 = vdwg.mxu0
        %v612 = vmax.f32 %v486, 0.0
        %v613 = vmax.f32 %v489, 0.0
        %v614 = vmax.f32 %v494, 0.0
        %v615 = vmax.f32 %v497, 0.0
        %v616 = vmax.f32 %v502, 0.0
        %v617 = vmax.f32 %v505, 0.0
        %v618 = vmax.f32 %v510, 0.0
        %v619 = vmax.f32 %v513, 0.0
        %v620 = vmax.f32 %v518, 0.0
        %v621 = vmax.f32 %v521, 0.0
        %v622 = vmax.f32 %v526, 0.0
        %v623 = vmax.f32 %v529, 0.0
        %v624 = vmax.f32 %v534, 0.0
        %v625 = vmax.f32 %v537, 0.0
        %v626 = vmax.f32 %v542, 0.0
        %v627 = vmax.f32 %v545, 0.0
        %v628 = vmax.f32 %v550, 0.0
        %v629 = vmax.f32 %v553, 0.0
        %v630 = vmax.f32 %v558, 0.0
        %v631 = vmax.f32 %v561, 0.0
        %v632 = vmax.f32 %v566, 0.0
        %v633 = vmax.f32 %v569, 0.0
        %v634 = vmax.f32 %v574, 0.0
        %v635 = vmax.f32 %v577, 0.0
        %v636 = vmax.f32 %v582, 0.0
        %v637 = vmax.f32 %v585, 0.0
        %v638 = vmax.f32 %v590, 0.0
        %v639 = vmax.f32 %v593, 0.0
        %v640 = vmax.f32 %v598, 0.0
        %v641 = vmax.f32 %v601, 0.0
        %v642 = vmax.f32 %v606, 0.0
        %v643 = vmax.f32 %v609, 0.0
        %v644 = vpack.c.bf16 %v613, %v612
        %v645 = vpack.c.bf16 %v615, %v614
        %v646 = vpack.c.bf16 %v617, %v616
        %v647 = vpack.c.bf16 %v619, %v618
        %v648 = vpack.c.bf16 %v621, %v620
        %v649 = vpack.c.bf16 %v623, %v622
        %v650 = vpack.c.bf16 %v625, %v624
        %v651 = vpack.c.bf16 %v627, %v626
        %v652 = vpack.c.bf16 %v629, %v628
        %v653 = vpack.c.bf16 %v631, %v630
        %v654 = vpack.c.bf16 %v633, %v632
        %v655 = vpack.c.bf16 %v635, %v634
        %v656 = vpack.c.bf16 %v637, %v636
        %v657 = vpack.c.bf16 %v639, %v638
        %v658 = vpack.c.bf16 %v641, %v640
        %v659 = vpack.c.bf16 %v643, %v642
        %vm660 = vcmask 64512
        %661 = vst.msk [vmem:[#allocation2] sm:$0xff] %vm660, 0
        %662 = vst.msk [vmem:[#allocation2 + $0x8] sm:$0xff] %vm660, 0
        %663 = vst.msk [vmem:[#allocation2 + $0x90] sm:$0xff] %vm660, 0
        %664 = vst.msk [vmem:[#allocation2 + $0x98] sm:$0xff] %vm660, 0
        %665 = vst.msk [vmem:[#allocation2 + $0x10] sm:$0xff] %vm660, %v644
        %666 = vst.msk [vmem:[#allocation2 + $0x18] sm:$0xff] %vm660, %v645
        %667 = vst.msk [vmem:[#allocation2 + $0x20] sm:$0xff] %vm660, %v646
        %668 = vst.msk [vmem:[#allocation2 + $0x28] sm:$0xff] %vm660, %v647
        %669 = vst.msk [vmem:[#allocation2 + $0x30] sm:$0xff] %vm660, %v648
        %670 = vst.msk [vmem:[#allocation2 + $0x38] sm:$0xff] %vm660, %v649
        %671 = vst.msk [vmem:[#allocation2 + $0x40] sm:$0xff] %vm660, %v650
        %672 = vst.msk [vmem:[#allocation2 + $0x48] sm:$0xff] %vm660, %v651
        %673 = vst.msk [vmem:[#allocation2 + $0x50] sm:$0xff] %vm660, %v652
        %674 = vst.msk [vmem:[#allocation2 + $0x58] sm:$0xff] %vm660, %v653
        %675 = vst.msk [vmem:[#allocation2 + $0x60] sm:$0xff] %vm660, %v654
        %676 = vst.msk [vmem:[#allocation2 + $0x68] sm:$0xff] %vm660, %v655
        %677 = vst.msk [vmem:[#allocation2 + $0x70] sm:$0xff] %vm660, %v656
        %678 = vst.msk [vmem:[#allocation2 + $0x78] sm:$0xff] %vm660, %v657
        %679 = vst.msk [vmem:[#allocation2 + $0x80] sm:$0xff] %vm660, %v658
        %680 = vst.msk [vmem:[#allocation2 + $0x88] sm:$0xff] %vm660, %v659
        %v681 = vld [vmem:[%s5] sm:$0xf]
        %v682 = vld [vmem:[%s5 + $0x4] sm:$0xf]
        %v683 = vld [vmem:[%s5 + $0x8] sm:$0xf]
        %v684 = vld [vmem:[%s5 + $0xc] sm:$0xf]
        %v685 = vld [vmem:[%s5 + $0x10] sm:$0xf]
        %v686 = vld [vmem:[%s5 + $0x14] sm:$0xf]
        %v687 = vld [vmem:[%s5 + $0x18] sm:$0xf]
        %v688 = vld [vmem:[%s5 + $0x1c] sm:$0xf]
        %v689 = vld [vmem:[%s5 + $0x20] sm:$0xf]
        %v690 = vld [vmem:[%s5 + $0x24] sm:$0xf]
        %v691 = vld [vmem:[%s5 + $0x28] sm:$0xf]
        %v692 = vld [vmem:[%s5 + $0x2c] sm:$0xf]
        %v693 = vld [vmem:[%s5 + $0x30] sm:$0xf]
        %v694 = vld [vmem:[%s5 + $0x34] sm:$0xf]
        %v695 = vld [vmem:[%s5 + $0x38] sm:$0xf]
        %v696 = vld [vmem:[%s5 + $0x3c] sm:$0xf]
        %v697 = vld [vmem:[%s5 + $0x40] sm:$0xf]
        %v698 = vld [vmem:[%s5 + $0x44] sm:$0xf]
        %v699 = vld [vmem:[%s5 + $0x48] sm:$0xf]
        %v700 = vld [vmem:[%s5 + $0x4c] sm:$0xf]
        %v701 = vld [vmem:[%s5 + $0x50] sm:$0xf]
        %v702 = vld [vmem:[%s5 + $0x54] sm:$0xf]
        %v703 = vld [vmem:[%s5 + $0x58] sm:$0xf]
        %v704 = vld [vmem:[%s5 + $0x5c] sm:$0xf]
        %v705 = vld [vmem:[%s5 + $0x60] sm:$0xf]
        %v706 = vld [vmem:[%s5 + $0x64] sm:$0xf]
        %v707 = vld [vmem:[%s5 + $0x68] sm:$0xf]
        %v708 = vld [vmem:[%s5 + $0x6c] sm:$0xf]
        %v709 = vld [vmem:[%s5 + $0x70] sm:$0xf]
        %v710 = vld [vmem:[%s5 + $0x74] sm:$0xf]
        %v711 = vld [vmem:[%s5 + $0x78] sm:$0xf]
        %v712 = vld [vmem:[%s5 + $0x7c] sm:$0xf]
        %714 = vset.pattern.permute.xlu0 0
        %715 = vperm.xlu0 %714, %v681
        %v716 = vpop.permute.xlu0 %715
        %v719 = vunpack.c.l.s4 839922192
        %v720 = vunpack.c.0.s8 %v719
        %v721 = vlaneseq
        %v722 = vshrl.u32 %v721, 7
        %v723 = vsub.s32 %v720, %v722
        %v724 = vrot.slane %v716, %v723
        %726 = vset.pattern.permute.xlu0 0
        %727 = vperm.xlu0 %726, %v682
        %v728 = vpop.permute.xlu0 %727
        %v731 = vunpack.c.l.s4 839922192
        %v732 = vunpack.c.0.s8 %v731
        %v733 = vlaneseq
        %v734 = vshrl.u32 %v733, 7
        %v735 = vsub.s32 %v732, %v734
        %v736 = vrot.slane %v728, %v735
        %738 = vset.pattern.permute.xlu0 0
        %739 = vperm.xlu0 %738, %v683
        %v740 = vpop.permute.xlu0 %739
        %v743 = vunpack.c.l.s4 839922192
        %v744 = vunpack.c.0.s8 %v743
        %v745 = vlaneseq
        %v746 = vshrl.u32 %v745, 7
        %v747 = vsub.s32 %v744, %v746
        %v748 = vrot.slane %v740, %v747
        %750 = vset.pattern.permute.xlu0 0
        %751 = vperm.xlu0 %750, %v684
        %v752 = vpop.permute.xlu0 %751
        %v755 = vunpack.c.l.s4 839922192
        %v756 = vunpack.c.0.s8 %v755
        %v757 = vlaneseq
        %v758 = vshrl.u32 %v757, 7
        %v759 = vsub.s32 %v756, %v758
        %v760 = vrot.slane %v752, %v759
        %762 = vset.pattern.permute.xlu0 0
        %763 = vperm.xlu0 %762, %v685
        %v764 = vpop.permute.xlu0 %763
        %v767 = vunpack.c.l.s4 839922192
        %v768 = vunpack.c.0.s8 %v767
        %v769 = vlaneseq
        %v770 = vshrl.u32 %v769, 7
        %v771 = vsub.s32 %v768, %v770
        %v772 = vrot.slane %v764, %v771
        %774 = vset.pattern.permute.xlu0 0
        %775 = vperm.xlu0 %774, %v686
        %v776 = vpop.permute.xlu0 %775
        %v779 = vunpack.c.l.s4 839922192
        %v780 = vunpack.c.0.s8 %v779
        %v781 = vlaneseq
        %v782 = vshrl.u32 %v781, 7
        %v783 = vsub.s32 %v780, %v782
        %v784 = vrot.slane %v776, %v783
        %786 = vset.pattern.permute.xlu0 0
        %787 = vperm.xlu0 %786, %v687
        %v788 = vpop.permute.xlu0 %787
        %v791 = vunpack.c.l.s4 839922192
        %v792 = vunpack.c.0.s8 %v791
        %v793 = vlaneseq
        %v794 = vshrl.u32 %v793, 7
        %v795 = vsub.s32 %v792, %v794
        %v796 = vrot.slane %v788, %v795
        %798 = vset.pattern.permute.xlu0 0
        %799 = vperm.xlu0 %798, %v688
        %v800 = vpop.permute.xlu0 %799
        %v803 = vunpack.c.l.s4 839922192
        %v804 = vunpack.c.0.s8 %v803
        %v805 = vlaneseq
        %v806 = vshrl.u32 %v805, 7
        %v807 = vsub.s32 %v804, %v806
        %v808 = vrot.slane %v800, %v807
        %810 = vset.pattern.permute.xlu0 0
        %811 = vperm.xlu0 %810, %v689
        %v812 = vpop.permute.xlu0 %811
        %v815 = vunpack.c.l.s4 839922192
        %v816 = vunpack.c.0.s8 %v815
        %v817 = vlaneseq
        %v818 = vshrl.u32 %v817, 7
        %v819 = vsub.s32 %v816, %v818
        %v820 = vrot.slane %v812, %v819
        %822 = vset.pattern.permute.xlu0 0
        %823 = vperm.xlu0 %822, %v690
        %v824 = vpop.permute.xlu0 %823
        %v827 = vunpack.c.l.s4 839922192
        %v828 = vunpack.c.0.s8 %v827
        %v829 = vlaneseq
        %v830 = vshrl.u32 %v829, 7
        %v831 = vsub.s32 %v828, %v830
        %v832 = vrot.slane %v824, %v831
        %834 = vset.pattern.permute.xlu0 0
        %835 = vperm.xlu0 %834, %v691
        %v836 = vpop.permute.xlu0 %835
        %v839 = vunpack.c.l.s4 839922192
        %v840 = vunpack.c.0.s8 %v839
        %v841 = vlaneseq
        %v842 = vshrl.u32 %v841, 7
        %v843 = vsub.s32 %v840, %v842
        %v844 = vrot.slane %v836, %v843
        %846 = vset.pattern.permute.xlu0 0
        %847 = vperm.xlu0 %846, %v692
        %v848 = vpop.permute.xlu0 %847
        %v851 = vunpack.c.l.s4 839922192
        %v852 = vunpack.c.0.s8 %v851
        %v853 = vlaneseq
        %v854 = vshrl.u32 %v853, 7
        %v855 = vsub.s32 %v852, %v854
        %v856 = vrot.slane %v848, %v855
        %858 = vset.pattern.permute.xlu0 0
        %859 = vperm.xlu0 %858, %v693
        %v860 = vpop.permute.xlu0 %859
        %v863 = vunpack.c.l.s4 839922192
        %v864 = vunpack.c.0.s8 %v863
        %v865 = vlaneseq
        %v866 = vshrl.u32 %v865, 7
        %v867 = vsub.s32 %v864, %v866
        %v868 = vrot.slane %v860, %v867
        %870 = vset.pattern.permute.xlu0 0
        %871 = vperm.xlu0 %870, %v694
        %v872 = vpop.permute.xlu0 %871
        %v875 = vunpack.c.l.s4 839922192
        %v876 = vunpack.c.0.s8 %v875
        %v877 = vlaneseq
        %v878 = vshrl.u32 %v877, 7
        %v879 = vsub.s32 %v876, %v878
        %v880 = vrot.slane %v872, %v879
        %882 = vset.pattern.permute.xlu0 0
        %883 = vperm.xlu0 %882, %v695
        %v884 = vpop.permute.xlu0 %883
        %v887 = vunpack.c.l.s4 839922192
        %v888 = vunpack.c.0.s8 %v887
        %v889 = vlaneseq
        %v890 = vshrl.u32 %v889, 7
        %v891 = vsub.s32 %v888, %v890
        %v892 = vrot.slane %v884, %v891
        %894 = vset.pattern.permute.xlu0 0
        %895 = vperm.xlu0 %894, %v696
        %v896 = vpop.permute.xlu0 %895
        %v899 = vunpack.c.l.s4 839922192
        %v900 = vunpack.c.0.s8 %v899
        %v901 = vlaneseq
        %v902 = vshrl.u32 %v901, 7
        %v903 = vsub.s32 %v900, %v902
        %v904 = vrot.slane %v896, %v903
        %906 = vset.pattern.permute.xlu0 0
        %907 = vperm.xlu0 %906, %v697
        %v908 = vpop.permute.xlu0 %907
        %v911 = vunpack.c.l.s4 839922192
        %v912 = vunpack.c.0.s8 %v911
        %v913 = vlaneseq
        %v914 = vshrl.u32 %v913, 7
        %v915 = vsub.s32 %v912, %v914
        %v916 = vrot.slane %v908, %v915
        %918 = vset.pattern.permute.xlu0 0
        %919 = vperm.xlu0 %918, %v698
        %v920 = vpop.permute.xlu0 %919
        %v923 = vunpack.c.l.s4 839922192
        %v924 = vunpack.c.0.s8 %v923
        %v925 = vlaneseq
        %v926 = vshrl.u32 %v925, 7
        %v927 = vsub.s32 %v924, %v926
        %v928 = vrot.slane %v920, %v927
        %930 = vset.pattern.permute.xlu0 0
        %931 = vperm.xlu0 %930, %v699
        %v932 = vpop.permute.xlu0 %931
        %v935 = vunpack.c.l.s4 839922192
        %v936 = vunpack.c.0.s8 %v935
        %v937 = vlaneseq
        %v938 = vshrl.u32 %v937, 7
        %v939 = vsub.s32 %v936, %v938
        %v940 = vrot.slane %v932, %v939
        %942 = vset.pattern.permute.xlu0 0
        %943 = vperm.xlu0 %942, %v700
        %v944 = vpop.permute.xlu0 %943
        %v947 = vunpack.c.l.s4 839922192
        %v948 = vunpack.c.0.s8 %v947
        %v949 = vlaneseq
        %v950 = vshrl.u32 %v949, 7
        %v951 = vsub.s32 %v948, %v950
        %v952 = vrot.slane %v944, %v951
        %954 = vset.pattern.permute.xlu0 0
        %955 = vperm.xlu0 %954, %v701
        %v956 = vpop.permute.xlu0 %955
        %v959 = vunpack.c.l.s4 839922192
        %v960 = vunpack.c.0.s8 %v959
        %v961 = vlaneseq
        %v962 = vshrl.u32 %v961, 7
        %v963 = vsub.s32 %v960, %v962
        %v964 = vrot.slane %v956, %v963
        %966 = vset.pattern.permute.xlu0 0
        %967 = vperm.xlu0 %966, %v702
        %v968 = vpop.permute.xlu0 %967
        %v971 = vunpack.c.l.s4 839922192
        %v972 = vunpack.c.0.s8 %v971
        %v973 = vlaneseq
        %v974 = vshrl.u32 %v973, 7
        %v975 = vsub.s32 %v972, %v974
        %v976 = vrot.slane %v968, %v975
        %978 = vset.pattern.permute.xlu0 0
        %979 = vperm.xlu0 %978, %v703
        %v980 = vpop.permute.xlu0 %979
        %v983 = vunpack.c.l.s4 839922192
        %v984 = vunpack.c.0.s8 %v983
        %v985 = vlaneseq
        %v986 = vshrl.u32 %v985, 7
        %v987 = vsub.s32 %v984, %v986
        %v988 = vrot.slane %v980, %v987
        %990 = vset.pattern.permute.xlu0 0
        %991 = vperm.xlu0 %990, %v704
        %v992 = vpop.permute.xlu0 %991
        %v995 = vunpack.c.l.s4 839922192
        %v996 = vunpack.c.0.s8 %v995
        %v997 = vlaneseq
        %v998 = vshrl.u32 %v997, 7
        %v999 = vsub.s32 %v996, %v998
        %v1000 = vrot.slane %v992, %v999
        %1002 = vset.pattern.permute.xlu0 0
        %1003 = vperm.xlu0 %1002, %v705
        %v1004 = vpop.permute.xlu0 %1003
        %v1007 = vunpack.c.l.s4 839922192
        %v1008 = vunpack.c.0.s8 %v1007
        %v1009 = vlaneseq
        %v1010 = vshrl.u32 %v1009, 7
        %v1011 = vsub.s32 %v1008, %v1010
        %v1012 = vrot.slane %v1004, %v1011
        %1014 = vset.pattern.permute.xlu0 0
        %1015 = vperm.xlu0 %1014, %v706
        %v1016 = vpop.permute.xlu0 %1015
        %v1019 = vunpack.c.l.s4 839922192
        %v1020 = vunpack.c.0.s8 %v1019
        %v1021 = vlaneseq
        %v1022 = vshrl.u32 %v1021, 7
        %v1023 = vsub.s32 %v1020, %v1022
        %v1024 = vrot.slane %v1016, %v1023
        %1026 = vset.pattern.permute.xlu0 0
        %1027 = vperm.xlu0 %1026, %v707
        %v1028 = vpop.permute.xlu0 %1027
        %v1031 = vunpack.c.l.s4 839922192
        %v1032 = vunpack.c.0.s8 %v1031
        %v1033 = vlaneseq
        %v1034 = vshrl.u32 %v1033, 7
        %v1035 = vsub.s32 %v1032, %v1034
        %v1036 = vrot.slane %v1028, %v1035
        %1038 = vset.pattern.permute.xlu0 0
        %1039 = vperm.xlu0 %1038, %v708
        %v1040 = vpop.permute.xlu0 %1039
        %v1043 = vunpack.c.l.s4 839922192
        %v1044 = vunpack.c.0.s8 %v1043
        %v1045 = vlaneseq
        %v1046 = vshrl.u32 %v1045, 7
        %v1047 = vsub.s32 %v1044, %v1046
        %v1048 = vrot.slane %v1040, %v1047
        %1050 = vset.pattern.permute.xlu0 0
        %1051 = vperm.xlu0 %1050, %v709
        %v1052 = vpop.permute.xlu0 %1051
        %v1055 = vunpack.c.l.s4 839922192
        %v1056 = vunpack.c.0.s8 %v1055
        %v1057 = vlaneseq
        %v1058 = vshrl.u32 %v1057, 7
        %v1059 = vsub.s32 %v1056, %v1058
        %v1060 = vrot.slane %v1052, %v1059
        %1062 = vset.pattern.permute.xlu0 0
        %1063 = vperm.xlu0 %1062, %v710
        %v1064 = vpop.permute.xlu0 %1063
        %v1067 = vunpack.c.l.s4 839922192
        %v1068 = vunpack.c.0.s8 %v1067
        %v1069 = vlaneseq
        %v1070 = vshrl.u32 %v1069, 7
        %v1071 = vsub.s32 %v1068, %v1070
        %v1072 = vrot.slane %v1064, %v1071
        %1074 = vset.pattern.permute.xlu0 0
        %1075 = vperm.xlu0 %1074, %v711
        %v1076 = vpop.permute.xlu0 %1075
        %v1079 = vunpack.c.l.s4 839922192
        %v1080 = vunpack.c.0.s8 %v1079
        %v1081 = vlaneseq
        %v1082 = vshrl.u32 %v1081, 7
        %v1083 = vsub.s32 %v1080, %v1082
        %v1084 = vrot.slane %v1076, %v1083
        %1086 = vset.pattern.permute.xlu0 0
        %1087 = vperm.xlu0 %1086, %v712
        %v1088 = vpop.permute.xlu0 %1087
        %v1091 = vunpack.c.l.s4 839922192
        %v1092 = vunpack.c.0.s8 %v1091
        %v1093 = vlaneseq
        %v1094 = vshrl.u32 %v1093, 7
        %v1095 = vsub.s32 %v1092, %v1094
        %v1096 = vrot.slane %v1088, %v1095
        %v1097 = vld [vmem:[%s6] sm:$0xf]
        %v1098 = vld [vmem:[%s6 + $0x4] sm:$0xf]
        %v1099 = vld [vmem:[%s6 + $0x8] sm:$0xf]
        %v1100 = vld [vmem:[%s6 + $0xc] sm:$0xf]
        %v1101 = vld [vmem:[%s6 + $0x10] sm:$0xf]
        %v1102 = vld [vmem:[%s6 + $0x14] sm:$0xf]
        %v1103 = vld [vmem:[%s6 + $0x18] sm:$0xf]
        %v1104 = vld [vmem:[%s6 + $0x1c] sm:$0xf]
        %v1105 = vld [vmem:[%s6 + $0x20] sm:$0xf]
        %v1106 = vld [vmem:[%s6 + $0x24] sm:$0xf]
        %v1107 = vld [vmem:[%s6 + $0x28] sm:$0xf]
        %v1108 = vld [vmem:[%s6 + $0x2c] sm:$0xf]
        %v1109 = vld [vmem:[%s6 + $0x30] sm:$0xf]
        %v1110 = vld [vmem:[%s6 + $0x34] sm:$0xf]
        %v1111 = vld [vmem:[%s6 + $0x38] sm:$0xf]
        %v1112 = vld [vmem:[%s6 + $0x3c] sm:$0xf]
        %v1113 = vld [vmem:[%s6 + $0x40] sm:$0xf]
        %v1114 = vld [vmem:[%s6 + $0x44] sm:$0xf]
        %v1115 = vld [vmem:[%s6 + $0x48] sm:$0xf]
        %v1116 = vld [vmem:[%s6 + $0x4c] sm:$0xf]
        %v1117 = vld [vmem:[%s6 + $0x50] sm:$0xf]
        %v1118 = vld [vmem:[%s6 + $0x54] sm:$0xf]
        %v1119 = vld [vmem:[%s6 + $0x58] sm:$0xf]
        %v1120 = vld [vmem:[%s6 + $0x5c] sm:$0xf]
        %v1121 = vld [vmem:[%s6 + $0x60] sm:$0xf]
        %v1122 = vld [vmem:[%s6 + $0x64] sm:$0xf]
        %v1123 = vld [vmem:[%s6 + $0x68] sm:$0xf]
        %v1124 = vld [vmem:[%s6 + $0x6c] sm:$0xf]
        %v1125 = vld [vmem:[%s6 + $0x70] sm:$0xf]
        %v1126 = vld [vmem:[%s6 + $0x74] sm:$0xf]
        %v1127 = vld [vmem:[%s6 + $0x78] sm:$0xf]
        %v1128 = vld [vmem:[%s6 + $0x7c] sm:$0xf]
        %1130 = vset.pattern.permute.xlu0 0
        %1131 = vperm.xlu0 %1130, %v1097
        %v1132 = vpop.permute.xlu0 %1131
        %v1135 = vunpack.c.l.s4 839922192
        %v1136 = vunpack.c.0.s8 %v1135
        %v1137 = vlaneseq
        %v1138 = vshrl.u32 %v1137, 7
        %v1139 = vsub.s32 %v1136, %v1138
        %v1140 = vrot.slane %v1132, %v1139
        %1142 = vset.pattern.permute.xlu0 0
        %1143 = vperm.xlu0 %1142, %v1098
        %v1144 = vpop.permute.xlu0 %1143
        %v1147 = vunpack.c.l.s4 839922192
        %v1148 = vunpack.c.0.s8 %v1147
        %v1149 = vlaneseq
        %v1150 = vshrl.u32 %v1149, 7
        %v1151 = vsub.s32 %v1148, %v1150
        %v1152 = vrot.slane %v1144, %v1151
        %1154 = vset.pattern.permute.xlu0 0
        %1155 = vperm.xlu0 %1154, %v1099
        %v1156 = vpop.permute.xlu0 %1155
        %v1159 = vunpack.c.l.s4 839922192
        %v1160 = vunpack.c.0.s8 %v1159
        %v1161 = vlaneseq
        %v1162 = vshrl.u32 %v1161, 7
        %v1163 = vsub.s32 %v1160, %v1162
        %v1164 = vrot.slane %v1156, %v1163
        %1166 = vset.pattern.permute.xlu0 0
        %1167 = vperm.xlu0 %1166, %v1100
        %v1168 = vpop.permute.xlu0 %1167
        %v1171 = vunpack.c.l.s4 839922192
        %v1172 = vunpack.c.0.s8 %v1171
        %v1173 = vlaneseq
        %v1174 = vshrl.u32 %v1173, 7
        %v1175 = vsub.s32 %v1172, %v1174
        %v1176 = vrot.slane %v1168, %v1175
        %1178 = vset.pattern.permute.xlu0 0
        %1179 = vperm.xlu0 %1178, %v1101
        %v1180 = vpop.permute.xlu0 %1179
        %v1183 = vunpack.c.l.s4 839922192
        %v1184 = vunpack.c.0.s8 %v1183
        %v1185 = vlaneseq
        %v1186 = vshrl.u32 %v1185, 7
        %v1187 = vsub.s32 %v1184, %v1186
        %v1188 = vrot.slane %v1180, %v1187
        %1190 = vset.pattern.permute.xlu0 0
        %1191 = vperm.xlu0 %1190, %v1102
        %v1192 = vpop.permute.xlu0 %1191
        %v1195 = vunpack.c.l.s4 839922192
        %v1196 = vunpack.c.0.s8 %v1195
        %v1197 = vlaneseq
        %v1198 = vshrl.u32 %v1197, 7
        %v1199 = vsub.s32 %v1196, %v1198
        %v1200 = vrot.slane %v1192, %v1199
        %1202 = vset.pattern.permute.xlu0 0
        %1203 = vperm.xlu0 %1202, %v1103
        %v1204 = vpop.permute.xlu0 %1203
        %v1207 = vunpack.c.l.s4 839922192
        %v1208 = vunpack.c.0.s8 %v1207
        %v1209 = vlaneseq
        %v1210 = vshrl.u32 %v1209, 7
        %v1211 = vsub.s32 %v1208, %v1210
        %v1212 = vrot.slane %v1204, %v1211
        %1214 = vset.pattern.permute.xlu0 0
        %1215 = vperm.xlu0 %1214, %v1104
        %v1216 = vpop.permute.xlu0 %1215
        %v1219 = vunpack.c.l.s4 839922192
        %v1220 = vunpack.c.0.s8 %v1219
        %v1221 = vlaneseq
        %v1222 = vshrl.u32 %v1221, 7
        %v1223 = vsub.s32 %v1220, %v1222
        %v1224 = vrot.slane %v1216, %v1223
        %1226 = vset.pattern.permute.xlu0 0
        %1227 = vperm.xlu0 %1226, %v1105
        %v1228 = vpop.permute.xlu0 %1227
        %v1231 = vunpack.c.l.s4 839922192
        %v1232 = vunpack.c.0.s8 %v1231
        %v1233 = vlaneseq
        %v1234 = vshrl.u32 %v1233, 7
        %v1235 = vsub.s32 %v1232, %v1234
        %v1236 = vrot.slane %v1228, %v1235
        %1238 = vset.pattern.permute.xlu0 0
        %1239 = vperm.xlu0 %1238, %v1106
        %v1240 = vpop.permute.xlu0 %1239
        %v1243 = vunpack.c.l.s4 839922192
        %v1244 = vunpack.c.0.s8 %v1243
        %v1245 = vlaneseq
        %v1246 = vshrl.u32 %v1245, 7
        %v1247 = vsub.s32 %v1244, %v1246
        %v1248 = vrot.slane %v1240, %v1247
        %1250 = vset.pattern.permute.xlu0 0
        %1251 = vperm.xlu0 %1250, %v1107
        %v1252 = vpop.permute.xlu0 %1251
        %v1255 = vunpack.c.l.s4 839922192
        %v1256 = vunpack.c.0.s8 %v1255
        %v1257 = vlaneseq
        %v1258 = vshrl.u32 %v1257, 7
        %v1259 = vsub.s32 %v1256, %v1258
        %v1260 = vrot.slane %v1252, %v1259
        %1262 = vset.pattern.permute.xlu0 0
        %1263 = vperm.xlu0 %1262, %v1108
        %v1264 = vpop.permute.xlu0 %1263
        %v1267 = vunpack.c.l.s4 839922192
        %v1268 = vunpack.c.0.s8 %v1267
        %v1269 = vlaneseq
        %v1270 = vshrl.u32 %v1269, 7
        %v1271 = vsub.s32 %v1268, %v1270
        %v1272 = vrot.slane %v1264, %v1271
        %1274 = vset.pattern.permute.xlu0 0
        %1275 = vperm.xlu0 %1274, %v1109
        %v1276 = vpop.permute.xlu0 %1275
        %v1279 = vunpack.c.l.s4 839922192
        %v1280 = vunpack.c.0.s8 %v1279
        %v1281 = vlaneseq
        %v1282 = vshrl.u32 %v1281, 7
        %v1283 = vsub.s32 %v1280, %v1282
        %v1284 = vrot.slane %v1276, %v1283
        %1286 = vset.pattern.permute.xlu0 0
        %1287 = vperm.xlu0 %1286, %v1110
        %v1288 = vpop.permute.xlu0 %1287
        %v1291 = vunpack.c.l.s4 839922192
        %v1292 = vunpack.c.0.s8 %v1291
        %v1293 = vlaneseq
        %v1294 = vshrl.u32 %v1293, 7
        %v1295 = vsub.s32 %v1292, %v1294
        %v1296 = vrot.slane %v1288, %v1295
        %1298 = vset.pattern.permute.xlu0 0
        %1299 = vperm.xlu0 %1298, %v1111
        %v1300 = vpop.permute.xlu0 %1299
        %v1303 = vunpack.c.l.s4 839922192
        %v1304 = vunpack.c.0.s8 %v1303
        %v1305 = vlaneseq
        %v1306 = vshrl.u32 %v1305, 7
        %v1307 = vsub.s32 %v1304, %v1306
        %v1308 = vrot.slane %v1300, %v1307
        %1310 = vset.pattern.permute.xlu0 0
        %1311 = vperm.xlu0 %1310, %v1112
        %v1312 = vpop.permute.xlu0 %1311
        %v1315 = vunpack.c.l.s4 839922192
        %v1316 = vunpack.c.0.s8 %v1315
        %v1317 = vlaneseq
        %v1318 = vshrl.u32 %v1317, 7
        %v1319 = vsub.s32 %v1316, %v1318
        %v1320 = vrot.slane %v1312, %v1319
        %1322 = vset.pattern.permute.xlu0 0
        %1323 = vperm.xlu0 %1322, %v1113
        %v1324 = vpop.permute.xlu0 %1323
        %v1327 = vunpack.c.l.s4 839922192
        %v1328 = vunpack.c.0.s8 %v1327
        %v1329 = vlaneseq
        %v1330 = vshrl.u32 %v1329, 7
        %v1331 = vsub.s32 %v1328, %v1330
        %v1332 = vrot.slane %v1324, %v1331
        %1334 = vset.pattern.permute.xlu0 0
        %1335 = vperm.xlu0 %1334, %v1114
        %v1336 = vpop.permute.xlu0 %1335
        %v1339 = vunpack.c.l.s4 839922192
        %v1340 = vunpack.c.0.s8 %v1339
        %v1341 = vlaneseq
        %v1342 = vshrl.u32 %v1341, 7
        %v1343 = vsub.s32 %v1340, %v1342
        %v1344 = vrot.slane %v1336, %v1343
        %1346 = vset.pattern.permute.xlu0 0
        %1347 = vperm.xlu0 %1346, %v1115
        %v1348 = vpop.permute.xlu0 %1347
        %v1351 = vunpack.c.l.s4 839922192
        %v1352 = vunpack.c.0.s8 %v1351
        %v1353 = vlaneseq
        %v1354 = vshrl.u32 %v1353, 7
        %v1355 = vsub.s32 %v1352, %v1354
        %v1356 = vrot.slane %v1348, %v1355
        %1358 = vset.pattern.permute.xlu0 0
        %1359 = vperm.xlu0 %1358, %v1116
        %v1360 = vpop.permute.xlu0 %1359
        %v1363 = vunpack.c.l.s4 839922192
        %v1364 = vunpack.c.0.s8 %v1363
        %v1365 = vlaneseq
        %v1366 = vshrl.u32 %v1365, 7
        %v1367 = vsub.s32 %v1364, %v1366
        %v1368 = vrot.slane %v1360, %v1367
        %1370 = vset.pattern.permute.xlu0 0
        %1371 = vperm.xlu0 %1370, %v1117
        %v1372 = vpop.permute.xlu0 %1371
        %v1375 = vunpack.c.l.s4 839922192
        %v1376 = vunpack.c.0.s8 %v1375
        %v1377 = vlaneseq
        %v1378 = vshrl.u32 %v1377, 7
        %v1379 = vsub.s32 %v1376, %v1378
        %v1380 = vrot.slane %v1372, %v1379
        %1382 = vset.pattern.permute.xlu0 0
        %1383 = vperm.xlu0 %1382, %v1118
        %v1384 = vpop.permute.xlu0 %1383
        %v1387 = vunpack.c.l.s4 839922192
        %v1388 = vunpack.c.0.s8 %v1387
        %v1389 = vlaneseq
        %v1390 = vshrl.u32 %v1389, 7
        %v1391 = vsub.s32 %v1388, %v1390
        %v1392 = vrot.slane %v1384, %v1391
        %1394 = vset.pattern.permute.xlu0 0
        %1395 = vperm.xlu0 %1394, %v1119
        %v1396 = vpop.permute.xlu0 %1395
        %v1399 = vunpack.c.l.s4 839922192
        %v1400 = vunpack.c.0.s8 %v1399
        %v1401 = vlaneseq
        %v1402 = vshrl.u32 %v1401, 7
        %v1403 = vsub.s32 %v1400, %v1402
        %v1404 = vrot.slane %v1396, %v1403
        %1406 = vset.pattern.permute.xlu0 0
        %1407 = vperm.xlu0 %1406, %v1120
        %v1408 = vpop.permute.xlu0 %1407
        %v1411 = vunpack.c.l.s4 839922192
        %v1412 = vunpack.c.0.s8 %v1411
        %v1413 = vlaneseq
        %v1414 = vshrl.u32 %v1413, 7
        %v1415 = vsub.s32 %v1412, %v1414
        %v1416 = vrot.slane %v1408, %v1415
        %1418 = vset.pattern.permute.xlu0 0
        %1419 = vperm.xlu0 %1418, %v1121
        %v1420 = vpop.permute.xlu0 %1419
        %v1423 = vunpack.c.l.s4 839922192
        %v1424 = vunpack.c.0.s8 %v1423
        %v1425 = vlaneseq
        %v1426 = vshrl.u32 %v1425, 7
        %v1427 = vsub.s32 %v1424, %v1426
        %v1428 = vrot.slane %v1420, %v1427
        %1430 = vset.pattern.permute.xlu0 0
        %1431 = vperm.xlu0 %1430, %v1122
        %v1432 = vpop.permute.xlu0 %1431
        %v1435 = vunpack.c.l.s4 839922192
        %v1436 = vunpack.c.0.s8 %v1435
        %v1437 = vlaneseq
        %v1438 = vshrl.u32 %v1437, 7
        %v1439 = vsub.s32 %v1436, %v1438
        %v1440 = vrot.slane %v1432, %v1439
        %1442 = vset.pattern.permute.xlu0 0
        %1443 = vperm.xlu0 %1442, %v1123
        %v1444 = vpop.permute.xlu0 %1443
        %v1447 = vunpack.c.l.s4 839922192
        %v1448 = vunpack.c.0.s8 %v1447
        %v1449 = vlaneseq
        %v1450 = vshrl.u32 %v1449, 7
        %v1451 = vsub.s32 %v1448, %v1450
        %v1452 = vrot.slane %v1444, %v1451
        %1454 = vset.pattern.permute.xlu0 0
        %1455 = vperm.xlu0 %1454, %v1124
        %v1456 = vpop.permute.xlu0 %1455
        %v1459 = vunpack.c.l.s4 839922192
        %v1460 = vunpack.c.0.s8 %v1459
        %v1461 = vlaneseq
        %v1462 = vshrl.u32 %v1461, 7
        %v1463 = vsub.s32 %v1460, %v1462
        %v1464 = vrot.slane %v1456, %v1463
        %1466 = vset.pattern.permute.xlu0 0
        %1467 = vperm.xlu0 %1466, %v1125
        %v1468 = vpop.permute.xlu0 %1467
        %v1471 = vunpack.c.l.s4 839922192
        %v1472 = vunpack.c.0.s8 %v1471
        %v1473 = vlaneseq
        %v1474 = vshrl.u32 %v1473, 7
        %v1475 = vsub.s32 %v1472, %v1474
        %v1476 = vrot.slane %v1468, %v1475
        %1478 = vset.pattern.permute.xlu0 0
        %1479 = vperm.xlu0 %1478, %v1126
        %v1480 = vpop.permute.xlu0 %1479
        %v1483 = vunpack.c.l.s4 839922192
        %v1484 = vunpack.c.0.s8 %v1483
        %v1485 = vlaneseq
        %v1486 = vshrl.u32 %v1485, 7
        %v1487 = vsub.s32 %v1484, %v1486
        %v1488 = vrot.slane %v1480, %v1487
        %1490 = vset.pattern.permute.xlu0 0
        %1491 = vperm.xlu0 %1490, %v1127
        %v1492 = vpop.permute.xlu0 %1491
        %v1495 = vunpack.c.l.s4 839922192
        %v1496 = vunpack.c.0.s8 %v1495
        %v1497 = vlaneseq
        %v1498 = vshrl.u32 %v1497, 7
        %v1499 = vsub.s32 %v1496, %v1498
        %v1500 = vrot.slane %v1492, %v1499
        %1502 = vset.pattern.permute.xlu0 0
        %1503 = vperm.xlu0 %1502, %v1128
        %v1504 = vpop.permute.xlu0 %1503
        %v1507 = vunpack.c.l.s4 839922192
        %v1508 = vunpack.c.0.s8 %v1507
        %v1509 = vlaneseq
        %v1510 = vshrl.u32 %v1509, 7
        %v1511 = vsub.s32 %v1508, %v1510
        %v1512 = vrot.slane %v1504, %v1511
        %v1513 = vld [vmem:[#allocation2] sm:$0x80]
        %v1514 = vld [vmem:[#allocation2 + $0x8] sm:$0xff]
        %v1515 = vld [vmem:[#allocation2 + $0x10] sm:$0xff]
        %v1516 = vld [vmem:[#allocation2 + $0x18] sm:$0xff]
        %v1517 = vld [vmem:[#allocation2 + $0x20] sm:$0xff]
        %v1518 = vld [vmem:[#allocation2 + $0x28] sm:$0xff]
        %v1519 = vld [vmem:[#allocation2 + $0x30] sm:$0xff]
        %v1520 = vld [vmem:[#allocation2 + $0x38] sm:$0xff]
        %v1521 = vld [vmem:[#allocation2 + $0x40] sm:$0xff]
        %v1522 = vld [vmem:[#allocation2 + $0x48] sm:$0xff]
        %v1523 = vld [vmem:[#allocation2 + $0x50] sm:$0xff]
        %v1524 = vld [vmem:[#allocation2 + $0x58] sm:$0xff]
        %v1525 = vld [vmem:[#allocation2 + $0x60] sm:$0xff]
        %v1526 = vld [vmem:[#allocation2 + $0x68] sm:$0xff]
        %v1527 = vld [vmem:[#allocation2 + $0x70] sm:$0xff]
        %v1528 = vld [vmem:[#allocation2 + $0x78] sm:$0xff]
        %v1529 = vld [vmem:[#allocation2 + $0x80] sm:$0xff]
        %v1562 = vunpack.c.l.b16 %v724
        %v1563 = vunpack.c.l.b16 %v736
        %v1564 = vunpack.c.l.b16 %v748
        %v1565 = vunpack.c.l.b16 %v760
        %v1566 = vunpack.c.l.b16 %v772
        %v1567 = vunpack.c.l.b16 %v784
        %v1568 = vunpack.c.l.b16 %v796
        %v1569 = vunpack.c.l.b16 %v808
        %v1570 = vunpack.c.l.b16 %v820
        %v1571 = vunpack.c.l.b16 %v832
        %v1572 = vunpack.c.l.b16 %v844
        %v1573 = vunpack.c.l.b16 %v856
        %v1574 = vunpack.c.l.b16 %v868
        %v1575 = vunpack.c.l.b16 %v880
        %v1576 = vunpack.c.l.b16 %v892
        %v1577 = vunpack.c.l.b16 %v904
        %v1578 = vunpack.c.l.b16 %v916
        %v1579 = vunpack.c.l.b16 %v928
        %v1580 = vunpack.c.l.b16 %v940
        %v1581 = vunpack.c.l.b16 %v952
        %v1582 = vunpack.c.l.b16 %v964
        %v1583 = vunpack.c.l.b16 %v976
        %v1584 = vunpack.c.l.b16 %v988
        %v1585 = vunpack.c.l.b16 %v1000
        %v1586 = vunpack.c.l.b16 %v1012
        %v1587 = vunpack.c.l.b16 %v1024
        %v1588 = vunpack.c.l.b16 %v1036
        %v1589 = vunpack.c.l.b16 %v1048
        %v1590 = vunpack.c.l.b16 %v1060
        %v1591 = vunpack.c.l.b16 %v1072
        %v1592 = vunpack.c.l.b16 %v1084
        %v1593 = vunpack.c.l.b16 %v1096
        %v1594 = vpack.c.b16 %v1563, %v1562
        %v1595 = vpack.c.b16 %v1565, %v1564
        %v1596 = vpack.c.b16 %v1567, %v1566
        %v1597 = vpack.c.b16 %v1569, %v1568
        %v1598 = vpack.c.b16 %v1571, %v1570
        %v1599 = vpack.c.b16 %v1573, %v1572
        %v1600 = vpack.c.b16 %v1575, %v1574
        %v1601 = vpack.c.b16 %v1577, %v1576
        %v1602 = vpack.c.b16 %v1579, %v1578
        %v1603 = vpack.c.b16 %v1581, %v1580
        %v1604 = vpack.c.b16 %v1583, %v1582
        %v1605 = vpack.c.b16 %v1585, %v1584
        %v1606 = vpack.c.b16 %v1587, %v1586
        %v1607 = vpack.c.b16 %v1589, %v1588
        %v1608 = vpack.c.b16 %v1591, %v1590
        %v1609 = vpack.c.b16 %v1593, %v1592
        %vm1610 = vsmask.f32 7424
        %v1612 = vshll.u32 %v1594, 16
        %v1614 = vrot.slane %v1612, 1
        %v1615 = vshrl.u32 %v1594, 16
        %v1617 = vor.u32 %v1615, %v1614
        %v1619 = vshll.u32 %v1595, 16
        %v1621 = vrot.slane %v1619, 1
        %v1622 = vsel %vm1610, %v1617, %v1621
        %v1623 = vshrl.u32 %v1595, 16
        %v1625 = vor.u32 %v1623, %v1621
        %v1627 = vshll.u32 %v1596, 16
        %v1629 = vrot.slane %v1627, 1
        %v1630 = vsel %vm1610, %v1625, %v1629
        %v1631 = vshrl.u32 %v1596, 16
        %v1633 = vor.u32 %v1631, %v1629
        %v1635 = vshll.u32 %v1597, 16
        %v1637 = vrot.slane %v1635, 1
        %v1638 = vsel %vm1610, %v1633, %v1637
        %v1639 = vshrl.u32 %v1597, 16
        %v1641 = vor.u32 %v1639, %v1637
        %v1643 = vshll.u32 %v1598, 16
        %v1645 = vrot.slane %v1643, 1
        %v1646 = vsel %vm1610, %v1641, %v1645
        %v1647 = vshrl.u32 %v1598, 16
        %v1649 = vor.u32 %v1647, %v1645
        %v1651 = vshll.u32 %v1599, 16
        %v1653 = vrot.slane %v1651, 1
        %v1654 = vsel %vm1610, %v1649, %v1653
        %v1655 = vshrl.u32 %v1599, 16
        %v1657 = vor.u32 %v1655, %v1653
        %v1659 = vshll.u32 %v1600, 16
        %v1661 = vrot.slane %v1659, 1
        %v1662 = vsel %vm1610, %v1657, %v1661
        %v1663 = vshrl.u32 %v1600, 16
        %v1665 = vor.u32 %v1663, %v1661
        %v1667 = vshll.u32 %v1601, 16
        %v1669 = vrot.slane %v1667, 1
        %v1670 = vsel %vm1610, %v1665, %v1669
        %v1671 = vshrl.u32 %v1601, 16
        %v1673 = vor.u32 %v1671, %v1669
        %v1675 = vshll.u32 %v1602, 16
        %v1677 = vrot.slane %v1675, 1
        %v1678 = vsel %vm1610, %v1673, %v1677
        %v1679 = vshrl.u32 %v1602, 16
        %v1681 = vor.u32 %v1679, %v1677
        %v1683 = vshll.u32 %v1603, 16
        %v1685 = vrot.slane %v1683, 1
        %v1686 = vsel %vm1610, %v1681, %v1685
        %v1687 = vshrl.u32 %v1603, 16
        %v1689 = vor.u32 %v1687, %v1685
        %v1691 = vshll.u32 %v1604, 16
        %v1693 = vrot.slane %v1691, 1
        %v1694 = vsel %vm1610, %v1689, %v1693
        %v1695 = vshrl.u32 %v1604, 16
        %v1697 = vor.u32 %v1695, %v1693
        %v1699 = vshll.u32 %v1605, 16
        %v1701 = vrot.slane %v1699, 1
        %v1702 = vsel %vm1610, %v1697, %v1701
        %v1703 = vshrl.u32 %v1605, 16
        %v1705 = vor.u32 %v1703, %v1701
        %v1707 = vshll.u32 %v1606, 16
        %v1709 = vrot.slane %v1707, 1
        %v1710 = vsel %vm1610, %v1705, %v1709
        %v1711 = vshrl.u32 %v1606, 16
        %v1713 = vor.u32 %v1711, %v1709
        %v1715 = vshll.u32 %v1607, 16
        %v1717 = vrot.slane %v1715, 1
        %v1718 = vsel %vm1610, %v1713, %v1717
        %v1719 = vshrl.u32 %v1607, 16
        %v1721 = vor.u32 %v1719, %v1717
        %v1723 = vshll.u32 %v1608, 16
        %v1725 = vrot.slane %v1723, 1
        %v1726 = vsel %vm1610, %v1721, %v1725
        %v1727 = vshrl.u32 %v1608, 16
        %v1729 = vor.u32 %v1727, %v1725
        %v1731 = vshll.u32 %v1609, 16
        %v1733 = vrot.slane %v1731, 1
        %v1734 = vsel %vm1610, %v1729, %v1733
        %v1735 = vshrl.u32 %v1609, 16
        %v1737 = vor.u32 %v1735, %v1733
        %v1755 = vmul.bf16 %v1513, %v1614
        %v1756 = vmul.bf16 %v1514, %v1622
        %v1757 = vmul.bf16 %v1515, %v1630
        %v1758 = vmul.bf16 %v1516, %v1638
        %v1759 = vmul.bf16 %v1517, %v1646
        %v1760 = vmul.bf16 %v1518, %v1654
        %v1761 = vmul.bf16 %v1519, %v1662
        %v1762 = vmul.bf16 %v1520, %v1670
        %v1763 = vmul.bf16 %v1521, %v1678
        %v1764 = vmul.bf16 %v1522, %v1686
        %v1765 = vmul.bf16 %v1523, %v1694
        %v1766 = vmul.bf16 %v1524, %v1702
        %v1767 = vmul.bf16 %v1525, %v1710
        %v1768 = vmul.bf16 %v1526, %v1718
        %v1769 = vmul.bf16 %v1527, %v1726
        %v1770 = vmul.bf16 %v1528, %v1734
        %v1771 = vmul.bf16 %v1529, %v1737
        %vm1772 = vsmask.f32 256
        %v1774 = vshrl.u32 %v1755, 16
        %v1776 = vrot.slane %v1774, 7
        %v1778 = vshrl.u32 %v1756, 16
        %v1780 = vrot.slane %v1778, 7
        %v1781 = vshll.u32 %v1756, 16
        %v1783 = vor.u32 %v1780, %v1781
        %v1784 = vsel %vm1772, %v1776, %v1783
        %v1786 = vshrl.u32 %v1757, 16
        %v1788 = vrot.slane %v1786, 7
        %v1789 = vshll.u32 %v1757, 16
        %v1791 = vor.u32 %v1788, %v1789
        %v1792 = vsel %vm1772, %v1780, %v1791
        %v1794 = vshrl.u32 %v1758, 16
        %v1796 = vrot.slane %v1794, 7
        %v1797 = vshll.u32 %v1758, 16
        %v1799 = vor.u32 %v1796, %v1797
        %v1800 = vsel %vm1772, %v1788, %v1799
        %v1802 = vshrl.u32 %v1759, 16
        %v1804 = vrot.slane %v1802, 7
        %v1805 = vshll.u32 %v1759, 16
        %v1807 = vor.u32 %v1804, %v1805
        %v1808 = vsel %vm1772, %v1796, %v1807
        %v1810 = vshrl.u32 %v1760, 16
        %v1812 = vrot.slane %v1810, 7
        %v1813 = vshll.u32 %v1760, 16
        %v1815 = vor.u32 %v1812, %v1813
        %v1816 = vsel %vm1772, %v1804, %v1815
        %v1818 = vshrl.u32 %v1761, 16
        %v1820 = vrot.slane %v1818, 7
        %v1821 = vshll.u32 %v1761, 16
        %v1823 = vor.u32 %v1820, %v1821
        %v1824 = vsel %vm1772, %v1812, %v1823
        %v1826 = vshrl.u32 %v1762, 16
        %v1828 = vrot.slane %v1826, 7
        %v1829 = vshll.u32 %v1762, 16
        %v1831 = vor.u32 %v1828, %v1829
        %v1832 = vsel %vm1772, %v1820, %v1831
        %v1834 = vshrl.u32 %v1763, 16
        %v1836 = vrot.slane %v1834, 7
        %v1837 = vshll.u32 %v1763, 16
        %v1839 = vor.u32 %v1836, %v1837
        %v1840 = vsel %vm1772, %v1828, %v1839
        %v1842 = vshrl.u32 %v1764, 16
        %v1844 = vrot.slane %v1842, 7
        %v1845 = vshll.u32 %v1764, 16
        %v1847 = vor.u32 %v1844, %v1845
        %v1848 = vsel %vm1772, %v1836, %v1847
        %v1850 = vshrl.u32 %v1765, 16
        %v1852 = vrot.slane %v1850, 7
        %v1853 = vshll.u32 %v1765, 16
        %v1855 = vor.u32 %v1852, %v1853
        %v1856 = vsel %vm1772, %v1844, %v1855
        %v1858 = vshrl.u32 %v1766, 16
        %v1860 = vrot.slane %v1858, 7
        %v1861 = vshll.u32 %v1766, 16
        %v1863 = vor.u32 %v1860, %v1861
        %v1864 = vsel %vm1772, %v1852, %v1863
        %v1866 = vshrl.u32 %v1767, 16
        %v1868 = vrot.slane %v1866, 7
        %v1869 = vshll.u32 %v1767, 16
        %v1871 = vor.u32 %v1868, %v1869
        %v1872 = vsel %vm1772, %v1860, %v1871
        %v1874 = vshrl.u32 %v1768, 16
        %v1876 = vrot.slane %v1874, 7
        %v1877 = vshll.u32 %v1768, 16
        %v1879 = vor.u32 %v1876, %v1877
        %v1880 = vsel %vm1772, %v1868, %v1879
        %v1882 = vshrl.u32 %v1769, 16
        %v1884 = vrot.slane %v1882, 7
        %v1885 = vshll.u32 %v1769, 16
        %v1887 = vor.u32 %v1884, %v1885
        %v1888 = vsel %vm1772, %v1876, %v1887
        %v1890 = vshrl.u32 %v1770, 16
        %v1892 = vrot.slane %v1890, 7
        %v1893 = vshll.u32 %v1770, 16
        %v1895 = vor.u32 %v1892, %v1893
        %v1896 = vsel %vm1772, %v1884, %v1895
        %v1898 = vshrl.u32 %v1771, 16
        %v1900 = vrot.slane %v1898, 7
        %v1901 = vshll.u32 %v1771, 16
        %v1903 = vor.u32 %v1900, %v1901
        %v1904 = vsel %vm1772, %v1892, %v1903
        %1921 = vst.msk [vmem:[#allocation3] sm:$0xff] %vm660, %v1784
        %1922 = vst.msk [vmem:[#allocation3 + $0x8] sm:$0xff] %vm660, %v1792
        %1923 = vst.msk [vmem:[#allocation3 + $0x10] sm:$0xff] %vm660, %v1800
        %1924 = vst.msk [vmem:[#allocation3 + $0x18] sm:$0xff] %vm660, %v1808
        %1925 = vst.msk [vmem:[#allocation3 + $0x20] sm:$0xff] %vm660, %v1816
        %1926 = vst.msk [vmem:[#allocation3 + $0x28] sm:$0xff] %vm660, %v1824
        %1927 = vst.msk [vmem:[#allocation3 + $0x30] sm:$0xff] %vm660, %v1832
        %1928 = vst.msk [vmem:[#allocation3 + $0x38] sm:$0xff] %vm660, %v1840
        %1929 = vst.msk [vmem:[#allocation3 + $0x40] sm:$0xff] %vm660, %v1848
        %1930 = vst.msk [vmem:[#allocation3 + $0x48] sm:$0xff] %vm660, %v1856
        %1931 = vst.msk [vmem:[#allocation3 + $0x50] sm:$0xff] %vm660, %v1864
        %1932 = vst.msk [vmem:[#allocation3 + $0x58] sm:$0xff] %vm660, %v1872
        %1933 = vst.msk [vmem:[#allocation3 + $0x60] sm:$0xff] %vm660, %v1880
        %1934 = vst.msk [vmem:[#allocation3 + $0x68] sm:$0xff] %vm660, %v1888
        %1935 = vst.msk [vmem:[#allocation3 + $0x70] sm:$0xff] %vm660, %v1896
        %1936 = vst.msk [vmem:[#allocation3 + $0x78] sm:$0xff] %vm660, %v1904
        %v1937 = vld [vmem:[#allocation2 + $0x8] sm:$0xff]
        %v1938 = vld [vmem:[#allocation2 + $0x10] sm:$0xff]
        %v1939 = vld [vmem:[#allocation2 + $0x18] sm:$0xff]
        %v1940 = vld [vmem:[#allocation2 + $0x20] sm:$0xff]
        %v1941 = vld [vmem:[#allocation2 + $0x28] sm:$0xff]
        %v1942 = vld [vmem:[#allocation2 + $0x30] sm:$0xff]
        %v1943 = vld [vmem:[#allocation2 + $0x38] sm:$0xff]
        %v1944 = vld [vmem:[#allocation2 + $0x40] sm:$0xff]
        %v1945 = vld [vmem:[#allocation2 + $0x48] sm:$0xff]
        %v1946 = vld [vmem:[#allocation2 + $0x50] sm:$0xff]
        %v1947 = vld [vmem:[#allocation2 + $0x58] sm:$0xff]
        %v1948 = vld [vmem:[#allocation2 + $0x60] sm:$0xff]
        %v1949 = vld [vmem:[#allocation2 + $0x68] sm:$0xff]
        %v1950 = vld [vmem:[#allocation2 + $0x70] sm:$0xff]
        %v1951 = vld [vmem:[#allocation2 + $0x78] sm:$0xff]
        %v1952 = vld [vmem:[#allocation2 + $0x80] sm:$0xff]
        %1969 = vrot.lane.b32.xlu0 %v1937, 8
        %v1970 = vpop.permute.xlu0 %1969
        %1971 = vrot.lane.b32.xlu0 %v1938, 8
        %v1972 = vpop.permute.xlu0 %1971
        %1973 = vrot.lane.b32.xlu0 %v1939, 8
        %v1974 = vpop.permute.xlu0 %1973
        %1975 = vrot.lane.b32.xlu0 %v1940, 8
        %v1976 = vpop.permute.xlu0 %1975
        %1977 = vrot.lane.b32.xlu0 %v1941, 8
        %v1978 = vpop.permute.xlu0 %1977
        %1979 = vrot.lane.b32.xlu0 %v1942, 8
        %v1980 = vpop.permute.xlu0 %1979
        %1981 = vrot.lane.b32.xlu0 %v1943, 8
        %v1982 = vpop.permute.xlu0 %1981
        %1983 = vrot.lane.b32.xlu0 %v1944, 8
        %v1984 = vpop.permute.xlu0 %1983
        %1985 = vrot.lane.b32.xlu0 %v1945, 8
        %v1986 = vpop.permute.xlu0 %1985
        %1987 = vrot.lane.b32.xlu0 %v1946, 8
        %v1988 = vpop.permute.xlu0 %1987
        %1989 = vrot.lane.b32.xlu0 %v1947, 8
        %v1990 = vpop.permute.xlu0 %1989
        %1991 = vrot.lane.b32.xlu0 %v1948, 8
        %v1992 = vpop.permute.xlu0 %1991
        %1993 = vrot.lane.b32.xlu0 %v1949, 8
        %v1994 = vpop.permute.xlu0 %1993
        %1995 = vrot.lane.b32.xlu0 %v1950, 8
        %v1996 = vpop.permute.xlu0 %1995
        %1997 = vrot.lane.b32.xlu0 %v1951, 8
        %v1998 = vpop.permute.xlu0 %1997
        %1999 = vrot.lane.b32.xlu0 %v1952, 8
        %v2000 = vpop.permute.xlu0 %1999
        %vm2017 = vcmask 130112
        %2018 = vst.msk [vmem:[#allocation3] sm:$0xff] %vm2017, %v1970
        %2019 = vst.msk [vmem:[#allocation3 + $0x8] sm:$0xff] %vm2017, %v1972
        %2020 = vst.msk [vmem:[#allocation3 + $0x10] sm:$0xff] %vm2017, %v1974
        %2021 = vst.msk [vmem:[#allocation3 + $0x18] sm:$0xff] %vm2017, %v1976
        %2022 = vst.msk [vmem:[#allocation3 + $0x20] sm:$0xff] %vm2017, %v1978
        %2023 = vst.msk [vmem:[#allocation3 + $0x28] sm:$0xff] %vm2017, %v1980
        %2024 = vst.msk [vmem:[#allocation3 + $0x30] sm:$0xff] %vm2017, %v1982
        %2025 = vst.msk [vmem:[#allocation3 + $0x38] sm:$0xff] %vm2017, %v1984
        %2026 = vst.msk [vmem:[#allocation3 + $0x40] sm:$0xff] %vm2017, %v1986
        %2027 = vst.msk [vmem:[#allocation3 + $0x48] sm:$0xff] %vm2017, %v1988
        %2028 = vst.msk [vmem:[#allocation3 + $0x50] sm:$0xff] %vm2017, %v1990
        %2029 = vst.msk [vmem:[#allocation3 + $0x58] sm:$0xff] %vm2017, %v1992
        %2030 = vst.msk [vmem:[#allocation3 + $0x60] sm:$0xff] %vm2017, %v1994
        %2031 = vst.msk [vmem:[#allocation3 + $0x68] sm:$0xff] %vm2017, %v1996
        %2032 = vst.msk [vmem:[#allocation3 + $0x70] sm:$0xff] %vm2017, %v1998
        %2033 = vst.msk [vmem:[#allocation3 + $0x78] sm:$0xff] %vm2017, %v2000
        %v2034 = vld [vmem:[#allocation2 + $0x8] sm:$0xff]
        %v2035 = vld [vmem:[#allocation2 + $0x10] sm:$0xff]
        %v2036 = vld [vmem:[#allocation2 + $0x18] sm:$0xff]
        %v2037 = vld [vmem:[#allocation2 + $0x20] sm:$0xff]
        %v2038 = vld [vmem:[#allocation2 + $0x28] sm:$0xff]
        %v2039 = vld [vmem:[#allocation2 + $0x30] sm:$0xff]
        %v2040 = vld [vmem:[#allocation2 + $0x38] sm:$0xff]
        %v2041 = vld [vmem:[#allocation2 + $0x40] sm:$0xff]
        %v2042 = vld [vmem:[#allocation2 + $0x48] sm:$0xff]
        %v2043 = vld [vmem:[#allocation2 + $0x50] sm:$0xff]
        %v2044 = vld [vmem:[#allocation2 + $0x58] sm:$0xff]
        %v2045 = vld [vmem:[#allocation2 + $0x60] sm:$0xff]
        %v2046 = vld [vmem:[#allocation2 + $0x68] sm:$0xff]
        %v2047 = vld [vmem:[#allocation2 + $0x70] sm:$0xff]
        %v2048 = vld [vmem:[#allocation2 + $0x78] sm:$0xff]
        %v2049 = vld [vmem:[#allocation2 + $0x80] sm:$0xff]
        %v2050 = vld [vmem:[#allocation2 + $0x88] sm:$0x1]
        %v2083 = vunpack.c.l.b16 %v1140
        %v2084 = vunpack.c.l.b16 %v1152
        %v2085 = vunpack.c.l.b16 %v1164
        %v2086 = vunpack.c.l.b16 %v1176
        %v2087 = vunpack.c.l.b16 %v1188
        %v2088 = vunpack.c.l.b16 %v1200
        %v2089 = vunpack.c.l.b16 %v1212
        %v2090 = vunpack.c.l.b16 %v1224
        %v2091 = vunpack.c.l.b16 %v1236
        %v2092 = vunpack.c.l.b16 %v1248
        %v2093 = vunpack.c.l.b16 %v1260
        %v2094 = vunpack.c.l.b16 %v1272
        %v2095 = vunpack.c.l.b16 %v1284
        %v2096 = vunpack.c.l.b16 %v1296
        %v2097 = vunpack.c.l.b16 %v1308
        %v2098 = vunpack.c.l.b16 %v1320
        %v2099 = vunpack.c.l.b16 %v1332
        %v2100 = vunpack.c.l.b16 %v1344
        %v2101 = vunpack.c.l.b16 %v1356
        %v2102 = vunpack.c.l.b16 %v1368
        %v2103 = vunpack.c.l.b16 %v1380
        %v2104 = vunpack.c.l.b16 %v1392
        %v2105 = vunpack.c.l.b16 %v1404
        %v2106 = vunpack.c.l.b16 %v1416
        %v2107 = vunpack.c.l.b16 %v1428
        %v2108 = vunpack.c.l.b16 %v1440
        %v2109 = vunpack.c.l.b16 %v1452
        %v2110 = vunpack.c.l.b16 %v1464
        %v2111 = vunpack.c.l.b16 %v1476
        %v2112 = vunpack.c.l.b16 %v1488
        %v2113 = vunpack.c.l.b16 %v1500
        %v2114 = vunpack.c.l.b16 %v1512
        %v2115 = vpack.c.b16 %v2084, %v2083
        %v2116 = vpack.c.b16 %v2086, %v2085
        %v2117 = vpack.c.b16 %v2088, %v2087
        %v2118 = vpack.c.b16 %v2090, %v2089
        %v2119 = vpack.c.b16 %v2092, %v2091
        %v2120 = vpack.c.b16 %v2094, %v2093
        %v2121 = vpack.c.b16 %v2096, %v2095
        %v2122 = vpack.c.b16 %v2098, %v2097
        %v2123 = vpack.c.b16 %v2100, %v2099
        %v2124 = vpack.c.b16 %v2102, %v2101
        %v2125 = vpack.c.b16 %v2104, %v2103
        %v2126 = vpack.c.b16 %v2106, %v2105
        %v2127 = vpack.c.b16 %v2108, %v2107
        %v2128 = vpack.c.b16 %v2110, %v2109
        %v2129 = vpack.c.b16 %v2112, %v2111
        %v2130 = vpack.c.b16 %v2114, %v2113
        %v2132 = vshrl.u32 %v2115, 16
        %v2134 = vrot.slane %v2132, 7
        %v2135 = vshll.u32 %v2115, 16
        %v2137 = vor.u32 %v2134, %v2135
        %v2139 = vshrl.u32 %v2116, 16
        %v2141 = vrot.slane %v2139, 7
        %v2142 = vshll.u32 %v2116, 16
        %v2144 = vor.u32 %v2141, %v2142
        %v2145 = vsel %vm1772, %v2134, %v2144
        %v2147 = vshrl.u32 %v2117, 16
        %v2149 = vrot.slane %v2147, 7
        %v2150 = vshll.u32 %v2117, 16
        %v2152 = vor.u32 %v2149, %v2150
        %v2153 = vsel %vm1772, %v2141, %v2152
        %v2155 = vshrl.u32 %v2118, 16
        %v2157 = vrot.slane %v2155, 7
        %v2158 = vshll.u32 %v2118, 16
        %v2160 = vor.u32 %v2157, %v2158
        %v2161 = vsel %vm1772, %v2149, %v2160
        %v2163 = vshrl.u32 %v2119, 16
        %v2165 = vrot.slane %v2163, 7
        %v2166 = vshll.u32 %v2119, 16
        %v2168 = vor.u32 %v2165, %v2166
        %v2169 = vsel %vm1772, %v2157, %v2168
        %v2171 = vshrl.u32 %v2120, 16
        %v2173 = vrot.slane %v2171, 7
        %v2174 = vshll.u32 %v2120, 16
        %v2176 = vor.u32 %v2173, %v2174
        %v2177 = vsel %vm1772, %v2165, %v2176
        %v2179 = vshrl.u32 %v2121, 16
        %v2181 = vrot.slane %v2179, 7
        %v2182 = vshll.u32 %v2121, 16
        %v2184 = vor.u32 %v2181, %v2182
        %v2185 = vsel %vm1772, %v2173, %v2184
        %v2187 = vshrl.u32 %v2122, 16
        %v2189 = vrot.slane %v2187, 7
        %v2190 = vshll.u32 %v2122, 16
        %v2192 = vor.u32 %v2189, %v2190
        %v2193 = vsel %vm1772, %v2181, %v2192
        %v2195 = vshrl.u32 %v2123, 16
        %v2197 = vrot.slane %v2195, 7
        %v2198 = vshll.u32 %v2123, 16
        %v2200 = vor.u32 %v2197, %v2198
        %v2201 = vsel %vm1772, %v2189, %v2200
        %v2203 = vshrl.u32 %v2124, 16
        %v2205 = vrot.slane %v2203, 7
        %v2206 = vshll.u32 %v2124, 16
        %v2208 = vor.u32 %v2205, %v2206
        %v2209 = vsel %vm1772, %v2197, %v2208
        %v2211 = vshrl.u32 %v2125, 16
        %v2213 = vrot.slane %v2211, 7
        %v2214 = vshll.u32 %v2125, 16
        %v2216 = vor.u32 %v2213, %v2214
        %v2217 = vsel %vm1772, %v2205, %v2216
        %v2219 = vshrl.u32 %v2126, 16
        %v2221 = vrot.slane %v2219, 7
        %v2222 = vshll.u32 %v2126, 16
        %v2224 = vor.u32 %v2221, %v2222
        %v2225 = vsel %vm1772, %v2213, %v2224
        %v2227 = vshrl.u32 %v2127, 16
        %v2229 = vrot.slane %v2227, 7
        %v2230 = vshll.u32 %v2127, 16
        %v2232 = vor.u32 %v2229, %v2230
        %v2233 = vsel %vm1772, %v2221, %v2232
        %v2235 = vshrl.u32 %v2128, 16
        %v2237 = vrot.slane %v2235, 7
        %v2238 = vshll.u32 %v2128, 16
        %v2240 = vor.u32 %v2237, %v2238
        %v2241 = vsel %vm1772, %v2229, %v2240
        %v2243 = vshrl.u32 %v2129, 16
        %v2245 = vrot.slane %v2243, 7
        %v2246 = vshll.u32 %v2129, 16
        %v2248 = vor.u32 %v2245, %v2246
        %v2249 = vsel %vm1772, %v2237, %v2248
        %v2251 = vshrl.u32 %v2130, 16
        %v2253 = vrot.slane %v2251, 7
        %v2254 = vshll.u32 %v2130, 16
        %v2256 = vor.u32 %v2253, %v2254
        %v2257 = vsel %vm1772, %v2245, %v2256
        %v2275 = vmul.bf16 %v2034, %v2137
        %v2276 = vmul.bf16 %v2035, %v2145
        %v2277 = vmul.bf16 %v2036, %v2153
        %v2278 = vmul.bf16 %v2037, %v2161
        %v2279 = vmul.bf16 %v2038, %v2169
        %v2280 = vmul.bf16 %v2039, %v2177
        %v2281 = vmul.bf16 %v2040, %v2185
        %v2282 = vmul.bf16 %v2041, %v2193
        %v2283 = vmul.bf16 %v2042, %v2201
        %v2284 = vmul.bf16 %v2043, %v2209
        %v2285 = vmul.bf16 %v2044, %v2217
        %v2286 = vmul.bf16 %v2045, %v2225
        %v2287 = vmul.bf16 %v2046, %v2233
        %v2288 = vmul.bf16 %v2047, %v2241
        %v2289 = vmul.bf16 %v2048, %v2249
        %v2290 = vmul.bf16 %v2049, %v2257
        %v2291 = vmul.bf16 %v2050, %v2253
        %v2293 = vshrl.u32 %v2275, 16
        %v2295 = vshll.u32 %v2275, 16
        %v2297 = vrot.slane %v2295, 1
        %v2298 = vor.u32 %v2293, %v2297
        %v2300 = vshll.u32 %v2276, 16
        %v2302 = vrot.slane %v2300, 1
        %v2303 = vsel %vm1610, %v2298, %v2302
        %v2304 = vshrl.u32 %v2276, 16
        %v2306 = vor.u32 %v2304, %v2302
        %v2308 = vshll.u32 %v2277, 16
        %v2310 = vrot.slane %v2308, 1
        %v2311 = vsel %vm1610, %v2306, %v2310
        %v2312 = vshrl.u32 %v2277, 16
        %v2314 = vor.u32 %v2312, %v2310
        %v2316 = vshll.u32 %v2278, 16
        %v2318 = vrot.slane %v2316, 1
        %v2319 = vsel %vm1610, %v2314, %v2318
        %v2320 = vshrl.u32 %v2278, 16
        %v2322 = vor.u32 %v2320, %v2318
        %v2324 = vshll.u32 %v2279, 16
        %v2326 = vrot.slane %v2324, 1
        %v2327 = vsel %vm1610, %v2322, %v2326
        %v2328 = vshrl.u32 %v2279, 16
        %v2330 = vor.u32 %v2328, %v2326
        %v2332 = vshll.u32 %v2280, 16
        %v2334 = vrot.slane %v2332, 1
        %v2335 = vsel %vm1610, %v2330, %v2334
        %v2336 = vshrl.u32 %v2280, 16
        %v2338 = vor.u32 %v2336, %v2334
        %v2340 = vshll.u32 %v2281, 16
        %v2342 = vrot.slane %v2340, 1
        %v2343 = vsel %vm1610, %v2338, %v2342
        %v2344 = vshrl.u32 %v2281, 16
        %v2346 = vor.u32 %v2344, %v2342
        %v2348 = vshll.u32 %v2282, 16
        %v2350 = vrot.slane %v2348, 1
        %v2351 = vsel %vm1610, %v2346, %v2350
        %v2352 = vshrl.u32 %v2282, 16
        %v2354 = vor.u32 %v2352, %v2350
        %v2356 = vshll.u32 %v2283, 16
        %v2358 = vrot.slane %v2356, 1
        %v2359 = vsel %vm1610, %v2354, %v2358
        %v2360 = vshrl.u32 %v2283, 16
        %v2362 = vor.u32 %v2360, %v2358
        %v2364 = vshll.u32 %v2284, 16
        %v2366 = vrot.slane %v2364, 1
        %v2367 = vsel %vm1610, %v2362, %v2366
        %v2368 = vshrl.u32 %v2284, 16
        %v2370 = vor.u32 %v2368, %v2366
        %v2372 = vshll.u32 %v2285, 16
        %v2374 = vrot.slane %v2372, 1
        %v2375 = vsel %vm1610, %v2370, %v2374
        %v2376 = vshrl.u32 %v2285, 16
        %v2378 = vor.u32 %v2376, %v2374
        %v2380 = vshll.u32 %v2286, 16
        %v2382 = vrot.slane %v2380, 1
        %v2383 = vsel %vm1610, %v2378, %v2382
        %v2384 = vshrl.u32 %v2286, 16
        %v2386 = vor.u32 %v2384, %v2382
        %v2388 = vshll.u32 %v2287, 16
        %v2390 = vrot.slane %v2388, 1
        %v2391 = vsel %vm1610, %v2386, %v2390
        %v2392 = vshrl.u32 %v2287, 16
        %v2394 = vor.u32 %v2392, %v2390
        %v2396 = vshll.u32 %v2288, 16
        %v2398 = vrot.slane %v2396, 1
        %v2399 = vsel %vm1610, %v2394, %v2398
        %v2400 = vshrl.u32 %v2288, 16
        %v2402 = vor.u32 %v2400, %v2398
        %v2404 = vshll.u32 %v2289, 16
        %v2406 = vrot.slane %v2404, 1
        %v2407 = vsel %vm1610, %v2402, %v2406
        %v2408 = vshrl.u32 %v2289, 16
        %v2410 = vor.u32 %v2408, %v2406
        %v2412 = vshll.u32 %v2290, 16
        %v2414 = vrot.slane %v2412, 1
        %v2415 = vsel %vm1610, %v2410, %v2414
        %v2416 = vshrl.u32 %v2290, 16
        %v2418 = vor.u32 %v2416, %v2414
        %v2420 = vshll.u32 %v2291, 16
        %v2422 = vrot.slane %v2420, 1
        %v2423 = vsel %vm1610, %v2418, %v2422
        %2424 = vrot.lane.b32.xlu0 %v2303, 16
        %v2425 = vpop.permute.xlu0 %2424
        %2426 = vrot.lane.b32.xlu0 %v2311, 16
        %v2427 = vpop.permute.xlu0 %2426
        %2428 = vrot.lane.b32.xlu0 %v2319, 16
        %v2429 = vpop.permute.xlu0 %2428
        %2430 = vrot.lane.b32.xlu0 %v2327, 16
        %v2431 = vpop.permute.xlu0 %2430
        %2432 = vrot.lane.b32.xlu0 %v2335, 16
        %v2433 = vpop.permute.xlu0 %2432
        %2434 = vrot.lane.b32.xlu0 %v2343, 16
        %v2435 = vpop.permute.xlu0 %2434
        %2436 = vrot.lane.b32.xlu0 %v2351, 16
        %v2437 = vpop.permute.xlu0 %2436
        %2438 = vrot.lane.b32.xlu0 %v2359, 16
        %v2439 = vpop.permute.xlu0 %2438
        %2440 = vrot.lane.b32.xlu0 %v2367, 16
        %v2441 = vpop.permute.xlu0 %2440
        %2442 = vrot.lane.b32.xlu0 %v2375, 16
        %v2443 = vpop.permute.xlu0 %2442
        %2444 = vrot.lane.b32.xlu0 %v2383, 16
        %v2445 = vpop.permute.xlu0 %2444
        %2446 = vrot.lane.b32.xlu0 %v2391, 16
        %v2447 = vpop.permute.xlu0 %2446
        %2448 = vrot.lane.b32.xlu0 %v2399, 16
        %v2449 = vpop.permute.xlu0 %2448
        %2450 = vrot.lane.b32.xlu0 %v2407, 16
        %v2451 = vpop.permute.xlu0 %2450
        %2452 = vrot.lane.b32.xlu0 %v2415, 16
        %v2453 = vpop.permute.xlu0 %2452
        %2454 = vrot.lane.b32.xlu0 %v2423, 16
        %v2455 = vpop.permute.xlu0 %2454
        %vm2472 = vcmask 195712
        %2473 = vst.msk [vmem:[#allocation3] sm:$0xff] %vm2472, %v2425
        %2474 = vst.msk [vmem:[#allocation3 + $0x8] sm:$0xff] %vm2472, %v2427
        %2475 = vst.msk [vmem:[#allocation3 + $0x10] sm:$0xff] %vm2472, %v2429
        %2476 = vst.msk [vmem:[#allocation3 + $0x18] sm:$0xff] %vm2472, %v2431
        %2477 = vst.msk [vmem:[#allocation3 + $0x20] sm:$0xff] %vm2472, %v2433
        %2478 = vst.msk [vmem:[#allocation3 + $0x28] sm:$0xff] %vm2472, %v2435
        %2479 = vst.msk [vmem:[#allocation3 + $0x30] sm:$0xff] %vm2472, %v2437
        %2480 = vst.msk [vmem:[#allocation3 + $0x38] sm:$0xff] %vm2472, %v2439
        %2481 = vst.msk [vmem:[#allocation3 + $0x40] sm:$0xff] %vm2472, %v2441
        %2482 = vst.msk [vmem:[#allocation3 + $0x48] sm:$0xff] %vm2472, %v2443
        %2483 = vst.msk [vmem:[#allocation3 + $0x50] sm:$0xff] %vm2472, %v2445
        %2484 = vst.msk [vmem:[#allocation3 + $0x58] sm:$0xff] %vm2472, %v2447
        %2485 = vst.msk [vmem:[#allocation3 + $0x60] sm:$0xff] %vm2472, %v2449
        %2486 = vst.msk [vmem:[#allocation3 + $0x68] sm:$0xff] %vm2472, %v2451
        %2487 = vst.msk [vmem:[#allocation3 + $0x70] sm:$0xff] %vm2472, %v2453
        %2488 = vst.msk [vmem:[#allocation3 + $0x78] sm:$0xff] %vm2472, %v2455
        %v2489 = vld [vmem:[#allocation2 + $0x8] sm:$0x80]
        %v2490 = vld [vmem:[#allocation2 + $0x10] sm:$0xff]
        %v2491 = vld [vmem:[#allocation2 + $0x18] sm:$0xff]
        %v2492 = vld [vmem:[#allocation2 + $0x20] sm:$0xff]
        %v2493 = vld [vmem:[#allocation2 + $0x28] sm:$0xff]
        %v2494 = vld [vmem:[#allocation2 + $0x30] sm:$0xff]
        %v2495 = vld [vmem:[#allocation2 + $0x38] sm:$0xff]
        %v2496 = vld [vmem:[#allocation2 + $0x40] sm:$0xff]
        %v2497 = vld [vmem:[#allocation2 + $0x48] sm:$0xff]
        %v2498 = vld [vmem:[#allocation2 + $0x50] sm:$0xff]
        %v2499 = vld [vmem:[#allocation2 + $0x58] sm:$0xff]
        %v2500 = vld [vmem:[#allocation2 + $0x60] sm:$0xff]
        %v2501 = vld [vmem:[#allocation2 + $0x68] sm:$0xff]
        %v2502 = vld [vmem:[#allocation2 + $0x70] sm:$0xff]
        %v2503 = vld [vmem:[#allocation2 + $0x78] sm:$0xff]
        %v2504 = vld [vmem:[#allocation2 + $0x80] sm:$0xff]
        %v2505 = vld [vmem:[#allocation2 + $0x88] sm:$0xff]
        %v2506 = vmul.bf16 %v2489, %v1614
        %v2507 = vmul.bf16 %v2490, %v1622
        %v2508 = vmul.bf16 %v2491, %v1630
        %v2509 = vmul.bf16 %v2492, %v1638
        %v2510 = vmul.bf16 %v2493, %v1646
        %v2511 = vmul.bf16 %v2494, %v1654
        %v2512 = vmul.bf16 %v2495, %v1662
        %v2513 = vmul.bf16 %v2496, %v1670
        %v2514 = vmul.bf16 %v2497, %v1678
        %v2515 = vmul.bf16 %v2498, %v1686
        %v2516 = vmul.bf16 %v2499, %v1694
        %v2517 = vmul.bf16 %v2500, %v1702
        %v2518 = vmul.bf16 %v2501, %v1710
        %v2519 = vmul.bf16 %v2502, %v1718
        %v2520 = vmul.bf16 %v2503, %v1726
        %v2521 = vmul.bf16 %v2504, %v1734
        %v2522 = vmul.bf16 %v2505, %v1737
        %v2524 = vshrl.u32 %v2506, 16
        %v2526 = vrot.slane %v2524, 7
        %v2528 = vshrl.u32 %v2507, 16
        %v2530 = vrot.slane %v2528, 7
        %v2531 = vshll.u32 %v2507, 16
        %v2533 = vor.u32 %v2530, %v2531
        %v2534 = vsel %vm1772, %v2526, %v2533
        %v2536 = vshrl.u32 %v2508, 16
        %v2538 = vrot.slane %v2536, 7
        %v2539 = vshll.u32 %v2508, 16
        %v2541 = vor.u32 %v2538, %v2539
        %v2542 = vsel %vm1772, %v2530, %v2541
        %v2544 = vshrl.u32 %v2509, 16
        %v2546 = vrot.slane %v2544, 7
        %v2547 = vshll.u32 %v2509, 16
        %v2549 = vor.u32 %v2546, %v2547
        %v2550 = vsel %vm1772, %v2538, %v2549
        %v2552 = vshrl.u32 %v2510, 16
        %v2554 = vrot.slane %v2552, 7
        %v2555 = vshll.u32 %v2510, 16
        %v2557 = vor.u32 %v2554, %v2555
        %v2558 = vsel %vm1772, %v2546, %v2557
        %v2560 = vshrl.u32 %v2511, 16
        %v2562 = vrot.slane %v2560, 7
        %v2563 = vshll.u32 %v2511, 16
        %v2565 = vor.u32 %v2562, %v2563
        %v2566 = vsel %vm1772, %v2554, %v2565
        %v2568 = vshrl.u32 %v2512, 16
        %v2570 = vrot.slane %v2568, 7
        %v2571 = vshll.u32 %v2512, 16
        %v2573 = vor.u32 %v2570, %v2571
        %v2574 = vsel %vm1772, %v2562, %v2573
        %v2576 = vshrl.u32 %v2513, 16
        %v2578 = vrot.slane %v2576, 7
        %v2579 = vshll.u32 %v2513, 16
        %v2581 = vor.u32 %v2578, %v2579
        %v2582 = vsel %vm1772, %v2570, %v2581
        %v2584 = vshrl.u32 %v2514, 16
        %v2586 = vrot.slane %v2584, 7
        %v2587 = vshll.u32 %v2514, 16
        %v2589 = vor.u32 %v2586, %v2587
        %v2590 = vsel %vm1772, %v2578, %v2589
        %v2592 = vshrl.u32 %v2515, 16
        %v2594 = vrot.slane %v2592, 7
        %v2595 = vshll.u32 %v2515, 16
        %v2597 = vor.u32 %v2594, %v2595
        %v2598 = vsel %vm1772, %v2586, %v2597
        %v2600 = vshrl.u32 %v2516, 16
        %v2602 = vrot.slane %v2600, 7
        %v2603 = vshll.u32 %v2516, 16
        %v2605 = vor.u32 %v2602, %v2603
        %v2606 = vsel %vm1772, %v2594, %v2605
        %v2608 = vshrl.u32 %v2517, 16
        %v2610 = vrot.slane %v2608, 7
        %v2611 = vshll.u32 %v2517, 16
        %v2613 = vor.u32 %v2610, %v2611
        %v2614 = vsel %vm1772, %v2602, %v2613
        %v2616 = vshrl.u32 %v2518, 16
        %v2618 = vrot.slane %v2616, 7
        %v2619 = vshll.u32 %v2518, 16
        %v2621 = vor.u32 %v2618, %v2619
        %v2622 = vsel %vm1772, %v2610, %v2621
        %v2624 = vshrl.u32 %v2519, 16
        %v2626 = vrot.slane %v2624, 7
        %v2627 = vshll.u32 %v2519, 16
        %v2629 = vor.u32 %v2626, %v2627
        %v2630 = vsel %vm1772, %v2618, %v2629
        %v2632 = vshrl.u32 %v2520, 16
        %v2634 = vrot.slane %v2632, 7
        %v2635 = vshll.u32 %v2520, 16
        %v2637 = vor.u32 %v2634, %v2635
        %v2638 = vsel %vm1772, %v2626, %v2637
        %v2640 = vshrl.u32 %v2521, 16
        %v2642 = vrot.slane %v2640, 7
        %v2643 = vshll.u32 %v2521, 16
        %v2645 = vor.u32 %v2642, %v2643
        %v2646 = vsel %vm1772, %v2634, %v2645
        %v2648 = vshrl.u32 %v2522, 16
        %v2650 = vrot.slane %v2648, 7
        %v2651 = vshll.u32 %v2522, 16
        %v2653 = vor.u32 %v2650, %v2651
        %v2654 = vsel %vm1772, %v2642, %v2653
        %2655 = vrot.lane.b32.xlu0 %v2534, 24
        %v2656 = vpop.permute.xlu0 %2655
        %2657 = vrot.lane.b32.xlu0 %v2542, 24
        %v2658 = vpop.permute.xlu0 %2657
        %2659 = vrot.lane.b32.xlu0 %v2550, 24
        %v2660 = vpop.permute.xlu0 %2659
        %2661 = vrot.lane.b32.xlu0 %v2558, 24
        %v2662 = vpop.permute.xlu0 %2661
        %2663 = vrot.lane.b32.xlu0 %v2566, 24
        %v2664 = vpop.permute.xlu0 %2663
        %2665 = vrot.lane.b32.xlu0 %v2574, 24
        %v2666 = vpop.permute.xlu0 %2665
        %2667 = vrot.lane.b32.xlu0 %v2582, 24
        %v2668 = vpop.permute.xlu0 %2667
        %2669 = vrot.lane.b32.xlu0 %v2590, 24
        %v2670 = vpop.permute.xlu0 %2669
        %2671 = vrot.lane.b32.xlu0 %v2598, 24
        %v2672 = vpop.permute.xlu0 %2671
        %2673 = vrot.lane.b32.xlu0 %v2606, 24
        %v2674 = vpop.permute.xlu0 %2673
        %2675 = vrot.lane.b32.xlu0 %v2614, 24
        %v2676 = vpop.permute.xlu0 %2675
        %2677 = vrot.lane.b32.xlu0 %v2622, 24
        %v2678 = vpop.permute.xlu0 %2677
        %2679 = vrot.lane.b32.xlu0 %v2630, 24
        %v2680 = vpop.permute.xlu0 %2679
        %2681 = vrot.lane.b32.xlu0 %v2638, 24
        %v2682 = vpop.permute.xlu0 %2681
        %2683 = vrot.lane.b32.xlu0 %v2646, 24
        %v2684 = vpop.permute.xlu0 %2683
        %2685 = vrot.lane.b32.xlu0 %v2654, 24
        %v2686 = vpop.permute.xlu0 %2685
        %vm2703 = vcmask 261312
        %2704 = vst.msk [vmem:[#allocation3] sm:$0xff] %vm2703, %v2656
        %2705 = vst.msk [vmem:[#allocation3 + $0x8] sm:$0xff] %vm2703, %v2658
        %2706 = vst.msk [vmem:[#allocation3 + $0x10] sm:$0xff] %vm2703, %v2660
        %2707 = vst.msk [vmem:[#allocation3 + $0x18] sm:$0xff] %vm2703, %v2662
        %2708 = vst.msk [vmem:[#allocation3 + $0x20] sm:$0xff] %vm2703, %v2664
        %2709 = vst.msk [vmem:[#allocation3 + $0x28] sm:$0xff] %vm2703, %v2666
        %2710 = vst.msk [vmem:[#allocation3 + $0x30] sm:$0xff] %vm2703, %v2668
        %2711 = vst.msk [vmem:[#allocation3 + $0x38] sm:$0xff] %vm2703, %v2670
        %2712 = vst.msk [vmem:[#allocation3 + $0x40] sm:$0xff] %vm2703, %v2672
        %2713 = vst.msk [vmem:[#allocation3 + $0x48] sm:$0xff] %vm2703, %v2674
        %2714 = vst.msk [vmem:[#allocation3 + $0x50] sm:$0xff] %vm2703, %v2676
        %2715 = vst.msk [vmem:[#allocation3 + $0x58] sm:$0xff] %vm2703, %v2678
        %2716 = vst.msk [vmem:[#allocation3 + $0x60] sm:$0xff] %vm2703, %v2680
        %2717 = vst.msk [vmem:[#allocation3 + $0x68] sm:$0xff] %vm2703, %v2682
        %2718 = vst.msk [vmem:[#allocation3 + $0x70] sm:$0xff] %vm2703, %v2684
        %2719 = vst.msk [vmem:[#allocation3 + $0x78] sm:$0xff] %vm2703, %v2686
        %v2720 = vld [vmem:[#allocation2 + $0x10] sm:$0xff]
        %v2721 = vld [vmem:[#allocation2 + $0x18] sm:$0xff]
        %v2722 = vld [vmem:[#allocation2 + $0x20] sm:$0xff]
        %v2723 = vld [vmem:[#allocation2 + $0x28] sm:$0xff]
        %v2724 = vld [vmem:[#allocation2 + $0x30] sm:$0xff]
        %v2725 = vld [vmem:[#allocation2 + $0x38] sm:$0xff]
        %v2726 = vld [vmem:[#allocation2 + $0x40] sm:$0xff]
        %v2727 = vld [vmem:[#allocation2 + $0x48] sm:$0xff]
        %v2728 = vld [vmem:[#allocation2 + $0x50] sm:$0xff]
        %v2729 = vld [vmem:[#allocation2 + $0x58] sm:$0xff]
        %v2730 = vld [vmem:[#allocation2 + $0x60] sm:$0xff]
        %v2731 = vld [vmem:[#allocation2 + $0x68] sm:$0xff]
        %v2732 = vld [vmem:[#allocation2 + $0x70] sm:$0xff]
        %v2733 = vld [vmem:[#allocation2 + $0x78] sm:$0xff]
        %v2734 = vld [vmem:[#allocation2 + $0x80] sm:$0xff]
        %v2735 = vld [vmem:[#allocation2 + $0x88] sm:$0xff]
        %2752 = vrot.lane.b32.xlu0 %v2720, 32
        %v2753 = vpop.permute.xlu0 %2752
        %2754 = vrot.lane.b32.xlu0 %v2721, 32
        %v2755 = vpop.permute.xlu0 %2754
        %2756 = vrot.lane.b32.xlu0 %v2722, 32
        %v2757 = vpop.permute.xlu0 %2756
        %2758 = vrot.lane.b32.xlu0 %v2723, 32
        %v2759 = vpop.permute.xlu0 %2758
        %2760 = vrot.lane.b32.xlu0 %v2724, 32
        %v2761 = vpop.permute.xlu0 %2760
        %2762 = vrot.lane.b32.xlu0 %v2725, 32
        %v2763 = vpop.permute.xlu0 %2762
        %2764 = vrot.lane.b32.xlu0 %v2726, 32
        %v2765 = vpop.permute.xlu0 %2764
        %2766 = vrot.lane.b32.xlu0 %v2727, 32
        %v2767 = vpop.permute.xlu0 %2766
        %2768 = vrot.lane.b32.xlu0 %v2728, 32
        %v2769 = vpop.permute.xlu0 %2768
        %2770 = vrot.lane.b32.xlu0 %v2729, 32
        %v2771 = vpop.permute.xlu0 %2770
        %2772 = vrot.lane.b32.xlu0 %v2730, 32
        %v2773 = vpop.permute.xlu0 %2772
        %2774 = vrot.lane.b32.xlu0 %v2731, 32
        %v2775 = vpop.permute.xlu0 %2774
        %2776 = vrot.lane.b32.xlu0 %v2732, 32
        %v2777 = vpop.permute.xlu0 %2776
        %2778 = vrot.lane.b32.xlu0 %v2733, 32
        %v2779 = vpop.permute.xlu0 %2778
        %2780 = vrot.lane.b32.xlu0 %v2734, 32
        %v2781 = vpop.permute.xlu0 %2780
        %2782 = vrot.lane.b32.xlu0 %v2735, 32
        %v2783 = vpop.permute.xlu0 %2782
        %vm2800 = vcmask 326912
        %2801 = vst.msk [vmem:[#allocation3] sm:$0xff] %vm2800, %v2753
        %2802 = vst.msk [vmem:[#allocation3 + $0x8] sm:$0xff] %vm2800, %v2755
        %2803 = vst.msk [vmem:[#allocation3 + $0x10] sm:$0xff] %vm2800, %v2757
        %2804 = vst.msk [vmem:[#allocation3 + $0x18] sm:$0xff] %vm2800, %v2759
        %2805 = vst.msk [vmem:[#allocation3 + $0x20] sm:$0xff] %vm2800, %v2761
        %2806 = vst.msk [vmem:[#allocation3 + $0x28] sm:$0xff] %vm2800, %v2763
        %2807 = vst.msk [vmem:[#allocation3 + $0x30] sm:$0xff] %vm2800, %v2765
        %2808 = vst.msk [vmem:[#allocation3 + $0x38] sm:$0xff] %vm2800, %v2767
        %2809 = vst.msk [vmem:[#allocation3 + $0x40] sm:$0xff] %vm2800, %v2769
        %2810 = vst.msk [vmem:[#allocation3 + $0x48] sm:$0xff] %vm2800, %v2771
        %2811 = vst.msk [vmem:[#allocation3 + $0x50] sm:$0xff] %vm2800, %v2773
        %2812 = vst.msk [vmem:[#allocation3 + $0x58] sm:$0xff] %vm2800, %v2775
        %2813 = vst.msk [vmem:[#allocation3 + $0x60] sm:$0xff] %vm2800, %v2777
        %2814 = vst.msk [vmem:[#allocation3 + $0x68] sm:$0xff] %vm2800, %v2779
        %2815 = vst.msk [vmem:[#allocation3 + $0x70] sm:$0xff] %vm2800, %v2781
        %2816 = vst.msk [vmem:[#allocation3 + $0x78] sm:$0xff] %vm2800, %v2783
        %v2817 = vld [vmem:[#allocation2 + $0x10] sm:$0xff]
        %v2818 = vld [vmem:[#allocation2 + $0x18] sm:$0xff]
        %v2819 = vld [vmem:[#allocation2 + $0x20] sm:$0xff]
        %v2820 = vld [vmem:[#allocation2 + $0x28] sm:$0xff]
        %v2821 = vld [vmem:[#allocation2 + $0x30] sm:$0xff]
        %v2822 = vld [vmem:[#allocation2 + $0x38] sm:$0xff]
        %v2823 = vld [vmem:[#allocation2 + $0x40] sm:$0xff]
        %v2824 = vld [vmem:[#allocation2 + $0x48] sm:$0xff]
        %v2825 = vld [vmem:[#allocation2 + $0x50] sm:$0xff]
        %v2826 = vld [vmem:[#allocation2 + $0x58] sm:$0xff]
        %v2827 = vld [vmem:[#allocation2 + $0x60] sm:$0xff]
        %v2828 = vld [vmem:[#allocation2 + $0x68] sm:$0xff]
        %v2829 = vld [vmem:[#allocation2 + $0x70] sm:$0xff]
        %v2830 = vld [vmem:[#allocation2 + $0x78] sm:$0xff]
        %v2831 = vld [vmem:[#allocation2 + $0x80] sm:$0xff]
        %v2832 = vld [vmem:[#allocation2 + $0x88] sm:$0xff]
        %v2833 = vld [vmem:[#allocation2 + $0x90] sm:$0x1]
        %v2834 = vmul.bf16 %v2817, %v2137
        %v2835 = vmul.bf16 %v2818, %v2145
        %v2836 = vmul.bf16 %v2819, %v2153
        %v2837 = vmul.bf16 %v2820, %v2161
        %v2838 = vmul.bf16 %v2821, %v2169
        %v2839 = vmul.bf16 %v2822, %v2177
        %v2840 = vmul.bf16 %v2823, %v2185
        %v2841 = vmul.bf16 %v2824, %v2193
        %v2842 = vmul.bf16 %v2825, %v2201
        %v2843 = vmul.bf16 %v2826, %v2209
        %v2844 = vmul.bf16 %v2827, %v2217
        %v2845 = vmul.bf16 %v2828, %v2225
        %v2846 = vmul.bf16 %v2829, %v2233
        %v2847 = vmul.bf16 %v2830, %v2241
        %v2848 = vmul.bf16 %v2831, %v2249
        %v2849 = vmul.bf16 %v2832, %v2257
        %v2850 = vmul.bf16 %v2833, %v2253
        %v2852 = vshrl.u32 %v2834, 16
        %v2854 = vshll.u32 %v2834, 16
        %v2856 = vrot.slane %v2854, 1
        %v2857 = vor.u32 %v2852, %v2856
        %v2859 = vshll.u32 %v2835, 16
        %v2861 = vrot.slane %v2859, 1
        %v2862 = vsel %vm1610, %v2857, %v2861
        %v2863 = vshrl.u32 %v2835, 16
        %v2865 = vor.u32 %v2863, %v2861
        %v2867 = vshll.u32 %v2836, 16
        %v2869 = vrot.slane %v2867, 1
        %v2870 = vsel %vm1610, %v2865, %v2869
        %v2871 = vshrl.u32 %v2836, 16
        %v2873 = vor.u32 %v2871, %v2869
        %v2875 = vshll.u32 %v2837, 16
        %v2877 = vrot.slane %v2875, 1
        %v2878 = vsel %vm1610, %v2873, %v2877
        %v2879 = vshrl.u32 %v2837, 16
        %v2881 = vor.u32 %v2879, %v2877
        %v2883 = vshll.u32 %v2838, 16
        %v2885 = vrot.slane %v2883, 1
        %v2886 = vsel %vm1610, %v2881, %v2885
        %v2887 = vshrl.u32 %v2838, 16
        %v2889 = vor.u32 %v2887, %v2885
        %v2891 = vshll.u32 %v2839, 16
        %v2893 = vrot.slane %v2891, 1
        %v2894 = vsel %vm1610, %v2889, %v2893
        %v2895 = vshrl.u32 %v2839, 16
        %v2897 = vor.u32 %v2895, %v2893
        %v2899 = vshll.u32 %v2840, 16
        %v2901 = vrot.slane %v2899, 1
        %v2902 = vsel %vm1610, %v2897, %v2901
        %v2903 = vshrl.u32 %v2840, 16
        %v2905 = vor.u32 %v2903, %v2901
        %v2907 = vshll.u32 %v2841, 16
        %v2909 = vrot.slane %v2907, 1
        %v2910 = vsel %vm1610, %v2905, %v2909
        %v2911 = vshrl.u32 %v2841, 16
        %v2913 = vor.u32 %v2911, %v2909
        %v2915 = vshll.u32 %v2842, 16
        %v2917 = vrot.slane %v2915, 1
        %v2918 = vsel %vm1610, %v2913, %v2917
        %v2919 = vshrl.u32 %v2842, 16
        %v2921 = vor.u32 %v2919, %v2917
        %v2923 = vshll.u32 %v2843, 16
        %v2925 = vrot.slane %v2923, 1
        %v2926 = vsel %vm1610, %v2921, %v2925
        %v2927 = vshrl.u32 %v2843, 16
        %v2929 = vor.u32 %v2927, %v2925
        %v2931 = vshll.u32 %v2844, 16
        %v2933 = vrot.slane %v2931, 1
        %v2934 = vsel %vm1610, %v2929, %v2933
        %v2935 = vshrl.u32 %v2844, 16
        %v2937 = vor.u32 %v2935, %v2933
        %v2939 = vshll.u32 %v2845, 16
        %v2941 = vrot.slane %v2939, 1
        %v2942 = vsel %vm1610, %v2937, %v2941
        %v2943 = vshrl.u32 %v2845, 16
        %v2945 = vor.u32 %v2943, %v2941
        %v2947 = vshll.u32 %v2846, 16
        %v2949 = vrot.slane %v2947, 1
        %v2950 = vsel %vm1610, %v2945, %v2949
        %v2951 = vshrl.u32 %v2846, 16
        %v2953 = vor.u32 %v2951, %v2949
        %v2955 = vshll.u32 %v2847, 16
        %v2957 = vrot.slane %v2955, 1
        %v2958 = vsel %vm1610, %v2953, %v2957
        %v2959 = vshrl.u32 %v2847, 16
        %v2961 = vor.u32 %v2959, %v2957
        %v2963 = vshll.u32 %v2848, 16
        %v2965 = vrot.slane %v2963, 1
        %v2966 = vsel %vm1610, %v2961, %v2965
        %v2967 = vshrl.u32 %v2848, 16
        %v2969 = vor.u32 %v2967, %v2965
        %v2971 = vshll.u32 %v2849, 16
        %v2973 = vrot.slane %v2971, 1
        %v2974 = vsel %vm1610, %v2969, %v2973
        %v2975 = vshrl.u32 %v2849, 16
        %v2977 = vor.u32 %v2975, %v2973
        %v2979 = vshll.u32 %v2850, 16
        %v2981 = vrot.slane %v2979, 1
        %v2982 = vsel %vm1610, %v2977, %v2981
        %2983 = vrot.lane.b32.xlu0 %v2862, 40
        %v2984 = vpop.permute.xlu0 %2983
        %2985 = vrot.lane.b32.xlu0 %v2870, 40
        %v2986 = vpop.permute.xlu0 %2985
        %2987 = vrot.lane.b32.xlu0 %v2878, 40
        %v2988 = vpop.permute.xlu0 %2987
        %2989 = vrot.lane.b32.xlu0 %v2886, 40
        %v2990 = vpop.permute.xlu0 %2989
        %2991 = vrot.lane.b32.xlu0 %v2894, 40
        %v2992 = vpop.permute.xlu0 %2991
        %2993 = vrot.lane.b32.xlu0 %v2902, 40
        %v2994 = vpop.permute.xlu0 %2993
        %2995 = vrot.lane.b32.xlu0 %v2910, 40
        %v2996 = vpop.permute.xlu0 %2995
        %2997 = vrot.lane.b32.xlu0 %v2918, 40
        %v2998 = vpop.permute.xlu0 %2997
        %2999 = vrot.lane.b32.xlu0 %v2926, 40
        %v3000 = vpop.permute.xlu0 %2999
        %3001 = vrot.lane.b32.xlu0 %v2934, 40
        %v3002 = vpop.permute.xlu0 %3001
        %3003 = vrot.lane.b32.xlu0 %v2942, 40
        %v3004 = vpop.permute.xlu0 %3003
        %3005 = vrot.lane.b32.xlu0 %v2950, 40
        %v3006 = vpop.permute.xlu0 %3005
        %3007 = vrot.lane.b32.xlu0 %v2958, 40
        %v3008 = vpop.permute.xlu0 %3007
        %3009 = vrot.lane.b32.xlu0 %v2966, 40
        %v3010 = vpop.permute.xlu0 %3009
        %3011 = vrot.lane.b32.xlu0 %v2974, 40
        %v3012 = vpop.permute.xlu0 %3011
        %3013 = vrot.lane.b32.xlu0 %v2982, 40
        %v3014 = vpop.permute.xlu0 %3013
        %vm3031 = vcmask 392512
        %3032 = vst.msk [vmem:[#allocation3] sm:$0xff] %vm3031, %v2984
        %3033 = vst.msk [vmem:[#allocation3 + $0x8] sm:$0xff] %vm3031, %v2986
        %3034 = vst.msk [vmem:[#allocation3 + $0x10] sm:$0xff] %vm3031, %v2988
        %3035 = vst.msk [vmem:[#allocation3 + $0x18] sm:$0xff] %vm3031, %v2990
        %3036 = vst.msk [vmem:[#allocation3 + $0x20] sm:$0xff] %vm3031, %v2992
        %3037 = vst.msk [vmem:[#allocation3 + $0x28] sm:$0xff] %vm3031, %v2994
        %3038 = vst.msk [vmem:[#allocation3 + $0x30] sm:$0xff] %vm3031, %v2996
        %3039 = vst.msk [vmem:[#allocation3 + $0x38] sm:$0xff] %vm3031, %v2998
        %3040 = vst.msk [vmem:[#allocation3 + $0x40] sm:$0xff] %vm3031, %v3000
        %3041 = vst.msk [vmem:[#allocation3 + $0x48] sm:$0xff] %vm3031, %v3002
        %3042 = vst.msk [vmem:[#allocation3 + $0x50] sm:$0xff] %vm3031, %v3004
        %3043 = vst.msk [vmem:[#allocation3 + $0x58] sm:$0xff] %vm3031, %v3006
        %3044 = vst.msk [vmem:[#allocation3 + $0x60] sm:$0xff] %vm3031, %v3008
        %3045 = vst.msk [vmem:[#allocation3 + $0x68] sm:$0xff] %vm3031, %v3010
        %3046 = vst.msk [vmem:[#allocation3 + $0x70] sm:$0xff] %vm3031, %v3012
        %3047 = vst.msk [vmem:[#allocation3 + $0x78] sm:$0xff] %vm3031, %v3014
        %v3048 = vld [vmem:[#allocation2 + $0x10] sm:$0x80]
        %v3049 = vld [vmem:[#allocation2 + $0x18] sm:$0xff]
        %v3050 = vld [vmem:[#allocation2 + $0x20] sm:$0xff]
        %v3051 = vld [vmem:[#allocation2 + $0x28] sm:$0xff]
        %v3052 = vld [vmem:[#allocation2 + $0x30] sm:$0xff]
        %v3053 = vld [vmem:[#allocation2 + $0x38] sm:$0xff]
        %v3054 = vld [vmem:[#allocation2 + $0x40] sm:$0xff]
        %v3055 = vld [vmem:[#allocation2 + $0x48] sm:$0xff]
        %v3056 = vld [vmem:[#allocation2 + $0x50] sm:$0xff]
        %v3057 = vld [vmem:[#allocation2 + $0x58] sm:$0xff]
        %v3058 = vld [vmem:[#allocation2 + $0x60] sm:$0xff]
        %v3059 = vld [vmem:[#allocation2 + $0x68] sm:$0xff]
        %v3060 = vld [vmem:[#allocation2 + $0x70] sm:$0xff]
        %v3061 = vld [vmem:[#allocation2 + $0x78] sm:$0xff]
        %v3062 = vld [vmem:[#allocation2 + $0x80] sm:$0xff]
        %v3063 = vld [vmem:[#allocation2 + $0x88] sm:$0xff]
        %v3064 = vld [vmem:[#allocation2 + $0x90] sm:$0xff]
        %v3065 = vmul.bf16 %v3048, %v1614
        %v3066 = vmul.bf16 %v3049, %v1622
        %v3067 = vmul.bf16 %v3050, %v1630
        %v3068 = vmul.bf16 %v3051, %v1638
        %v3069 = vmul.bf16 %v3052, %v1646
        %v3070 = vmul.bf16 %v3053, %v1654
        %v3071 = vmul.bf16 %v3054, %v1662
        %v3072 = vmul.bf16 %v3055, %v1670
        %v3073 = vmul.bf16 %v3056, %v1678
        %v3074 = vmul.bf16 %v3057, %v1686
        %v3075 = vmul.bf16 %v3058, %v1694
        %v3076 = vmul.bf16 %v3059, %v1702
        %v3077 = vmul.bf16 %v3060, %v1710
        %v3078 = vmul.bf16 %v3061, %v1718
        %v3079 = vmul.bf16 %v3062, %v1726
        %v3080 = vmul.bf16 %v3063, %v1734
        %v3081 = vmul.bf16 %v3064, %v1737
        %v3083 = vshrl.u32 %v3065, 16
        %v3085 = vrot.slane %v3083, 7
        %v3087 = vshrl.u32 %v3066, 16
        %v3089 = vrot.slane %v3087, 7
        %v3090 = vshll.u32 %v3066, 16
        %v3092 = vor.u32 %v3089, %v3090
        %v3093 = vsel %vm1772, %v3085, %v3092
        %v3095 = vshrl.u32 %v3067, 16
        %v3097 = vrot.slane %v3095, 7
        %v3098 = vshll.u32 %v3067, 16
        %v3100 = vor.u32 %v3097, %v3098
        %v3101 = vsel %vm1772, %v3089, %v3100
        %v3103 = vshrl.u32 %v3068, 16
        %v3105 = vrot.slane %v3103, 7
        %v3106 = vshll.u32 %v3068, 16
        %v3108 = vor.u32 %v3105, %v3106
        %v3109 = vsel %vm1772, %v3097, %v3108
        %v3111 = vshrl.u32 %v3069, 16
        %v3113 = vrot.slane %v3111, 7
        %v3114 = vshll.u32 %v3069, 16
        %v3116 = vor.u32 %v3113, %v3114
        %v3117 = vsel %vm1772, %v3105, %v3116
        %v3119 = vshrl.u32 %v3070, 16
        %v3121 = vrot.slane %v3119, 7
        %v3122 = vshll.u32 %v3070, 16
        %v3124 = vor.u32 %v3121, %v3122
        %v3125 = vsel %vm1772, %v3113, %v3124
        %v3127 = vshrl.u32 %v3071, 16
        %v3129 = vrot.slane %v3127, 7
        %v3130 = vshll.u32 %v3071, 16
        %v3132 = vor.u32 %v3129, %v3130
        %v3133 = vsel %vm1772, %v3121, %v3132
        %v3135 = vshrl.u32 %v3072, 16
        %v3137 = vrot.slane %v3135, 7
        %v3138 = vshll.u32 %v3072, 16
        %v3140 = vor.u32 %v3137, %v3138
        %v3141 = vsel %vm1772, %v3129, %v3140
        %v3143 = vshrl.u32 %v3073, 16
        %v3145 = vrot.slane %v3143, 7
        %v3146 = vshll.u32 %v3073, 16
        %v3148 = vor.u32 %v3145, %v3146
        %v3149 = vsel %vm1772, %v3137, %v3148
        %v3151 = vshrl.u32 %v3074, 16
        %v3153 = vrot.slane %v3151, 7
        %v3154 = vshll.u32 %v3074, 16
        %v3156 = vor.u32 %v3153, %v3154
        %v3157 = vsel %vm1772, %v3145, %v3156
        %v3159 = vshrl.u32 %v3075, 16
        %v3161 = vrot.slane %v3159, 7
        %v3162 = vshll.u32 %v3075, 16
        %v3164 = vor.u32 %v3161, %v3162
        %v3165 = vsel %vm1772, %v3153, %v3164
        %v3167 = vshrl.u32 %v3076, 16
        %v3169 = vrot.slane %v3167, 7
        %v3170 = vshll.u32 %v3076, 16
        %v3172 = vor.u32 %v3169, %v3170
        %v3173 = vsel %vm1772, %v3161, %v3172
        %v3175 = vshrl.u32 %v3077, 16
        %v3177 = vrot.slane %v3175, 7
        %v3178 = vshll.u32 %v3077, 16
        %v3180 = vor.u32 %v3177, %v3178
        %v3181 = vsel %vm1772, %v3169, %v3180
        %v3183 = vshrl.u32 %v3078, 16
        %v3185 = vrot.slane %v3183, 7
        %v3186 = vshll.u32 %v3078, 16
        %v3188 = vor.u32 %v3185, %v3186
        %v3189 = vsel %vm1772, %v3177, %v3188
        %v3191 = vshrl.u32 %v3079, 16
        %v3193 = vrot.slane %v3191, 7
        %v3194 = vshll.u32 %v3079, 16
        %v3196 = vor.u32 %v3193, %v3194
        %v3197 = vsel %vm1772, %v3185, %v3196
        %v3199 = vshrl.u32 %v3080, 16
        %v3201 = vrot.slane %v3199, 7
        %v3202 = vshll.u32 %v3080, 16
        %v3204 = vor.u32 %v3201, %v3202
        %v3205 = vsel %vm1772, %v3193, %v3204
        %v3207 = vshrl.u32 %v3081, 16
        %v3209 = vrot.slane %v3207, 7
        %v3210 = vshll.u32 %v3081, 16
        %v3212 = vor.u32 %v3209, %v3210
        %v3213 = vsel %vm1772, %v3201, %v3212
        %3214 = vrot.lane.b32.xlu0 %v3093, 48
        %v3215 = vpop.permute.xlu0 %3214
        %3216 = vrot.lane.b32.xlu0 %v3101, 48
        %v3217 = vpop.permute.xlu0 %3216
        %3218 = vrot.lane.b32.xlu0 %v3109, 48
        %v3219 = vpop.permute.xlu0 %3218
        %3220 = vrot.lane.b32.xlu0 %v3117, 48
        %v3221 = vpop.permute.xlu0 %3220
        %3222 = vrot.lane.b32.xlu0 %v3125, 48
        %v3223 = vpop.permute.xlu0 %3222
        %3224 = vrot.lane.b32.xlu0 %v3133, 48
        %v3225 = vpop.permute.xlu0 %3224
        %3226 = vrot.lane.b32.xlu0 %v3141, 48
        %v3227 = vpop.permute.xlu0 %3226
        %3228 = vrot.lane.b32.xlu0 %v3149, 48
        %v3229 = vpop.permute.xlu0 %3228
        %3230 = vrot.lane.b32.xlu0 %v3157, 48
        %v3231 = vpop.permute.xlu0 %3230
        %3232 = vrot.lane.b32.xlu0 %v3165, 48
        %v3233 = vpop.permute.xlu0 %3232
        %3234 = vrot.lane.b32.xlu0 %v3173, 48
        %v3235 = vpop.permute.xlu0 %3234
        %3236 = vrot.lane.b32.xlu0 %v3181, 48
        %v3237 = vpop.permute.xlu0 %3236
        %3238 = vrot.lane.b32.xlu0 %v3189, 48
        %v3239 = vpop.permute.xlu0 %3238
        %3240 = vrot.lane.b32.xlu0 %v3197, 48
        %v3241 = vpop.permute.xlu0 %3240
        %3242 = vrot.lane.b32.xlu0 %v3205, 48
        %v3243 = vpop.permute.xlu0 %3242
        %3244 = vrot.lane.b32.xlu0 %v3213, 48
        %v3245 = vpop.permute.xlu0 %3244
        %vm3262 = vcmask 458112
        %3263 = vst.msk [vmem:[#allocation3] sm:$0xff] %vm3262, %v3215
        %3264 = vst.msk [vmem:[#allocation3 + $0x8] sm:$0xff] %vm3262, %v3217
        %3265 = vst.msk [vmem:[#allocation3 + $0x10] sm:$0xff] %vm3262, %v3219
        %3266 = vst.msk [vmem:[#allocation3 + $0x18] sm:$0xff] %vm3262, %v3221
        %3267 = vst.msk [vmem:[#allocation3 + $0x20] sm:$0xff] %vm3262, %v3223
        %3268 = vst.msk [vmem:[#allocation3 + $0x28] sm:$0xff] %vm3262, %v3225
        %3269 = vst.msk [vmem:[#allocation3 + $0x30] sm:$0xff] %vm3262, %v3227
        %3270 = vst.msk [vmem:[#allocation3 + $0x38] sm:$0xff] %vm3262, %v3229
        %3271 = vst.msk [vmem:[#allocation3 + $0x40] sm:$0xff] %vm3262, %v3231
        %3272 = vst.msk [vmem:[#allocation3 + $0x48] sm:$0xff] %vm3262, %v3233
        %3273 = vst.msk [vmem:[#allocation3 + $0x50] sm:$0xff] %vm3262, %v3235
        %3274 = vst.msk [vmem:[#allocation3 + $0x58] sm:$0xff] %vm3262, %v3237
        %3275 = vst.msk [vmem:[#allocation3 + $0x60] sm:$0xff] %vm3262, %v3239
        %3276 = vst.msk [vmem:[#allocation3 + $0x68] sm:$0xff] %vm3262, %v3241
        %3277 = vst.msk [vmem:[#allocation3 + $0x70] sm:$0xff] %vm3262, %v3243
        %3278 = vst.msk [vmem:[#allocation3 + $0x78] sm:$0xff] %vm3262, %v3245
        %v3279 = vld [vmem:[#allocation2 + $0x18] sm:$0xff]
        %v3280 = vld [vmem:[#allocation2 + $0x20] sm:$0xff]
        %v3281 = vld [vmem:[#allocation2 + $0x28] sm:$0xff]
        %v3282 = vld [vmem:[#allocation2 + $0x30] sm:$0xff]
        %v3283 = vld [vmem:[#allocation2 + $0x38] sm:$0xff]
        %v3284 = vld [vmem:[#allocation2 + $0x40] sm:$0xff]
        %v3285 = vld [vmem:[#allocation2 + $0x48] sm:$0xff]
        %v3286 = vld [vmem:[#allocation2 + $0x50] sm:$0xff]
        %v3287 = vld [vmem:[#allocation2 + $0x58] sm:$0xff]
        %v3288 = vld [vmem:[#allocation2 + $0x60] sm:$0xff]
        %v3289 = vld [vmem:[#allocation2 + $0x68] sm:$0xff]
        %v3290 = vld [vmem:[#allocation2 + $0x70] sm:$0xff]
        %v3291 = vld [vmem:[#allocation2 + $0x78] sm:$0xff]
        %v3292 = vld [vmem:[#allocation2 + $0x80] sm:$0xff]
        %v3293 = vld [vmem:[#allocation2 + $0x88] sm:$0xff]
        %v3294 = vld [vmem:[#allocation2 + $0x90] sm:$0xff]
        %3311 = vrot.lane.b32.xlu0 %v3279, 56
        %v3312 = vpop.permute.xlu0 %3311
        %3313 = vrot.lane.b32.xlu0 %v3280, 56
        %v3314 = vpop.permute.xlu0 %3313
        %3315 = vrot.lane.b32.xlu0 %v3281, 56
        %v3316 = vpop.permute.xlu0 %3315
        %3317 = vrot.lane.b32.xlu0 %v3282, 56
        %v3318 = vpop.permute.xlu0 %3317
        %3319 = vrot.lane.b32.xlu0 %v3283, 56
        %v3320 = vpop.permute.xlu0 %3319
        %3321 = vrot.lane.b32.xlu0 %v3284, 56
        %v3322 = vpop.permute.xlu0 %3321
        %3323 = vrot.lane.b32.xlu0 %v3285, 56
        %v3324 = vpop.permute.xlu0 %3323
        %3325 = vrot.lane.b32.xlu0 %v3286, 56
        %v3326 = vpop.permute.xlu0 %3325
        %3327 = vrot.lane.b32.xlu0 %v3287, 56
        %v3328 = vpop.permute.xlu0 %3327
        %3329 = vrot.lane.b32.xlu0 %v3288, 56
        %v3330 = vpop.permute.xlu0 %3329
        %3331 = vrot.lane.b32.xlu0 %v3289, 56
        %v3332 = vpop.permute.xlu0 %3331
        %3333 = vrot.lane.b32.xlu0 %v3290, 56
        %v3334 = vpop.permute.xlu0 %3333
        %3335 = vrot.lane.b32.xlu0 %v3291, 56
        %v3336 = vpop.permute.xlu0 %3335
        %3337 = vrot.lane.b32.xlu0 %v3292, 56
        %v3338 = vpop.permute.xlu0 %3337
        %3339 = vrot.lane.b32.xlu0 %v3293, 56
        %v3340 = vpop.permute.xlu0 %3339
        %3341 = vrot.lane.b32.xlu0 %v3294, 56
        %v3342 = vpop.permute.xlu0 %3341
        %vm3359 = vcmask 523712
        %3360 = vst.msk [vmem:[#allocation3] sm:$0xff] %vm3359, %v3312
        %3361 = vst.msk [vmem:[#allocation3 + $0x8] sm:$0xff] %vm3359, %v3314
        %3362 = vst.msk [vmem:[#allocation3 + $0x10] sm:$0xff] %vm3359, %v3316
        %3363 = vst.msk [vmem:[#allocation3 + $0x18] sm:$0xff] %vm3359, %v3318
        %3364 = vst.msk [vmem:[#allocation3 + $0x20] sm:$0xff] %vm3359, %v3320
        %3365 = vst.msk [vmem:[#allocation3 + $0x28] sm:$0xff] %vm3359, %v3322
        %3366 = vst.msk [vmem:[#allocation3 + $0x30] sm:$0xff] %vm3359, %v3324
        %3367 = vst.msk [vmem:[#allocation3 + $0x38] sm:$0xff] %vm3359, %v3326
        %3368 = vst.msk [vmem:[#allocation3 + $0x40] sm:$0xff] %vm3359, %v3328
        %3369 = vst.msk [vmem:[#allocation3 + $0x48] sm:$0xff] %vm3359, %v3330
        %3370 = vst.msk [vmem:[#allocation3 + $0x50] sm:$0xff] %vm3359, %v3332
        %3371 = vst.msk [vmem:[#allocation3 + $0x58] sm:$0xff] %vm3359, %v3334
        %3372 = vst.msk [vmem:[#allocation3 + $0x60] sm:$0xff] %vm3359, %v3336
        %3373 = vst.msk [vmem:[#allocation3 + $0x68] sm:$0xff] %vm3359, %v3338
        %3374 = vst.msk [vmem:[#allocation3 + $0x70] sm:$0xff] %vm3359, %v3340
        %3375 = vst.msk [vmem:[#allocation3 + $0x78] sm:$0xff] %vm3359, %v3342
        %v3376 = vld [vmem:[#allocation2 + $0x18] sm:$0xff]
        %v3377 = vld [vmem:[#allocation2 + $0x20] sm:$0xff]
        %v3378 = vld [vmem:[#allocation2 + $0x28] sm:$0xff]
        %v3379 = vld [vmem:[#allocation2 + $0x30] sm:$0xff]
        %v3380 = vld [vmem:[#allocation2 + $0x38] sm:$0xff]
        %v3381 = vld [vmem:[#allocation2 + $0x40] sm:$0xff]
        %v3382 = vld [vmem:[#allocation2 + $0x48] sm:$0xff]
        %v3383 = vld [vmem:[#allocation2 + $0x50] sm:$0xff]
        %v3384 = vld [vmem:[#allocation2 + $0x58] sm:$0xff]
        %v3385 = vld [vmem:[#allocation2 + $0x60] sm:$0xff]
        %v3386 = vld [vmem:[#allocation2 + $0x68] sm:$0xff]
        %v3387 = vld [vmem:[#allocation2 + $0x70] sm:$0xff]
        %v3388 = vld [vmem:[#allocation2 + $0x78] sm:$0xff]
        %v3389 = vld [vmem:[#allocation2 + $0x80] sm:$0xff]
        %v3390 = vld [vmem:[#allocation2 + $0x88] sm:$0xff]
        %v3391 = vld [vmem:[#allocation2 + $0x90] sm:$0xff]
        %v3392 = vld [vmem:[#allocation2 + $0x98] sm:$0x1]
        %v3393 = vmul.bf16 %v3376, %v2137
        %v3394 = vmul.bf16 %v3377, %v2145
        %v3395 = vmul.bf16 %v3378, %v2153
        %v3396 = vmul.bf16 %v3379, %v2161
        %v3397 = vmul.bf16 %v3380, %v2169
        %v3398 = vmul.bf16 %v3381, %v2177
        %v3399 = vmul.bf16 %v3382, %v2185
        %v3400 = vmul.bf16 %v3383, %v2193
        %v3401 = vmul.bf16 %v3384, %v2201
        %v3402 = vmul.bf16 %v3385, %v2209
        %v3403 = vmul.bf16 %v3386, %v2217
        %v3404 = vmul.bf16 %v3387, %v2225
        %v3405 = vmul.bf16 %v3388, %v2233
        %v3406 = vmul.bf16 %v3389, %v2241
        %v3407 = vmul.bf16 %v3390, %v2249
        %v3408 = vmul.bf16 %v3391, %v2257
        %v3409 = vmul.bf16 %v3392, %v2253
        %v3411 = vshrl.u32 %v3393, 16
        %v3413 = vshll.u32 %v3393, 16
        %v3415 = vrot.slane %v3413, 1
        %v3416 = vor.u32 %v3411, %v3415
        %v3418 = vshll.u32 %v3394, 16
        %v3420 = vrot.slane %v3418, 1
        %v3421 = vsel %vm1610, %v3416, %v3420
        %v3422 = vshrl.u32 %v3394, 16
        %v3424 = vor.u32 %v3422, %v3420
        %v3426 = vshll.u32 %v3395, 16
        %v3428 = vrot.slane %v3426, 1
        %v3429 = vsel %vm1610, %v3424, %v3428
        %v3430 = vshrl.u32 %v3395, 16
        %v3432 = vor.u32 %v3430, %v3428
        %v3434 = vshll.u32 %v3396, 16
        %v3436 = vrot.slane %v3434, 1
        %v3437 = vsel %vm1610, %v3432, %v3436
        %v3438 = vshrl.u32 %v3396, 16
        %v3440 = vor.u32 %v3438, %v3436
        %v3442 = vshll.u32 %v3397, 16
        %v3444 = vrot.slane %v3442, 1
        %v3445 = vsel %vm1610, %v3440, %v3444
        %v3446 = vshrl.u32 %v3397, 16
        %v3448 = vor.u32 %v3446, %v3444
        %v3450 = vshll.u32 %v3398, 16
        %v3452 = vrot.slane %v3450, 1
        %v3453 = vsel %vm1610, %v3448, %v3452
        %v3454 = vshrl.u32 %v3398, 16
        %v3456 = vor.u32 %v3454, %v3452
        %v3458 = vshll.u32 %v3399, 16
        %v3460 = vrot.slane %v3458, 1
        %v3461 = vsel %vm1610, %v3456, %v3460
        %v3462 = vshrl.u32 %v3399, 16
        %v3464 = vor.u32 %v3462, %v3460
        %v3466 = vshll.u32 %v3400, 16
        %v3468 = vrot.slane %v3466, 1
        %v3469 = vsel %vm1610, %v3464, %v3468
        %v3470 = vshrl.u32 %v3400, 16
        %v3472 = vor.u32 %v3470, %v3468
        %v3474 = vshll.u32 %v3401, 16
        %v3476 = vrot.slane %v3474, 1
        %v3477 = vsel %vm1610, %v3472, %v3476
        %v3478 = vshrl.u32 %v3401, 16
        %v3480 = vor.u32 %v3478, %v3476
        %v3482 = vshll.u32 %v3402, 16
        %v3484 = vrot.slane %v3482, 1
        %v3485 = vsel %vm1610, %v3480, %v3484
        %v3486 = vshrl.u32 %v3402, 16
        %v3488 = vor.u32 %v3486, %v3484
        %v3490 = vshll.u32 %v3403, 16
        %v3492 = vrot.slane %v3490, 1
        %v3493 = vsel %vm1610, %v3488, %v3492
        %v3494 = vshrl.u32 %v3403, 16
        %v3496 = vor.u32 %v3494, %v3492
        %v3498 = vshll.u32 %v3404, 16
        %v3500 = vrot.slane %v3498, 1
        %v3501 = vsel %vm1610, %v3496, %v3500
        %v3502 = vshrl.u32 %v3404, 16
        %v3504 = vor.u32 %v3502, %v3500
        %v3506 = vshll.u32 %v3405, 16
        %v3508 = vrot.slane %v3506, 1
        %v3509 = vsel %vm1610, %v3504, %v3508
        %v3510 = vshrl.u32 %v3405, 16
        %v3512 = vor.u32 %v3510, %v3508
        %v3514 = vshll.u32 %v3406, 16
        %v3516 = vrot.slane %v3514, 1
        %v3517 = vsel %vm1610, %v3512, %v3516
        %v3518 = vshrl.u32 %v3406, 16
        %v3520 = vor.u32 %v3518, %v3516
        %v3522 = vshll.u32 %v3407, 16
        %v3524 = vrot.slane %v3522, 1
        %v3525 = vsel %vm1610, %v3520, %v3524
        %v3526 = vshrl.u32 %v3407, 16
        %v3528 = vor.u32 %v3526, %v3524
        %v3530 = vshll.u32 %v3408, 16
        %v3532 = vrot.slane %v3530, 1
        %v3533 = vsel %vm1610, %v3528, %v3532
        %v3534 = vshrl.u32 %v3408, 16
        %v3536 = vor.u32 %v3534, %v3532
        %v3538 = vshll.u32 %v3409, 16
        %v3540 = vrot.slane %v3538, 1
        %v3541 = vsel %vm1610, %v3536, %v3540
        %3542 = vrot.lane.b32.xlu0 %v3421, 64
        %v3543 = vpop.permute.xlu0 %3542
        %3544 = vrot.lane.b32.xlu0 %v3429, 64
        %v3545 = vpop.permute.xlu0 %3544
        %3546 = vrot.lane.b32.xlu0 %v3437, 64
        %v3547 = vpop.permute.xlu0 %3546
        %3548 = vrot.lane.b32.xlu0 %v3445, 64
        %v3549 = vpop.permute.xlu0 %3548
        %3550 = vrot.lane.b32.xlu0 %v3453, 64
        %v3551 = vpop.permute.xlu0 %3550
        %3552 = vrot.lane.b32.xlu0 %v3461, 64
        %v3553 = vpop.permute.xlu0 %3552
        %3554 = vrot.lane.b32.xlu0 %v3469, 64
        %v3555 = vpop.permute.xlu0 %3554
        %3556 = vrot.lane.b32.xlu0 %v3477, 64
        %v3557 = vpop.permute.xlu0 %3556
        %3558 = vrot.lane.b32.xlu0 %v3485, 64
        %v3559 = vpop.permute.xlu0 %3558
        %3560 = vrot.lane.b32.xlu0 %v3493, 64
        %v3561 = vpop.permute.xlu0 %3560
        %3562 = vrot.lane.b32.xlu0 %v3501, 64
        %v3563 = vpop.permute.xlu0 %3562
        %3564 = vrot.lane.b32.xlu0 %v3509, 64
        %v3565 = vpop.permute.xlu0 %3564
        %3566 = vrot.lane.b32.xlu0 %v3517, 64
        %v3567 = vpop.permute.xlu0 %3566
        %3568 = vrot.lane.b32.xlu0 %v3525, 64
        %v3569 = vpop.permute.xlu0 %3568
        %3570 = vrot.lane.b32.xlu0 %v3533, 64
        %v3571 = vpop.permute.xlu0 %3570
        %3572 = vrot.lane.b32.xlu0 %v3541, 64
        %v3573 = vpop.permute.xlu0 %3572
        %vm3590 = vcmask 589312
        %3591 = vst.msk [vmem:[#allocation3] sm:$0xff] %vm3590, %v3543
        %3592 = vst.msk [vmem:[#allocation3 + $0x8] sm:$0xff] %vm3590, %v3545
        %3593 = vst.msk [vmem:[#allocation3 + $0x10] sm:$0xff] %vm3590, %v3547
        %3594 = vst.msk [vmem:[#allocation3 + $0x18] sm:$0xff] %vm3590, %v3549
        %3595 = vst.msk [vmem:[#allocation3 + $0x20] sm:$0xff] %vm3590, %v3551
        %3596 = vst.msk [vmem:[#allocation3 + $0x28] sm:$0xff] %vm3590, %v3553
        %3597 = vst.msk [vmem:[#allocation3 + $0x30] sm:$0xff] %vm3590, %v3555
        %3598 = vst.msk [vmem:[#allocation3 + $0x38] sm:$0xff] %vm3590, %v3557
        %3599 = vst.msk [vmem:[#allocation3 + $0x40] sm:$0xff] %vm3590, %v3559
        %3600 = vst.msk [vmem:[#allocation3 + $0x48] sm:$0xff] %vm3590, %v3561
        %3601 = vst.msk [vmem:[#allocation3 + $0x50] sm:$0xff] %vm3590, %v3563
        %3602 = vst.msk [vmem:[#allocation3 + $0x58] sm:$0xff] %vm3590, %v3565
        %3603 = vst.msk [vmem:[#allocation3 + $0x60] sm:$0xff] %vm3590, %v3567
        %3604 = vst.msk [vmem:[#allocation3 + $0x68] sm:$0xff] %vm3590, %v3569
        %3605 = vst.msk [vmem:[#allocation3 + $0x70] sm:$0xff] %vm3590, %v3571
        %3606 = vst.msk [vmem:[#allocation3 + $0x78] sm:$0xff] %vm3590, %v3573
        %v3607 = vld [vmem:[%s4] sm:$0x1]
        %v3608 = vld [vmem:[#allocation3] sm:$0xff]
        %v3609 = vld [vmem:[#allocation3 + $0x8] sm:$0xff]
        %v3610 = vld [vmem:[#allocation3 + $0x10] sm:$0xff]
        %v3611 = vld [vmem:[#allocation3 + $0x18] sm:$0xff]
        %v3612 = vld [vmem:[#allocation3 + $0x20] sm:$0xff]
        %v3613 = vld [vmem:[#allocation3 + $0x28] sm:$0xff]
        %v3614 = vld [vmem:[#allocation3 + $0x30] sm:$0xff]
        %v3615 = vld [vmem:[#allocation3 + $0x38] sm:$0xff]
        %v3616 = vld [vmem:[#allocation3 + $0x40] sm:$0xff]
        %v3617 = vld [vmem:[#allocation3 + $0x48] sm:$0xff]
        %v3618 = vld [vmem:[#allocation3 + $0x50] sm:$0xff]
        %v3619 = vld [vmem:[#allocation3 + $0x58] sm:$0xff]
        %v3620 = vld [vmem:[#allocation3 + $0x60] sm:$0xff]
        %v3621 = vld [vmem:[#allocation3 + $0x68] sm:$0xff]
        %v3622 = vld [vmem:[#allocation3 + $0x70] sm:$0xff]
        %v3623 = vld [vmem:[#allocation3 + $0x78] sm:$0xff]
        %v3624 = vld [vmem:[%s3] sm:$0xf]
        %v3625 = vld [vmem:[%s3 + $0x4] sm:$0xf]
        %v3626 = vld [vmem:[%s3 + $0x8] sm:$0xf]
        %v3627 = vld [vmem:[%s3 + $0xc] sm:$0xf]
        %v3628 = vld [vmem:[%s3 + $0x10] sm:$0xf]
        %v3629 = vld [vmem:[%s3 + $0x14] sm:$0xf]
        %v3630 = vld [vmem:[%s3 + $0x18] sm:$0xf]
        %v3631 = vld [vmem:[%s3 + $0x1c] sm:$0xf]
        %v3632 = vld [vmem:[%s3 + $0x20] sm:$0xf]
        %v3642 = vunpack.c.l.b16 %v3624
        %v3643 = vunpack.c.l.b16 %v3625
        %v3644 = vunpack.c.l.b16 %v3626
        %v3645 = vunpack.c.l.b16 %v3627
        %v3646 = vunpack.c.l.b16 %v3628
        %v3647 = vunpack.c.l.b16 %v3629
        %v3648 = vunpack.c.l.b16 %v3630
        %v3649 = vunpack.c.l.b16 %v3631
        %v3650 = vunpack.c.l.b16 %v3632
        %v3651 = vpack.c.b16 %v3643, %v3642
        %v3652 = vpack.c.b16 %v3645, %v3644
        %v3653 = vpack.c.b16 %v3647, %v3646
        %v3654 = vpack.c.b16 %v3649, %v3648
        %v3655 = vpack.c.b16 %v3650, %v3650
        %vm3660 = vcmask 588800
        %v3662 = vsel %vm3660, %v3608, 0
        %v3665 = vsel %vm3660, %v3609, 0
        %v3668 = vsel %vm3660, %v3610, 0
        %v3671 = vsel %vm3660, %v3611, 0
        %v3674 = vsel %vm3660, %v3612, 0
        %v3677 = vsel %vm3660, %v3613, 0
        %v3680 = vsel %vm3660, %v3614, 0
        %v3683 = vsel %vm3660, %v3615, 0
        %v3686 = vsel %vm3660, %v3616, 0
        %v3689 = vsel %vm3660, %v3617, 0
        %v3692 = vsel %vm3660, %v3618, 0
        %v3695 = vsel %vm3660, %v3619, 0
        %v3698 = vsel %vm3660, %v3620, 0
        %v3701 = vsel %vm3660, %v3621, 0
        %v3704 = vsel %vm3660, %v3622, 0
        %v3707 = vsel %vm3660, %v3623, 0
        %vm3709 = vcmask 1043456
        %v3711 = vsel %vm3709, %v3655, 0
        %3713 = vmatprep.subr.bf16.mxu0 0
        %3714 = vmatpush1.bf16.msra.mxu0 %v3651
        %3715 = vmatprep.subr.bf16.mxu0 0
        %3716 = vmatpush1.bf16.msra.mxu0 %v3652
        %3717 = vmatprep.subr.bf16.mxu0 0
        %3718 = vmatpush1.bf16.msra.mxu0 %v3653
        %3719 = vmatprep.subr.bf16.mxu0 0
        %3720 = vmatpush1.bf16.msra.mxu0 %v3654
        %3721 = vmatprep.subr.bf16.mxu0 0
        %3722 = vmatpush1.bf16.msra.mxu0 %v3711
        %3723 = vmatprep.subr.bf16.mxu0 0
        %3724 = vmatpush1.bf16.msra.mxu0 0
        %3725 = vmatprep.subr.bf16.mxu0 0
        %3726 = vmatpush1.bf16.msra.mxu0 0
        %3727 = vmatprep.subr.bf16.mxu0 0
        %3728 = vmatpush1.bf16.msra.mxu0 0
        %3729 = vmatprep.subr.bf16.mxu0 0
        %3730 = vmatpush1.bf16.msra.mxu0 0
        %3731 = vmatprep.subr.bf16.mxu0 0
        %3732 = vmatpush1.bf16.msra.mxu0 0
        %3733 = vmatprep.subr.bf16.mxu0 0
        %3734 = vmatpush1.bf16.msra.mxu0 0
        %3735 = vmatprep.subr.bf16.mxu0 0
        %3736 = vmatpush1.bf16.msra.mxu0 0
        %3737 = vmatprep.subr.bf16.mxu0 0
        %3738 = vmatpush1.bf16.msra.mxu0 0
        %3739 = vmatprep.subr.bf16.mxu0 0
        %3740 = vmatpush1.bf16.msra.mxu0 0
        %3741 = vmatprep.subr.bf16.mxu0 0
        %3742 = vmatpush1.bf16.msra.mxu0 0
        %3743 = vmatprep.subr.bf16.mxu0 0
        %3744 = vmatpush1.bf16.msra.mxu0 0
        %3745 = vmatprep.mubr.bf16.mxu0 0
        %3746 = vmatmul.mubr.bf16.gmra.mrb[0].mxu0 %v3662
        %v3747 = vpop.f32.mrb[0].mxu0
        %v3748 = vadd.f32 0.0, %v3747
        %v3749 = vpop.f32.mrb[0].mxu0
        %v3750 = vpop.f32.mrb[0].mxu0
        %v3751 = vadd.f32 0.0, %v3750
        %v3752 = vpop.f32.mrb[0].mxu0
        %3753 = vmatprep.mubr.bf16.mxu0 0
        %3754 = vmatmul.mubr.bf16.gmra.mrb[0].mxu0 %v3665
        %v3755 = vpop.f32.mrb[0].mxu0
        %v3756 = vadd.f32 0.0, %v3755
        %v3757 = vpop.f32.mrb[0].mxu0
        %v3758 = vpop.f32.mrb[0].mxu0
        %v3759 = vadd.f32 0.0, %v3758
        %v3760 = vpop.f32.mrb[0].mxu0
        %3761 = vmatprep.mubr.bf16.mxu0 0
        %3762 = vmatmul.mubr.bf16.gmra.mrb[0].mxu0 %v3668
        %v3763 = vpop.f32.mrb[0].mxu0
        %v3764 = vadd.f32 0.0, %v3763
        %v3765 = vpop.f32.mrb[0].mxu0
        %v3766 = vpop.f32.mrb[0].mxu0
        %v3767 = vadd.f32 0.0, %v3766
        %v3768 = vpop.f32.mrb[0].mxu0
        %3769 = vmatprep.mubr.bf16.mxu0 0
        %3770 = vmatmul.mubr.bf16.gmra.mrb[0].mxu0 %v3671
        %v3771 = vpop.f32.mrb[0].mxu0
        %v3772 = vadd.f32 0.0, %v3771
        %v3773 = vpop.f32.mrb[0].mxu0
        %v3774 = vpop.f32.mrb[0].mxu0
        %v3775 = vadd.f32 0.0, %v3774
        %v3776 = vpop.f32.mrb[0].mxu0
        %3777 = vmatprep.mubr.bf16.mxu0 0
        %3778 = vmatmul.mubr.bf16.gmra.mrb[0].mxu0 %v3674
        %v3779 = vpop.f32.mrb[0].mxu0
        %v3780 = vadd.f32 0.0, %v3779
        %v3781 = vpop.f32.mrb[0].mxu0
        %v3782 = vpop.f32.mrb[0].mxu0
        %v3783 = vadd.f32 0.0, %v3782
        %v3784 = vpop.f32.mrb[0].mxu0
        %3785 = vmatprep.mubr.bf16.mxu0 0
        %3786 = vmatmul.mubr.bf16.gmra.mrb[0].mxu0 %v3677
        %v3787 = vpop.f32.mrb[0].mxu0
        %v3788 = vadd.f32 0.0, %v3787
        %v3789 = vpop.f32.mrb[0].mxu0
        %v3790 = vpop.f32.mrb[0].mxu0
        %v3791 = vadd.f32 0.0, %v3790
        %v3792 = vpop.f32.mrb[0].mxu0
        %3793 = vmatprep.mubr.bf16.mxu0 0
        %3794 = vmatmul.mubr.bf16.gmra.mrb[0].mxu0 %v3680
        %v3795 = vpop.f32.mrb[0].mxu0
        %v3796 = vadd.f32 0.0, %v3795
        %v3797 = vpop.f32.mrb[0].mxu0
        %v3798 = vpop.f32.mrb[0].mxu0
        %v3799 = vadd.f32 0.0, %v3798
        %v3800 = vpop.f32.mrb[0].mxu0
        %3801 = vmatprep.mubr.bf16.mxu0 0
        %3802 = vmatmul.mubr.bf16.gmra.mrb[0].mxu0 %v3683
        %v3803 = vpop.f32.mrb[0].mxu0
        %v3804 = vadd.f32 0.0, %v3803
        %v3805 = vpop.f32.mrb[0].mxu0
        %v3806 = vpop.f32.mrb[0].mxu0
        %v3807 = vadd.f32 0.0, %v3806
        %v3808 = vpop.f32.mrb[0].mxu0
        %3809 = vmatprep.mubr.bf16.mxu0 0
        %3810 = vmatmul.mubr.bf16.gmra.mrb[0].mxu0 %v3686
        %v3811 = vpop.f32.mrb[0].mxu0
        %v3812 = vadd.f32 0.0, %v3811
        %v3813 = vpop.f32.mrb[0].mxu0
        %v3814 = vpop.f32.mrb[0].mxu0
        %v3815 = vadd.f32 0.0, %v3814
        %v3816 = vpop.f32.mrb[0].mxu0
        %3817 = vmatprep.mubr.bf16.mxu0 0
        %3818 = vmatmul.mubr.bf16.gmra.mrb[0].mxu0 %v3689
        %v3819 = vpop.f32.mrb[0].mxu0
        %v3820 = vadd.f32 0.0, %v3819
        %v3821 = vpop.f32.mrb[0].mxu0
        %v3822 = vpop.f32.mrb[0].mxu0
        %v3823 = vadd.f32 0.0, %v3822
        %v3824 = vpop.f32.mrb[0].mxu0
        %3825 = vmatprep.mubr.bf16.mxu0 0
        %3826 = vmatmul.mubr.bf16.gmra.mrb[0].mxu0 %v3692
        %v3827 = vpop.f32.mrb[0].mxu0
        %v3828 = vadd.f32 0.0, %v3827
        %v3829 = vpop.f32.mrb[0].mxu0
        %v3830 = vpop.f32.mrb[0].mxu0
        %v3831 = vadd.f32 0.0, %v3830
        %v3832 = vpop.f32.mrb[0].mxu0
        %3833 = vmatprep.mubr.bf16.mxu0 0
        %3834 = vmatmul.mubr.bf16.gmra.mrb[0].mxu0 %v3695
        %v3835 = vpop.f32.mrb[0].mxu0
        %v3836 = vadd.f32 0.0, %v3835
        %v3837 = vpop.f32.mrb[0].mxu0
        %v3838 = vpop.f32.mrb[0].mxu0
        %v3839 = vadd.f32 0.0, %v3838
        %v3840 = vpop.f32.mrb[0].mxu0
        %3841 = vmatprep.mubr.bf16.mxu0 0
        %3842 = vmatmul.mubr.bf16.gmra.mrb[0].mxu0 %v3698
        %v3843 = vpop.f32.mrb[0].mxu0
        %v3844 = vadd.f32 0.0, %v3843
        %v3845 = vpop.f32.mrb[0].mxu0
        %v3846 = vpop.f32.mrb[0].mxu0
        %v3847 = vadd.f32 0.0, %v3846
        %v3848 = vpop.f32.mrb[0].mxu0
        %3849 = vmatprep.mubr.bf16.mxu0 0
        %3850 = vmatmul.mubr.bf16.gmra.mrb[0].mxu0 %v3701
        %v3851 = vpop.f32.mrb[0].mxu0
        %v3852 = vadd.f32 0.0, %v3851
        %v3853 = vpop.f32.mrb[0].mxu0
        %v3854 = vpop.f32.mrb[0].mxu0
        %v3855 = vadd.f32 0.0, %v3854
        %v3856 = vpop.f32.mrb[0].mxu0
        %3857 = vmatprep.mubr.bf16.mxu0 0
        %3858 = vmatmul.mubr.bf16.gmra.mrb[0].mxu0 %v3704
        %v3859 = vpop.f32.mrb[0].mxu0
        %v3860 = vadd.f32 0.0, %v3859
        %v3861 = vpop.f32.mrb[0].mxu0
        %v3862 = vpop.f32.mrb[0].mxu0
        %v3863 = vadd.f32 0.0, %v3862
        %v3864 = vpop.f32.mrb[0].mxu0
        %3865 = vmatprep.mubr.bf16.mxu0 0
        %3866 = vmatmul.mubr.bf16.gmra.mrb[0].mxu0 %v3707
        %v3867 = vpop.f32.mrb[0].mxu0
        %v3868 = vadd.f32 0.0, %v3867
        %v3869 = vpop.f32.mrb[0].mxu0
        %v3870 = vpop.f32.mrb[0].mxu0
        %v3871 = vadd.f32 0.0, %v3870
        %v3872 = vpop.f32.mrb[0].mxu0
        %3873 = vdwg.mxu0
        %v3875 = vlaneseq
        %v3876 = vshrl.u32 %v3875, 7
        %v3877 = vsub.s32 0, %v3876
        %v3878 = vrot.slane %v3607, %v3877
        %v3880 = vadd.f32 %v3878, %v3748
        %v3881 = vadd.f32 %v3878, %v3751
        %v3882 = vadd.f32 %v3878, %v3756
        %v3883 = vadd.f32 %v3878, %v3759
        %v3884 = vadd.f32 %v3878, %v3764
        %v3885 = vadd.f32 %v3878, %v3767
        %v3886 = vadd.f32 %v3878, %v3772
        %v3887 = vadd.f32 %v3878, %v3775
        %v3888 = vadd.f32 %v3878, %v3780
        %v3889 = vadd.f32 %v3878, %v3783
        %v3890 = vadd.f32 %v3878, %v3788
        %v3891 = vadd.f32 %v3878, %v3791
        %v3892 = vadd.f32 %v3878, %v3796
        %v3893 = vadd.f32 %v3878, %v3799
        %v3894 = vadd.f32 %v3878, %v3804
        %v3895 = vadd.f32 %v3878, %v3807
        %v3896 = vadd.f32 %v3878, %v3812
        %v3897 = vadd.f32 %v3878, %v3815
        %v3898 = vadd.f32 %v3878, %v3820
        %v3899 = vadd.f32 %v3878, %v3823
        %v3900 = vadd.f32 %v3878, %v3828
        %v3901 = vadd.f32 %v3878, %v3831
        %v3902 = vadd.f32 %v3878, %v3836
        %v3903 = vadd.f32 %v3878, %v3839
        %v3904 = vadd.f32 %v3878, %v3844
        %v3905 = vadd.f32 %v3878, %v3847
        %v3906 = vadd.f32 %v3878, %v3852
        %v3907 = vadd.f32 %v3878, %v3855
        %v3908 = vadd.f32 %v3878, %v3860
        %v3909 = vadd.f32 %v3878, %v3863
        %v3910 = vadd.f32 %v3878, %v3868
        %v3911 = vadd.f32 %v3878, %v3871
        %v3912 = vmax.f32 %v3880, 0.0
        %v3913 = vmax.f32 %v3881, 0.0
        %v3914 = vmax.f32 %v3882, 0.0
        %v3915 = vmax.f32 %v3883, 0.0
        %v3916 = vmax.f32 %v3884, 0.0
        %v3917 = vmax.f32 %v3885, 0.0
        %v3918 = vmax.f32 %v3886, 0.0
        %v3919 = vmax.f32 %v3887, 0.0
        %v3920 = vmax.f32 %v3888, 0.0
        %v3921 = vmax.f32 %v3889, 0.0
        %v3922 = vmax.f32 %v3890, 0.0
        %v3923 = vmax.f32 %v3891, 0.0
        %v3924 = vmax.f32 %v3892, 0.0
        %v3925 = vmax.f32 %v3893, 0.0
        %v3926 = vmax.f32 %v3894, 0.0
        %v3927 = vmax.f32 %v3895, 0.0
        %v3928 = vmax.f32 %v3896, 0.0
        %v3929 = vmax.f32 %v3897, 0.0
        %v3930 = vmax.f32 %v3898, 0.0
        %v3931 = vmax.f32 %v3899, 0.0
        %v3932 = vmax.f32 %v3900, 0.0
        %v3933 = vmax.f32 %v3901, 0.0
        %v3934 = vmax.f32 %v3902, 0.0
        %v3935 = vmax.f32 %v3903, 0.0
        %v3936 = vmax.f32 %v3904, 0.0
        %v3937 = vmax.f32 %v3905, 0.0
        %v3938 = vmax.f32 %v3906, 0.0
        %v3939 = vmax.f32 %v3907, 0.0
        %v3940 = vmax.f32 %v3908, 0.0
        %v3941 = vmax.f32 %v3909, 0.0
        %v3942 = vmax.f32 %v3910, 0.0
        %v3943 = vmax.f32 %v3911, 0.0
        %vm3944 = vcmask 261120
        %3945 = vst.msk [vmem:[%s271] sm:$0xff] %vm3944, %v3912
        %3946 = vst.msk [vmem:[%s271 + $0x8] sm:$0xff] %vm3944, %v3913
        %3947 = vst.msk [vmem:[%s271 + $0x10] sm:$0xff] %vm3944, %v3914
        %3948 = vst.msk [vmem:[%s271 + $0x18] sm:$0xff] %vm3944, %v3915
        %3949 = vst.msk [vmem:[%s271 + $0x20] sm:$0xff] %vm3944, %v3916
        %3950 = vst.msk [vmem:[%s271 + $0x28] sm:$0xff] %vm3944, %v3917
        %3951 = vst.msk [vmem:[%s271 + $0x30] sm:$0xff] %vm3944, %v3918
        %3952 = vst.msk [vmem:[%s271 + $0x38] sm:$0xff] %vm3944, %v3919
        %3953 = vst.msk [vmem:[%s271 + $0x40] sm:$0xff] %vm3944, %v3920
        %3954 = vst.msk [vmem:[%s271 + $0x48] sm:$0xff] %vm3944, %v3921
        %3955 = vst.msk [vmem:[%s271 + $0x50] sm:$0xff] %vm3944, %v3922
        %3956 = vst.msk [vmem:[%s271 + $0x58] sm:$0xff] %vm3944, %v3923
        %3957 = vst.msk [vmem:[%s271 + $0x60] sm:$0xff] %vm3944, %v3924
        %3958 = vst.msk [vmem:[%s271 + $0x68] sm:$0xff] %vm3944, %v3925
        %3959 = vst.msk [vmem:[%s271 + $0x70] sm:$0xff] %vm3944, %v3926
        %3960 = vst.msk [vmem:[%s271 + $0x78] sm:$0xff] %vm3944, %v3927
        %3961 = vst.msk [vmem:[%s271 + $0x80] sm:$0xff] %vm3944, %v3928
        %3962 = vst.msk [vmem:[%s271 + $0x88] sm:$0xff] %vm3944, %v3929
        %3963 = vst.msk [vmem:[%s271 + $0x90] sm:$0xff] %vm3944, %v3930
        %3964 = vst.msk [vmem:[%s271 + $0x98] sm:$0xff] %vm3944, %v3931
        %3965 = vst.msk [vmem:[%s271 + $0xa0] sm:$0xff] %vm3944, %v3932
        %3966 = vst.msk [vmem:[%s271 + $0xa8] sm:$0xff] %vm3944, %v3933
        %3967 = vst.msk [vmem:[%s271 + $0xb0] sm:$0xff] %vm3944, %v3934
        %3968 = vst.msk [vmem:[%s271 + $0xb8] sm:$0xff] %vm3944, %v3935
        %3969 = vst.msk [vmem:[%s271 + $0xc0] sm:$0xff] %vm3944, %v3936
        %3970 = vst.msk [vmem:[%s271 + $0xc8] sm:$0xff] %vm3944, %v3937
        %3971 = vst.msk [vmem:[%s271 + $0xd0] sm:$0xff] %vm3944, %v3938
        %3972 = vst.msk [vmem:[%s271 + $0xd8] sm:$0xff] %vm3944, %v3939
        %3973 = vst.msk [vmem:[%s271 + $0xe0] sm:$0xff] %vm3944, %v3940
        %3974 = vst.msk [vmem:[%s271 + $0xe8] sm:$0xff] %vm3944, %v3941
        %3975 = vst.msk [vmem:[%s271 + $0xf0] sm:$0xff] %vm3944, %v3942
        %3976 = vst.msk [vmem:[%s271 + $0xf8] sm:$0xff] %vm3944, %v3943
        %s3977 = sand.u32 %s181, 1
        %s3978 = scalar_lea.sflag [#allocation5], %s3977
        %s3979 = sand.u32 %s181, 1
        %s3980 = smul.addr %s3979, 256
        %s3981 = scalar_lea.vmem [#allocation4], %s3980
        // Predicated region
        $region49: #{fire_forward.1} parent=47 // pred_check
          %p3982 = pneg %p191
        $region50: #{fire_forward.1} parent=47 // pred_check_branch
          %3984 = sbr.rel (%p3982) target = $region52
        $region51: #{fire_forward.1} parent=47 // pred_region
          %s3986 = ssub.s32 4096, 4096
          %3987 = vsyncadd %s3978, %s3986
          %s3988 = smul.addr %s21, 32
          %s3989 = smul.addr %s3988, 128
          %s3990 = scalar_lea.hbm %s7, %s3989
          %s3991 = sshll.u32 %s3981, 4
          %s3992 = int_to_ptr.vmem [resolvable:$true] %s3991
          %3997 = dma.vmem_to_hbm [thread:$0]  %s3992, 4096, %s3990, %s3978, 128, 128, 8
        $region52: #{fire_forward.1} parent=47 // pred_fallthru
          _
      $region48: #{fire_forward.1} parent=5 // pred_fallthru
        _
      %p3998 = scmp.le.s32.totalorder 2, %s16
      // Predicated region
      $region53: #{fire_forward.1} parent=5 // pred_check
        %p3999 = pneg %p3998
      $region54: #{fire_forward.1} parent=5 // pred_check_branch
        %4001 = sbr.rel (%p3999) target = $region56
      $region55: #{fire_forward.1} parent=5 // pred_region
        %s4002 = ssub.s32 %s16, 2
        // Predicated region
        $region57: #{fire_forward.1} parent=55 // pred_check
          %p4003 = pneg %p197
        $region58: #{fire_forward.1} parent=55 // pred_check_branch
          %4005 = sbr.rel (%p4003) target = $region60
        $region59: #{fire_forward.1} parent=55 // pred_region
          %s4006 = sand.u32 %s182, 1
          %s4007 = scalar_lea.sflag [#allocation5], %s4006
          %s4008 = sand.u32 %s182, 1
          %s4009 = smul.addr %s4008, 256
          %s4010 = scalar_lea.vmem [#allocation4], %s4009
          %4011 = dma.done %s4007, 4096
        $region60: #{fire_forward.1} parent=55 // pred_fallthru
          _
      $region56: #{fire_forward.1} parent=5 // pred_fallthru
        _
    $region6: #{fire_forward.1} parent=1 // loop_footer
      %s20 = sadd.s32 1, %s16
    $region7: #{fire_forward.1} parent=1 // loop_footer_branch
      %15 = sbr.rel target = $region3
    $region8: #{fire_forward.1} parent=1 // loop_exit
      _
    %4012 = vsyncpa [#allocation5], 1
    %s4013 = scalar_lea.sflag [#allocation5], 1
    %4014 = vsyncpa %s4013, 1

</llo_original>
